<compile_context>
chip_gen: v7x
topology: tpu7x:2x2x1
jax: 0.10.0
libtpu: 0.0.40
codegen_flags: <defaults>
</compile_context>

<pallas_src>
import jax
import jax.numpy as jnp
from jax import lax
from jax.experimental import pallas as pl
from jax.experimental.pallas import tpu as pltpu

# ---------------- model config ----------------
IN_DIM = 16      # model_def.input_dim
EN_HID = 32      # model_def.encoder_num_unit
DE_HID = 32      # model_def.decoder_num_unit
OUT_DIM = 8      # model_def.output_dim
B = 8            # batch
T = 12           # max sequence length

# ---------------- packed parameter slab layout (rows x 256 lanes, f32) ------
# Gate order inside every encoder block is [f, i, o, g] (permuted from the
# PyTorch [i, f, g, o] order at pack time) and the sigmoid 0.5 pre-scale is
# already folded in.
R_WIH = 0      # rows [0,16):   [wih_f*pre | wih_b*pre]  (16, 256)
R_WHH = 16     # rows [16,48):  whh_f*pre at lanes [0,128)
R_W1 = 48      # rows [48,112): decoder W1 (64,32) at lanes [0,32)
R_W2 = 112     # rows [112,144): decoder W2 (32,8) at lanes [0,8)
R_BIH = 144    # row 144: [b_f*pre | b_b*pre] (256,)
R_B1 = 152     # row 152: decoder b1 at lanes [0,32)
R_B2 = 160     # row 160: decoder b2 at lanes [0,8)
P_ROWS = 168
P_LANES = 256


# ---------------- fused Pallas kernel ----------------
def fused_seq2one_kernel(x_ref, lens_ref, p_ref, out_ref, xpf_sc):
    """Single-invocation fused forward pass.

    x_ref:    (B, T*D)  batch-major input (free reshape of (B,T,D)), float32
    lens_ref: (B, 1)    int32 sequence lengths (1 <= len <= T)
    p_ref:    (P_ROWS, 256) packed parameter slab (see layout above)
    out_ref:  (B, OUT_DIM)
    xpf_sc:   (T*B, 4H) VMEM scratch for the hoisted forward input projection
    """
    Bb = x_ref.shape[0]
    D = IN_DIM
    Tt = x_ref.shape[1] // D
    H = EN_HID
    H4 = 4 * H

    # ---- one-time setup (off the serial recurrence path) -------------------
    # Single full-vreg activation trick (gate order [f, i, o, g]):
    #   sigmoid(z) = 0.5 * tanh(0.5 * z) + 0.5  on the f/i/o lane sections
    #   tanh(z)                                 on the g lane section
    # The 0.5 pre-scale is already folded into the packed weights/biases.
    lane = lax.broadcasted_iota(jnp.int32, (1, H4), 1)
    is_g = lane >= 3 * H
    post_a = jnp.broadcast_to(
        jnp.where(is_g, 1.0, 0.5).astype(jnp.float32), (Bb, H4))
    post_b = jnp.broadcast_to(
        jnp.where(is_g, 0.0, 0.5).astype(jnp.float32), (Bb, H4))

    lens_v = lens_ref[...]                                   # (B, 1) int32
    lens_bh = jnp.broadcast_to(lens_v, (Bb, H))              # recurrence mask
    lens_b4 = jnp.broadcast_to(lens_v, (Bb, H4))             # reverse-cell capture

    w_ihcat = p_ref[R_WIH:R_WIH + D, :]                      # (D, 2*4H)
    whh_s = p_ref[R_WHH:R_WHH + H, 0:H4]                     # (H, 4H), pre-scaled
    b_ihcat = jnp.broadcast_to(p_ref[R_BIH:R_BIH + 1, :], (Bb, 2 * H4))

    # ---- prologue: hoisted input projections for all T steps ---------------
    # Independent of the h/c chain; the concatenated weight also produces the
    # reverse-direction pre-activations, captured at t == len-1 by a select
    # (removes the epilogue wih_b matmul and any x[len-1] gather).
    gb = jnp.zeros((Bb, H4), jnp.float32)
    for t in range(Tt):
        x_t = x_ref[:, t * D:(t + 1) * D]                    # (B, D) lane slice
        proj = jnp.dot(x_t, w_ihcat,
                       preferred_element_type=jnp.float32) + b_ihcat   # (B, 2*4H)
        xpf_sc[t * Bb:(t + 1) * Bb, :] = proj[:, 0:H4]
        gb = jnp.where(lens_b4 == t + 1, proj[:, H4:2 * H4], gb)

    # ---- reverse-direction output at t = len-1 (zero initial state) --------
    # One cell step from the zero state: the W_hh term vanishes and the forget
    # gate is dead (multiplies c0 == 0).  Off the recurrence chain; the
    # scheduler interleaves it under the serial loop below.
    act_b = jnp.tanh(gb) * post_a + post_b
    i_b = act_b[:, H:2 * H]
    o_b = act_b[:, 2 * H:3 * H]
    g_b = act_b[:, 3 * H:4 * H]
    h_bwd = o_b * jnp.tanh(i_b * g_b)

    # ---- serial forward LSTM recurrence (packed-sequence masked) -----------
    # TODO(synk): consider pltpu.matmul_push_rhs/acc_lhs/pop to pin whh_s in
    # the MXU staging registers across the 12 steps (needs bundle validation).
    h = jnp.zeros((Bb, H), jnp.float32)
    c = jnp.zeros((Bb, H), jnp.float32)
    for t in range(Tt):
        g_pre = xpf_sc[t * Bb:(t + 1) * Bb, :] + jnp.dot(
            h, whh_s, preferred_element_type=jnp.float32)    # (B, 4H)
        act = jnp.tanh(g_pre) * post_a + post_b              # 1 EUP pass; [f,i,o,g]
        ract = pltpu.roll(act, shift=2 * H, axis=1)          # [o,g,f,i]; 64-lane roll
        f_g = act[:, 0:H]                                    # lane offset 0 (free)
        i_g = act[:, H:2 * H]
        o_g = ract[:, 0:H]                                   # lane offset 0 (free)
        g_g = ract[:, H:2 * H]
        c_new = f_g * c + i_g * g_g
        h_new = o_g * jnp.tanh(c_new)
        keep = lens_bh > t                                   # pack_padded semantics
        h = jnp.where(keep, h_new, h)
        c = jnp.where(keep, c_new, c)

    # ---- decoder MLP (Dropout = identity in eval mode) ----------------------
    dec = jnp.concatenate([h, h_bwd], axis=-1)               # (B, 2H)
    w1 = p_ref[R_W1:R_W1 + 2 * H, 0:DE_HID]
    b1 = p_ref[R_B1:R_B1 + 1, 0:DE_HID]
    w2 = p_ref[R_W2:R_W2 + DE_HID, 0:OUT_DIM]
    b2 = p_ref[R_B2:R_B2 + 1, 0:OUT_DIM]
    h1 = jnp.maximum(
        jnp.dot(dec, w1, preferred_element_type=jnp.float32) + b1, 0.0)
    out_ref[...] = (jnp.dot(h1, w2, preferred_element_type=jnp.float32) + b2)


# ---------------- wrapper ----------------
@jax.jit
def seq2one_lstm_forward(x, x_len, packed_params):
    """x: (B, T, D) float32 batch-first; x_len: (B,) with 1 <= len <= T."""
    Bb, Tt, Dd = x.shape
    # Batch-major flat layout: a pure bitcast reshape (no transpose op, no
    # extra HBM round trip ahead of the kernel).
    x_bm = x.reshape(Bb, Tt * Dd)
    lens = x_len.astype(jnp.int32).reshape(Bb, 1)
    return pl.pallas_call(
        fused_seq2one_kernel,
        out_shape=jax.ShapeDtypeStruct((Bb, OUT_DIM), jnp.float32),
        scratch_shapes=[pltpu.VMEM((Tt * Bb, 4 * EN_HID), jnp.float32)],
    )(x_bm, lens, packed_params)


# ---------------- parameter packing (once, outside the hot path) ------------
def _permute_gates(w):
    """Reorder last-axis gate blocks from PyTorch [i,f,g,o] to kernel [f,i,o,g]."""
    H = EN_HID
    i = w[..., 0:H]
    f = w[..., H:2 * H]
    g = w[..., 2 * H:3 * H]
    o = w[..., 3 * H:4 * H]
    return jnp.concatenate([f, i, o, g], axis=-1)


def pack_params(params):
    """Pack all weights/biases into one 256-lane slab (single input DMA)."""
    H = EN_HID
    H4 = 4 * H
    # 0.5 pre-scale on sigmoid gates (f,i,o); 1.0 on g.  Exact in f32.
    pre = jnp.concatenate([jnp.full((3 * H,), 0.5, jnp.float32),
                           jnp.ones((H,), jnp.float32)])
    wih_f = _permute_gates(params["wih_f"]) * pre
    whh_f = _permute_gates(params["whh_f"]) * pre
    b_f = _permute_gates(params["b_f"]) * pre
    wih_b = _permute_gates(params["wih_b"]) * pre
    b_b = _permute_gates(params["b_b"]) * pre

    P = jnp.zeros((P_ROWS, P_LANES), jnp.float32)
    P = P.at[R_WIH:R_WIH + IN_DIM, 0:H4].set(wih_f)
    P = P.at[R_WIH:R_WIH + IN_DIM, H4:2 * H4].set(wih_b)
    P = P.at[R_WHH:R_WHH + H, 0:H4].set(whh_f)
    P = P.at[R_W1:R_W1 + 2 * H, 0:DE_HID].set(params["w1"])
    P = P.at[R_W2:R_W2 + DE_HID, 0:OUT_DIM].set(params["w2"])
    P = P.at[R_BIH, 0:H4].set(b_f[0])
    P = P.at[R_BIH, H4:2 * H4].set(b_b[0])
    P = P.at[R_B1, 0:DE_HID].set(params["b1"][0])
    P = P.at[R_B2, 0:OUT_DIM].set(params["b2"][0])
    return P


def make_params(key):
    """Deterministic synthetic parameters (PyTorch-style uniform +-1/sqrt(H))."""
    ks = jax.random.split(key, 12)
    s = 1.0 / jnp.sqrt(EN_HID).astype(jnp.float32)

    def u(k, shape, scale):
        return jax.random.uniform(k, shape, jnp.float32, -scale, scale)

    H = EN_HID
    params = {
        # encoder, forward direction (transposed for right-multiplication),
        # PyTorch gate order [i, f, g, o]
        "wih_f": u(ks[0], (IN_DIM, 4 * H), s),
        "whh_f": u(ks[1], (H, 4 * H), s),
        "b_f":   u(ks[2], (1, 4 * H), s) + u(ks[3], (1, 4 * H), s),  # b_ih + b_hh
        # encoder, reverse direction (only input weights + bias are observable
        # at ys[:, len-1, H:]; W_hh_reverse multiplies the zero initial state)
        "wih_b": u(ks[4], (IN_DIM, 4 * H), s),
        "b_b":   u(ks[5], (1, 4 * H), s) + u(ks[6], (1, 4 * H), s),
        # decoder MLP
        "w1": u(ks[7], (2 * H, DE_HID), 1.0 / jnp.sqrt(2.0 * H)),
        "b1": u(ks[8], (1, DE_HID), 1.0 / jnp.sqrt(2.0 * H)),
        "w2": u(ks[9], (DE_HID, OUT_DIM), 1.0 / jnp.sqrt(1.0 * DE_HID)),
        "b2": u(ks[10], (1, OUT_DIM), 1.0 / jnp.sqrt(1.0 * DE_HID)),
    }
    return params


def reference_forward(x, x_len, params):
    """Plain-JAX reference of the same math (validates packing + kernel)."""
    Bb, Tt, _ = x.shape
    H = EN_HID
    h = jnp.zeros((Bb, H), jnp.float32)
    c = jnp.zeros((Bb, H), jnp.float32)
    for t in range(Tt):
        gates = x[:, t] @ params["wih_f"] + h @ params["whh_f"] + params["b_f"]
        i_g = jax.nn.sigmoid(gates[:, 0:H])
        f_g = jax.nn.sigmoid(gates[:, H:2 * H])
        g_g = jnp.tanh(gates[:, 2 * H:3 * H])
        o_g = jax.nn.sigmoid(gates[:, 3 * H:4 * H])
        c_new = f_g * c + i_g * g_g
        h_new = o_g * jnp.tanh(c_new)
        mask = (x_len > t)[:, None]
        h = jnp.where(mask, h_new, h)
        c = jnp.where(mask, c_new, c)
    x_last = x[jnp.arange(Bb), x_len - 1, :]
    gates = x_last @ params["wih_b"] + params["b_b"]
    i_g = jax.nn.sigmoid(gates[:, 0:H])
    g_g = jnp.tanh(gates[:, 2 * H:3 * H])
    o_g = jax.nn.sigmoid(gates[:, 3 * H:4 * H])
    h_bwd = o_g * jnp.tanh(i_g * g_g)
    dec = jnp.concatenate([h, h_bwd], axis=-1)
    h1 = jnp.maximum(dec @ params["w1"] + params["b1"], 0.0)
    return h1 @ params["w2"] + params["b2"]


if __name__ == "__main__":
    key = jax.random.PRNGKey(0)
    k_param, k_x = jax.random.split(key)

    params = make_params(k_param)
    packed = pack_params(params)          # one-time, outside the hot path
    x = jax.random.normal(k_x, (B, T, IN_DIM), jnp.float32)
    # variable lengths, all >= 1 (pack_padded_sequence requirement)
    x_len = jnp.array([T, 3, 7, 1, 12, 5, 9, 6], dtype=jnp.int32)

    out = seq2one_lstm_forward(x, x_len, packed)
    out = jax.block_until_ready(out)

    ref = jax.block_until_ready(reference_forward(x, x_len, params))
    assert out.shape == (B, OUT_DIM)
    assert jnp.allclose(out, ref, rtol=2e-4, atol=2e-4), "mismatch vs reference"

    print("KERNEL_OK")
</pallas_src>

<mosaic_0001>
module attributes {stable_mosaic.version = 11 : i64} {
  func.func @fused_seq2one_kernel(%arg0: memref<8x192xf32, #tpu.memory_space<vmem>>, %arg1: memref<8x1xi32, #tpu.memory_space<vmem>>, %arg2: memref<168x256xf32, #tpu.memory_space<vmem>>, %arg3: memref<8x8xf32, #tpu.memory_space<vmem>>, %arg4: memref<96x128xf32, #tpu.memory_space<vmem>>) attributes {dimension_semantics = [], scalar_prefetch = 0 : i64, scratch_operands = 1 : i64, tpu.core_type = #tpu.core_type<tc>} {
    %0 = tpu.iota {dimensions = array<i32: 1>} : vector<1x128xi32>
    %c96_i32 = arith.constant 96 : i32
    %1 = vector.broadcast %c96_i32 : i32 to vector<1x128xi32>
    %2 = arith.cmpi sge, %0, %1 : vector<1x128xi32>
    %cst = arith.constant 1.000000e+00 : f32
    %cst_0 = arith.constant 5.000000e-01 : f32
    %3 = vector.broadcast %cst : f32 to vector<1x128xf32>
    %4 = vector.broadcast %cst_0 : f32 to vector<1x128xf32>
    %5 = arith.select %2, %3, %4 : vector<1x128xi1>, vector<1x128xf32>
    %6 = vector.shape_cast %5 : vector<1x128xf32> to vector<1x128xf32>
    %7 = vector.broadcast %6 : vector<1x128xf32> to vector<8x128xf32>
    %cst_1 = arith.constant 0.000000e+00 : f32
    %cst_2 = arith.constant 5.000000e-01 : f32
    %8 = vector.broadcast %cst_1 : f32 to vector<1x128xf32>
    %9 = vector.broadcast %cst_2 : f32 to vector<1x128xf32>
    %10 = arith.select %2, %8, %9 : vector<1x128xi1>, vector<1x128xf32>
    %11 = vector.shape_cast %10 : vector<1x128xf32> to vector<1x128xf32>
    %12 = vector.broadcast %11 : vector<1x128xf32> to vector<8x128xf32>
    %c0 = arith.constant 0 : index
    %c0_3 = arith.constant 0 : index
    %13 = vector.load %arg1[%c0, %c0_3] : memref<8x1xi32, #tpu.memory_space<vmem>>, vector<8x1xi32>
    %14 = vector.shape_cast %13 : vector<8x1xi32> to vector<8x1xi32>
    %15 = vector.broadcast %14 : vector<8x1xi32> to vector<8x32xi32>
    %16 = vector.shape_cast %13 : vector<8x1xi32> to vector<8x1xi32>
    %17 = vector.broadcast %16 : vector<8x1xi32> to vector<8x128xi32>
    %c0_4 = arith.constant 0 : index
    %c0_5 = arith.constant 0 : index
    %18 = vector.load %arg2[%c0_4, %c0_5] : memref<168x256xf32, #tpu.memory_space<vmem>>, vector<16x256xf32>
    %c16 = arith.constant 16 : index
    %c0_6 = arith.constant 0 : index
    %19 = vector.load %arg2[%c16, %c0_6] : memref<168x256xf32, #tpu.memory_space<vmem>>, vector<32x128xf32>
    %c144 = arith.constant 144 : index
    %c0_7 = arith.constant 0 : index
    %20 = vector.load %arg2[%c144, %c0_7] : memref<168x256xf32, #tpu.memory_space<vmem>>, vector<1x256xf32>
    %21 = vector.shape_cast %20 : vector<1x256xf32> to vector<1x256xf32>
    %22 = vector.broadcast %21 : vector<1x256xf32> to vector<8x256xf32>
    %cst_8 = arith.constant 0.000000e+00 : f32
    %23 = vector.broadcast %cst_8 : f32 to vector<8x128xf32>
    %c0_9 = arith.constant 0 : index
    %c0_10 = arith.constant 0 : index
    %24 = vector.load %arg0[%c0_9, %c0_10] : memref<8x192xf32, #tpu.memory_space<vmem>>, vector<8x16xf32>
    %cst_11 = arith.constant dense<0.000000e+00> : vector<8x256xf32>
    %25 = tpu.matmul %24, %18, %cst_11 {dimension_numbers = #tpu.dot_dimension_numbers<[1], [0], [0], [1], [0, 0, 1, 1], [], []>} : vector<8x16xf32>, vector<16x256xf32>, vector<8x256xf32> -> vector<8x256xf32>
    %26 = arith.addf %25, %22 : vector<8x256xf32>
    %27 = vector.extract_strided_slice %26 {offsets = [0, 0], sizes = [8, 128], strides = [1, 1]} : vector<8x256xf32> to vector<8x128xf32>
    %c0_12 = arith.constant 0 : index
    %c0_13 = arith.constant 0 : index
    %28 = vector.load %arg4[%c0_12, %c0_13] : memref<96x128xf32, #tpu.memory_space<vmem>>, vector<8x128xf32>
    tpu.vector_store %arg4[%c0_12, %c0_13], %27 {strides = array<i32>} : memref<96x128xf32, #tpu.memory_space<vmem>>, vector<8x128xf32>,
    %c1_i32 = arith.constant 1 : i32
    %29 = vector.broadcast %c1_i32 : i32 to vector<8x128xi32>
    %30 = arith.cmpi eq, %17, %29 : vector<8x128xi32>
    %31 = vector.extract_strided_slice %26 {offsets = [0, 128], sizes = [8, 128], strides = [1, 1]} : vector<8x256xf32> to vector<8x128xf32>
    %32 = arith.select %30, %31, %23 : vector<8x128xi1>, vector<8x128xf32>
    %c0_14 = arith.constant 0 : index
    %c16_15 = arith.constant 16 : index
    %33 = vector.load %arg0[%c0_14, %c16_15] : memref<8x192xf32, #tpu.memory_space<vmem>>, vector<8x16xf32>
    %cst_16 = arith.constant dense<0.000000e+00> : vector<8x256xf32>
    %34 = tpu.matmul %33, %18, %cst_16 {dimension_numbers = #tpu.dot_dimension_numbers<[1], [0], [0], [1], [0, 0, 1, 1], [], []>} : vector<8x16xf32>, vector<16x256xf32>, vector<8x256xf32> -> vector<8x256xf32>
    %35 = arith.addf %34, %22 : vector<8x256xf32>
    %36 = vector.extract_strided_slice %35 {offsets = [0, 0], sizes = [8, 128], strides = [1, 1]} : vector<8x256xf32> to vector<8x128xf32>
    %c8 = arith.constant 8 : index
    %c0_17 = arith.constant 0 : index
    %37 = vector.load %arg4[%c8, %c0_17] : memref<96x128xf32, #tpu.memory_space<vmem>>, vector<8x128xf32>
    tpu.vector_store %arg4[%c8, %c0_17], %36 {strides = array<i32>} : memref<96x128xf32, #tpu.memory_space<vmem>>, vector<8x128xf32>,
    %c2_i32 = arith.constant 2 : i32
    %38 = vector.broadcast %c2_i32 : i32 to vector<8x128xi32>
    %39 = arith.cmpi eq, %17, %38 : vector<8x128xi32>
    %40 = vector.extract_strided_slice %35 {offsets = [0, 128], sizes = [8, 128], strides = [1, 1]} : vector<8x256xf32> to vector<8x128xf32>
    %41 = arith.select %39, %40, %32 : vector<8x128xi1>, vector<8x128xf32>
    %c0_18 = arith.constant 0 : index
    %c32 = arith.constant 32 : index
    %42 = vector.load %arg0[%c0_18, %c32] : memref<8x192xf32, #tpu.memory_space<vmem>>, vector<8x16xf32>
    %cst_19 = arith.constant dense<0.000000e+00> : vector<8x256xf32>
    %43 = tpu.matmul %42, %18, %cst_19 {dimension_numbers = #tpu.dot_dimension_numbers<[1], [0], [0], [1], [0, 0, 1, 1], [], []>} : vector<8x16xf32>, vector<16x256xf32>, vector<8x256xf32> -> vector<8x256xf32>
    %44 = arith.addf %43, %22 : vector<8x256xf32>
    %45 = vector.extract_strided_slice %44 {offsets = [0, 0], sizes = [8, 128], strides = [1, 1]} : vector<8x256xf32> to vector<8x128xf32>
    %c16_20 = arith.constant 16 : index
    %c0_21 = arith.constant 0 : index
    %46 = vector.load %arg4[%c16_20, %c0_21] : memref<96x128xf32, #tpu.memory_space<vmem>>, vector<8x128xf32>
    tpu.vector_store %arg4[%c16_20, %c0_21], %45 {strides = array<i32>} : memref<96x128xf32, #tpu.memory_space<vmem>>, vector<8x128xf32>,
    %c3_i32 = arith.constant 3 : i32
    %47 = vector.broadcast %c3_i32 : i32 to vector<8x128xi32>
    %48 = arith.cmpi eq, %17, %47 : vector<8x128xi32>
    %49 = vector.extract_strided_slice %44 {offsets = [0, 128], sizes = [8, 128], strides = [1, 1]} : vector<8x256xf32> to vector<8x128xf32>
    %50 = arith.select %48, %49, %41 : vector<8x128xi1>, vector<8x128xf32>
    %c0_22 = arith.constant 0 : index
    %c48 = arith.constant 48 : index
    %51 = vector.load %arg0[%c0_22, %c48] : memref<8x192xf32, #tpu.memory_space<vmem>>, vector<8x16xf32>
    %cst_23 = arith.constant dense<0.000000e+00> : vector<8x256xf32>
    %52 = tpu.matmul %51, %18, %cst_23 {dimension_numbers = #tpu.dot_dimension_numbers<[1], [0], [0], [1], [0, 0, 1, 1], [], []>} : vector<8x16xf32>, vector<16x256xf32>, vector<8x256xf32> -> vector<8x256xf32>
    %53 = arith.addf %52, %22 : vector<8x256xf32>
    %54 = vector.extract_strided_slice %53 {offsets = [0, 0], sizes = [8, 128], strides = [1, 1]} : vector<8x256xf32> to vector<8x128xf32>
    %c24 = arith.constant 24 : index
    %c0_24 = arith.constant 0 : index
    %55 = vector.load %arg4[%c24, %c0_24] : memref<96x128xf32, #tpu.memory_space<vmem>>, vector<8x128xf32>
    tpu.vector_store %arg4[%c24, %c0_24], %54 {strides = array<i32>} : memref<96x128xf32, #tpu.memory_space<vmem>>, vector<8x128xf32>,
    %c4_i32 = arith.constant 4 : i32
    %56 = vector.broadcast %c4_i32 : i32 to vector<8x128xi32>
    %57 = arith.cmpi eq, %17, %56 : vector<8x128xi32>
    %58 = vector.extract_strided_slice %53 {offsets = [0, 128], sizes = [8, 128], strides = [1, 1]} : vector<8x256xf32> to vector<8x128xf32>
    %59 = arith.select %57, %58, %50 : vector<8x128xi1>, vector<8x128xf32>
    %c0_25 = arith.constant 0 : index
    %c64 = arith.constant 64 : index
    %60 = vector.load %arg0[%c0_25, %c64] : memref<8x192xf32, #tpu.memory_space<vmem>>, vector<8x16xf32>
    %cst_26 = arith.constant dense<0.000000e+00> : vector<8x256xf32>
    %61 = tpu.matmul %60, %18, %cst_26 {dimension_numbers = #tpu.dot_dimension_numbers<[1], [0], [0], [1], [0, 0, 1, 1], [], []>} : vector<8x16xf32>, vector<16x256xf32>, vector<8x256xf32> -> vector<8x256xf32>
    %62 = arith.addf %61, %22 : vector<8x256xf32>
    %63 = vector.extract_strided_slice %62 {offsets = [0, 0], sizes = [8, 128], strides = [1, 1]} : vector<8x256xf32> to vector<8x128xf32>
    %c32_27 = arith.constant 32 : index
    %c0_28 = arith.constant 0 : index
    %64 = vector.load %arg4[%c32_27, %c0_28] : memref<96x128xf32, #tpu.memory_space<vmem>>, vector<8x128xf32>
    tpu.vector_store %arg4[%c32_27, %c0_28], %63 {strides = array<i32>} : memref<96x128xf32, #tpu.memory_space<vmem>>, vector<8x128xf32>,
    %c5_i32 = arith.constant 5 : i32
    %65 = vector.broadcast %c5_i32 : i32 to vector<8x128xi32>
    %66 = arith.cmpi eq, %17, %65 : vector<8x128xi32>
    %67 = vector.extract_strided_slice %62 {offsets = [0, 128], sizes = [8, 128], strides = [1, 1]} : vector<8x256xf32> to vector<8x128xf32>
    %68 = arith.select %66, %67, %59 : vector<8x128xi1>, vector<8x128xf32>
    %c0_29 = arith.constant 0 : index
    %c80 = arith.constant 80 : index
    %69 = vector.load %arg0[%c0_29, %c80] : memref<8x192xf32, #tpu.memory_space<vmem>>, vector<8x16xf32>
    %cst_30 = arith.constant dense<0.000000e+00> : vector<8x256xf32>
    %70 = tpu.matmul %69, %18, %cst_30 {dimension_numbers = #tpu.dot_dimension_numbers<[1], [0], [0], [1], [0, 0, 1, 1], [], []>} : vector<8x16xf32>, vector<16x256xf32>, vector<8x256xf32> -> vector<8x256xf32>
    %71 = arith.addf %70, %22 : vector<8x256xf32>
    %72 = vector.extract_strided_slice %71 {offsets = [0, 0], sizes = [8, 128], strides = [1, 1]} : vector<8x256xf32> to vector<8x128xf32>
    %c40 = arith.constant 40 : index
    %c0_31 = arith.constant 0 : index
    %73 = vector.load %arg4[%c40, %c0_31] : memref<96x128xf32, #tpu.memory_space<vmem>>, vector<8x128xf32>
    tpu.vector_store %arg4[%c40, %c0_31], %72 {strides = array<i32>} : memref<96x128xf32, #tpu.memory_space<vmem>>, vector<8x128xf32>,
    %c6_i32 = arith.constant 6 : i32
    %74 = vector.broadcast %c6_i32 : i32 to vector<8x128xi32>
    %75 = arith.cmpi eq, %17, %74 : vector<8x128xi32>
    %76 = vector.extract_strided_slice %71 {offsets = [0, 128], sizes = [8, 128], strides = [1, 1]} : vector<8x256xf32> to vector<8x128xf32>
    %77 = arith.select %75, %76, %68 : vector<8x128xi1>, vector<8x128xf32>
    %c0_32 = arith.constant 0 : index
    %c96 = arith.constant 96 : index
    %78 = vector.load %arg0[%c0_32, %c96] : memref<8x192xf32, #tpu.memory_space<vmem>>, vector<8x16xf32>
    %cst_33 = arith.constant dense<0.000000e+00> : vector<8x256xf32>
    %79 = tpu.matmul %78, %18, %cst_33 {dimension_numbers = #tpu.dot_dimension_numbers<[1], [0], [0], [1], [0, 0, 1, 1], [], []>} : vector<8x16xf32>, vector<16x256xf32>, vector<8x256xf32> -> vector<8x256xf32>
    %80 = arith.addf %79, %22 : vector<8x256xf32>
    %81 = vector.extract_strided_slice %80 {offsets = [0, 0], sizes = [8, 128], strides = [1, 1]} : vector<8x256xf32> to vector<8x128xf32>
    %c48_34 = arith.constant 48 : index
    %c0_35 = arith.constant 0 : index
    %82 = vector.load %arg4[%c48_34, %c0_35] : memref<96x128xf32, #tpu.memory_space<vmem>>, vector<8x128xf32>
    tpu.vector_store %arg4[%c48_34, %c0_35], %81 {strides = array<i32>} : memref<96x128xf32, #tpu.memory_space<vmem>>, vector<8x128xf32>,
    %c7_i32 = arith.constant 7 : i32
    %83 = vector.broadcast %c7_i32 : i32 to vector<8x128xi32>
    %84 = arith.cmpi eq, %17, %83 : vector<8x128xi32>
    %85 = vector.extract_strided_slice %80 {offsets = [0, 128], sizes = [8, 128], strides = [1, 1]} : vector<8x256xf32> to vector<8x128xf32>
    %86 = arith.select %84, %85, %77 : vector<8x128xi1>, vector<8x128xf32>
    %c0_36 = arith.constant 0 : index
    %c112 = arith.constant 112 : index
    %87 = vector.load %arg0[%c0_36, %c112] : memref<8x192xf32, #tpu.memory_space<vmem>>, vector<8x16xf32>
    %cst_37 = arith.constant dense<0.000000e+00> : vector<8x256xf32>
    %88 = tpu.matmul %87, %18, %cst_37 {dimension_numbers = #tpu.dot_dimension_numbers<[1], [0], [0], [1], [0, 0, 1, 1], [], []>} : vector<8x16xf32>, vector<16x256xf32>, vector<8x256xf32> -> vector<8x256xf32>
    %89 = arith.addf %88, %22 : vector<8x256xf32>
    %90 = vector.extract_strided_slice %89 {offsets = [0, 0], sizes = [8, 128], strides = [1, 1]} : vector<8x256xf32> to vector<8x128xf32>
    %c56 = arith.constant 56 : index
    %c0_38 = arith.constant 0 : index
    %91 = vector.load %arg4[%c56, %c0_38] : memref<96x128xf32, #tpu.memory_space<vmem>>, vector<8x128xf32>
    tpu.vector_store %arg4[%c56, %c0_38], %90 {strides = array<i32>} : memref<96x128xf32, #tpu.memory_space<vmem>>, vector<8x128xf32>,
    %c8_i32 = arith.constant 8 : i32
    %92 = vector.broadcast %c8_i32 : i32 to vector<8x128xi32>
    %93 = arith.cmpi eq, %17, %92 : vector<8x128xi32>
    %94 = vector.extract_strided_slice %89 {offsets = [0, 128], sizes = [8, 128], strides = [1, 1]} : vector<8x256xf32> to vector<8x128xf32>
    %95 = arith.select %93, %94, %86 : vector<8x128xi1>, vector<8x128xf32>
    %c0_39 = arith.constant 0 : index
    %c128 = arith.constant 128 : index
    %96 = vector.load %arg0[%c0_39, %c128] : memref<8x192xf32, #tpu.memory_space<vmem>>, vector<8x16xf32>
    %cst_40 = arith.constant dense<0.000000e+00> : vector<8x256xf32>
    %97 = tpu.matmul %96, %18, %cst_40 {dimension_numbers = #tpu.dot_dimension_numbers<[1], [0], [0], [1], [0, 0, 1, 1], [], []>} : vector<8x16xf32>, vector<16x256xf32>, vector<8x256xf32> -> vector<8x256xf32>
    %98 = arith.addf %97, %22 : vector<8x256xf32>
    %99 = vector.extract_strided_slice %98 {offsets = [0, 0], sizes = [8, 128], strides = [1, 1]} : vector<8x256xf32> to vector<8x128xf32>
    %c64_41 = arith.constant 64 : index
    %c0_42 = arith.constant 0 : index
    %100 = vector.load %arg4[%c64_41, %c0_42] : memref<96x128xf32, #tpu.memory_space<vmem>>, vector<8x128xf32>
    tpu.vector_store %arg4[%c64_41, %c0_42], %99 {strides = array<i32>} : memref<96x128xf32, #tpu.memory_space<vmem>>, vector<8x128xf32>,
    %c9_i32 = arith.constant 9 : i32
    %101 = vector.broadcast %c9_i32 : i32 to vector<8x128xi32>
    %102 = arith.cmpi eq, %17, %101 : vector<8x128xi32>
    %103 = vector.extract_strided_slice %98 {offsets = [0, 128], sizes = [8, 128], strides = [1, 1]} : vector<8x256xf32> to vector<8x128xf32>
    %104 = arith.select %102, %103, %95 : vector<8x128xi1>, vector<8x128xf32>
    %c0_43 = arith.constant 0 : index
    %c144_44 = arith.constant 144 : index
    %105 = vector.load %arg0[%c0_43, %c144_44] : memref<8x192xf32, #tpu.memory_space<vmem>>, vector<8x16xf32>
    %cst_45 = arith.constant dense<0.000000e+00> : vector<8x256xf32>
    %106 = tpu.matmul %105, %18, %cst_45 {dimension_numbers = #tpu.dot_dimension_numbers<[1], [0], [0], [1], [0, 0, 1, 1], [], []>} : vector<8x16xf32>, vector<16x256xf32>, vector<8x256xf32> -> vector<8x256xf32>
    %107 = arith.addf %106, %22 : vector<8x256xf32>
    %108 = vector.extract_strided_slice %107 {offsets = [0, 0], sizes = [8, 128], strides = [1, 1]} : vector<8x256xf32> to vector<8x128xf32>
    %c72 = arith.constant 72 : index
    %c0_46 = arith.constant 0 : index
    %109 = vector.load %arg4[%c72, %c0_46] : memref<96x128xf32, #tpu.memory_space<vmem>>, vector<8x128xf32>
    tpu.vector_store %arg4[%c72, %c0_46], %108 {strides = array<i32>} : memref<96x128xf32, #tpu.memory_space<vmem>>, vector<8x128xf32>,
    %c10_i32 = arith.constant 10 : i32
    %110 = vector.broadcast %c10_i32 : i32 to vector<8x128xi32>
    %111 = arith.cmpi eq, %17, %110 : vector<8x128xi32>
    %112 = vector.extract_strided_slice %107 {offsets = [0, 128], sizes = [8, 128], strides = [1, 1]} : vector<8x256xf32> to vector<8x128xf32>
    %113 = arith.select %111, %112, %104 : vector<8x128xi1>, vector<8x128xf32>
    %c0_47 = arith.constant 0 : index
    %c160 = arith.constant 160 : index
    %114 = vector.load %arg0[%c0_47, %c160] : memref<8x192xf32, #tpu.memory_space<vmem>>, vector<8x16xf32>
    %cst_48 = arith.constant dense<0.000000e+00> : vector<8x256xf32>
    %115 = tpu.matmul %114, %18, %cst_48 {dimension_numbers = #tpu.dot_dimension_numbers<[1], [0], [0], [1], [0, 0, 1, 1], [], []>} : vector<8x16xf32>, vector<16x256xf32>, vector<8x256xf32> -> vector<8x256xf32>
    %116 = arith.addf %115, %22 : vector<8x256xf32>
    %117 = vector.extract_strided_slice %116 {offsets = [0, 0], sizes = [8, 128], strides = [1, 1]} : vector<8x256xf32> to vector<8x128xf32>
    %c80_49 = arith.constant 80 : index
    %c0_50 = arith.constant 0 : index
    %118 = vector.load %arg4[%c80_49, %c0_50] : memref<96x128xf32, #tpu.memory_space<vmem>>, vector<8x128xf32>
    tpu.vector_store %arg4[%c80_49, %c0_50], %117 {strides = array<i32>} : memref<96x128xf32, #tpu.memory_space<vmem>>, vector<8x128xf32>,
    %c11_i32 = arith.constant 11 : i32
    %119 = vector.broadcast %c11_i32 : i32 to vector<8x128xi32>
    %120 = arith.cmpi eq, %17, %119 : vector<8x128xi32>
    %121 = vector.extract_strided_slice %116 {offsets = [0, 128], sizes = [8, 128], strides = [1, 1]} : vector<8x256xf32> to vector<8x128xf32>
    %122 = arith.select %120, %121, %113 : vector<8x128xi1>, vector<8x128xf32>
    %c0_51 = arith.constant 0 : index
    %c176 = arith.constant 176 : index
    %123 = vector.load %arg0[%c0_51, %c176] : memref<8x192xf32, #tpu.memory_space<vmem>>, vector<8x16xf32>
    %cst_52 = arith.constant dense<0.000000e+00> : vector<8x256xf32>
    %124 = tpu.matmul %123, %18, %cst_52 {dimension_numbers = #tpu.dot_dimension_numbers<[1], [0], [0], [1], [0, 0, 1, 1], [], []>} : vector<8x16xf32>, vector<16x256xf32>, vector<8x256xf32> -> vector<8x256xf32>
    %125 = arith.addf %124, %22 : vector<8x256xf32>
    %126 = vector.extract_strided_slice %125 {offsets = [0, 0], sizes = [8, 128], strides = [1, 1]} : vector<8x256xf32> to vector<8x128xf32>
    %c88 = arith.constant 88 : index
    %c0_53 = arith.constant 0 : index
    %127 = vector.load %arg4[%c88, %c0_53] : memref<96x128xf32, #tpu.memory_space<vmem>>, vector<8x128xf32>
    tpu.vector_store %arg4[%c88, %c0_53], %126 {strides = array<i32>} : memref<96x128xf32, #tpu.memory_space<vmem>>, vector<8x128xf32>,
    %c12_i32 = arith.constant 12 : i32
    %128 = vector.broadcast %c12_i32 : i32 to vector<8x128xi32>
    %129 = arith.cmpi eq, %17, %128 : vector<8x128xi32>
    %130 = vector.extract_strided_slice %125 {offsets = [0, 128], sizes = [8, 128], strides = [1, 1]} : vector<8x256xf32> to vector<8x128xf32>
    %131 = arith.select %129, %130, %122 : vector<8x128xi1>, vector<8x128xf32>
    %132 = math.tanh %131 : vector<8x128xf32>
    %133 = arith.mulf %132, %7 : vector<8x128xf32>
    %134 = arith.addf %133, %12 : vector<8x128xf32>
    %135 = vector.extract_strided_slice %134 {offsets = [0, 32], sizes = [8, 32], strides = [1, 1]} : vector<8x128xf32> to vector<8x32xf32>
    %136 = vector.extract_strided_slice %134 {offsets = [0, 64], sizes = [8, 32], strides = [1, 1]} : vector<8x128xf32> to vector<8x32xf32>
    %137 = vector.extract_strided_slice %134 {offsets = [0, 96], sizes = [8, 32], strides = [1, 1]} : vector<8x128xf32> to vector<8x32xf32>
    %138 = arith.mulf %135, %137 : vector<8x32xf32>
    %139 = math.tanh %138 : vector<8x32xf32>
    %140 = arith.mulf %136, %139 : vector<8x32xf32>
    %cst_54 = arith.constant 0.000000e+00 : f32
    %141 = vector.broadcast %cst_54 : f32 to vector<8x32xf32>
    %cst_55 = arith.constant 0.000000e+00 : f32
    %142 = vector.broadcast %cst_55 : f32 to vector<8x32xf32>
    %c0_56 = arith.constant 0 : index
    %c0_57 = arith.constant 0 : index
    %143 = vector.load %arg4[%c0_56, %c0_57] : memref<96x128xf32, #tpu.memory_space<vmem>>, vector<8x128xf32>
    %cst_58 = arith.constant dense<0.000000e+00> : vector<8x128xf32>
    %144 = tpu.matmul %141, %19, %cst_58 {dimension_numbers = #tpu.dot_dimension_numbers<[1], [0], [0], [1], [0, 0, 1, 1], [], []>} : vector<8x32xf32>, vector<32x128xf32>, vector<8x128xf32> -> vector<8x128xf32>
    %145 = arith.addf %143, %144 : vector<8x128xf32>
    %146 = math.tanh %145 : vector<8x128xf32>
    %147 = arith.mulf %146, %7 : vector<8x128xf32>
    %148 = arith.addf %147, %12 : vector<8x128xf32>
    %c64_i32 = arith.constant 64 : i32
    %149 = tpu.dynamic_rotate %148 by %c64_i32 dim 1 : vector<8x128xf32>, i32 -> vector<8x128xf32>
    %150 = vector.extract_strided_slice %148 {offsets = [0, 0], sizes = [8, 32], strides = [1, 1]} : vector<8x128xf32> to vector<8x32xf32>
    %151 = vector.extract_strided_slice %148 {offsets = [0, 32], sizes = [8, 32], strides = [1, 1]} : vector<8x128xf32> to vector<8x32xf32>
    %152 = vector.extract_strided_slice %149 {offsets = [0, 0], sizes = [8, 32], strides = [1, 1]} : vector<8x128xf32> to vector<8x32xf32>
    %153 = vector.extract_strided_slice %149 {offsets = [0, 32], sizes = [8, 32], strides = [1, 1]} : vector<8x128xf32> to vector<8x32xf32>
    %154 = arith.mulf %150, %142 : vector<8x32xf32>
    %155 = arith.mulf %151, %153 : vector<8x32xf32>
    %156 = arith.addf %154, %155 : vector<8x32xf32>
    %157 = math.tanh %156 : vector<8x32xf32>
    %158 = arith.mulf %152, %157 : vector<8x32xf32>
    %c0_i32 = arith.constant 0 : i32
    %159 = vector.broadcast %c0_i32 : i32 to vector<8x32xi32>
    %160 = arith.cmpi sgt, %15, %159 : vector<8x32xi32>
    %161 = arith.select %160, %158, %141 : vector<8x32xi1>, vector<8x32xf32>
    %162 = arith.select %160, %156, %142 : vector<8x32xi1>, vector<8x32xf32>
    %c8_59 = arith.constant 8 : index
    %c0_60 = arith.constant 0 : index
    %163 = vector.load %arg4[%c8_59, %c0_60] : memref<96x128xf32, #tpu.memory_space<vmem>>, vector<8x128xf32>
    %cst_61 = arith.constant dense<0.000000e+00> : vector<8x128xf32>
    %164 = tpu.matmul %161, %19, %cst_61 {dimension_numbers = #tpu.dot_dimension_numbers<[1], [0], [0], [1], [0, 0, 1, 1], [], []>} : vector<8x32xf32>, vector<32x128xf32>, vector<8x128xf32> -> vector<8x128xf32>
    %165 = arith.addf %163, %164 : vector<8x128xf32>
    %166 = math.tanh %165 : vector<8x128xf32>
    %167 = arith.mulf %166, %7 : vector<8x128xf32>
    %168 = arith.addf %167, %12 : vector<8x128xf32>
    %c64_i32_62 = arith.constant 64 : i32
    %169 = tpu.dynamic_rotate %168 by %c64_i32_62 dim 1 : vector<8x128xf32>, i32 -> vector<8x128xf32>
    %170 = vector.extract_strided_slice %168 {offsets = [0, 0], sizes = [8, 32], strides = [1, 1]} : vector<8x128xf32> to vector<8x32xf32>
    %171 = vector.extract_strided_slice %168 {offsets = [0, 32], sizes = [8, 32], strides = [1, 1]} : vector<8x128xf32> to vector<8x32xf32>
    %172 = vector.extract_strided_slice %169 {offsets = [0, 0], sizes = [8, 32], strides = [1, 1]} : vector<8x128xf32> to vector<8x32xf32>
    %173 = vector.extract_strided_slice %169 {offsets = [0, 32], sizes = [8, 32], strides = [1, 1]} : vector<8x128xf32> to vector<8x32xf32>
    %174 = arith.mulf %170, %162 : vector<8x32xf32>
    %175 = arith.mulf %171, %173 : vector<8x32xf32>
    %176 = arith.addf %174, %175 : vector<8x32xf32>
    %177 = math.tanh %176 : vector<8x32xf32>
    %178 = arith.mulf %172, %177 : vector<8x32xf32>
    %c1_i32_63 = arith.constant 1 : i32
    %179 = vector.broadcast %c1_i32_63 : i32 to vector<8x32xi32>
    %180 = arith.cmpi sgt, %15, %179 : vector<8x32xi32>
    %181 = arith.select %180, %178, %161 : vector<8x32xi1>, vector<8x32xf32>
    %182 = arith.select %180, %176, %162 : vector<8x32xi1>, vector<8x32xf32>
    %c16_64 = arith.constant 16 : index
    %c0_65 = arith.constant 0 : index
    %183 = vector.load %arg4[%c16_64, %c0_65] : memref<96x128xf32, #tpu.memory_space<vmem>>, vector<8x128xf32>
    %cst_66 = arith.constant dense<0.000000e+00> : vector<8x128xf32>
    %184 = tpu.matmul %181, %19, %cst_66 {dimension_numbers = #tpu.dot_dimension_numbers<[1], [0], [0], [1], [0, 0, 1, 1], [], []>} : vector<8x32xf32>, vector<32x128xf32>, vector<8x128xf32> -> vector<8x128xf32>
    %185 = arith.addf %183, %184 : vector<8x128xf32>
    %186 = math.tanh %185 : vector<8x128xf32>
    %187 = arith.mulf %186, %7 : vector<8x128xf32>
    %188 = arith.addf %187, %12 : vector<8x128xf32>
    %c64_i32_67 = arith.constant 64 : i32
    %189 = tpu.dynamic_rotate %188 by %c64_i32_67 dim 1 : vector<8x128xf32>, i32 -> vector<8x128xf32>
    %190 = vector.extract_strided_slice %188 {offsets = [0, 0], sizes = [8, 32], strides = [1, 1]} : vector<8x128xf32> to vector<8x32xf32>
    %191 = vector.extract_strided_slice %188 {offsets = [0, 32], sizes = [8, 32], strides = [1, 1]} : vector<8x128xf32> to vector<8x32xf32>
    %192 = vector.extract_strided_slice %189 {offsets = [0, 0], sizes = [8, 32], strides = [1, 1]} : vector<8x128xf32> to vector<8x32xf32>
    %193 = vector.extract_strided_slice %189 {offsets = [0, 32], sizes = [8, 32], strides = [1, 1]} : vector<8x128xf32> to vector<8x32xf32>
    %194 = arith.mulf %190, %182 : vector<8x32xf32>
    %195 = arith.mulf %191, %193 : vector<8x32xf32>
    %196 = arith.addf %194, %195 : vector<8x32xf32>
    %197 = math.tanh %196 : vector<8x32xf32>
    %198 = arith.mulf %192, %197 : vector<8x32xf32>
    %c2_i32_68 = arith.constant 2 : i32
    %199 = vector.broadcast %c2_i32_68 : i32 to vector<8x32xi32>
    %200 = arith.cmpi sgt, %15, %199 : vector<8x32xi32>
    %201 = arith.select %200, %198, %181 : vector<8x32xi1>, vector<8x32xf32>
    %202 = arith.select %200, %196, %182 : vector<8x32xi1>, vector<8x32xf32>
    %c24_69 = arith.constant 24 : index
    %c0_70 = arith.constant 0 : index
    %203 = vector.load %arg4[%c24_69, %c0_70] : memref<96x128xf32, #tpu.memory_space<vmem>>, vector<8x128xf32>
    %cst_71 = arith.constant dense<0.000000e+00> : vector<8x128xf32>
    %204 = tpu.matmul %201, %19, %cst_71 {dimension_numbers = #tpu.dot_dimension_numbers<[1], [0], [0], [1], [0, 0, 1, 1], [], []>} : vector<8x32xf32>, vector<32x128xf32>, vector<8x128xf32> -> vector<8x128xf32>
    %205 = arith.addf %203, %204 : vector<8x128xf32>
    %206 = math.tanh %205 : vector<8x128xf32>
    %207 = arith.mulf %206, %7 : vector<8x128xf32>
    %208 = arith.addf %207, %12 : vector<8x128xf32>
    %c64_i32_72 = arith.constant 64 : i32
    %209 = tpu.dynamic_rotate %208 by %c64_i32_72 dim 1 : vector<8x128xf32>, i32 -> vector<8x128xf32>
    %210 = vector.extract_strided_slice %208 {offsets = [0, 0], sizes = [8, 32], strides = [1, 1]} : vector<8x128xf32> to vector<8x32xf32>
    %211 = vector.extract_strided_slice %208 {offsets = [0, 32], sizes = [8, 32], strides = [1, 1]} : vector<8x128xf32> to vector<8x32xf32>
    %212 = vector.extract_strided_slice %209 {offsets = [0, 0], sizes = [8, 32], strides = [1, 1]} : vector<8x128xf32> to vector<8x32xf32>
    %213 = vector.extract_strided_slice %209 {offsets = [0, 32], sizes = [8, 32], strides = [1, 1]} : vector<8x128xf32> to vector<8x32xf32>
    %214 = arith.mulf %210, %202 : vector<8x32xf32>
    %215 = arith.mulf %211, %213 : vector<8x32xf32>
    %216 = arith.addf %214, %215 : vector<8x32xf32>
    %217 = math.tanh %216 : vector<8x32xf32>
    %218 = arith.mulf %212, %217 : vector<8x32xf32>
    %c3_i32_73 = arith.constant 3 : i32
    %219 = vector.broadcast %c3_i32_73 : i32 to vector<8x32xi32>
    %220 = arith.cmpi sgt, %15, %219 : vector<8x32xi32>
    %221 = arith.select %220, %218, %201 : vector<8x32xi1>, vector<8x32xf32>
    %222 = arith.select %220, %216, %202 : vector<8x32xi1>, vector<8x32xf32>
    %c32_74 = arith.constant 32 : index
    %c0_75 = arith.constant 0 : index
    %223 = vector.load %arg4[%c32_74, %c0_75] : memref<96x128xf32, #tpu.memory_space<vmem>>, vector<8x128xf32>
    %cst_76 = arith.constant dense<0.000000e+00> : vector<8x128xf32>
    %224 = tpu.matmul %221, %19, %cst_76 {dimension_numbers = #tpu.dot_dimension_numbers<[1], [0], [0], [1], [0, 0, 1, 1], [], []>} : vector<8x32xf32>, vector<32x128xf32>, vector<8x128xf32> -> vector<8x128xf32>
    %225 = arith.addf %223, %224 : vector<8x128xf32>
    %226 = math.tanh %225 : vector<8x128xf32>
    %227 = arith.mulf %226, %7 : vector<8x128xf32>
    %228 = arith.addf %227, %12 : vector<8x128xf32>
    %c64_i32_77 = arith.constant 64 : i32
    %229 = tpu.dynamic_rotate %228 by %c64_i32_77 dim 1 : vector<8x128xf32>, i32 -> vector<8x128xf32>
    %230 = vector.extract_strided_slice %228 {offsets = [0, 0], sizes = [8, 32], strides = [1, 1]} : vector<8x128xf32> to vector<8x32xf32>
    %231 = vector.extract_strided_slice %228 {offsets = [0, 32], sizes = [8, 32], strides = [1, 1]} : vector<8x128xf32> to vector<8x32xf32>
    %232 = vector.extract_strided_slice %229 {offsets = [0, 0], sizes = [8, 32], strides = [1, 1]} : vector<8x128xf32> to vector<8x32xf32>
    %233 = vector.extract_strided_slice %229 {offsets = [0, 32], sizes = [8, 32], strides = [1, 1]} : vector<8x128xf32> to vector<8x32xf32>
    %234 = arith.mulf %230, %222 : vector<8x32xf32>
    %235 = arith.mulf %231, %233 : vector<8x32xf32>
    %236 = arith.addf %234, %235 : vector<8x32xf32>
    %237 = math.tanh %236 : vector<8x32xf32>
    %238 = arith.mulf %232, %237 : vector<8x32xf32>
    %c4_i32_78 = arith.constant 4 : i32
    %239 = vector.broadcast %c4_i32_78 : i32 to vector<8x32xi32>
    %240 = arith.cmpi sgt, %15, %239 : vector<8x32xi32>
    %241 = arith.select %240, %238, %221 : vector<8x32xi1>, vector<8x32xf32>
    %242 = arith.select %240, %236, %222 : vector<8x32xi1>, vector<8x32xf32>
    %c40_79 = arith.constant 40 : index
    %c0_80 = arith.constant 0 : index
    %243 = vector.load %arg4[%c40_79, %c0_80] : memref<96x128xf32, #tpu.memory_space<vmem>>, vector<8x128xf32>
    %cst_81 = arith.constant dense<0.000000e+00> : vector<8x128xf32>
    %244 = tpu.matmul %241, %19, %cst_81 {dimension_numbers = #tpu.dot_dimension_numbers<[1], [0], [0], [1], [0, 0, 1, 1], [], []>} : vector<8x32xf32>, vector<32x128xf32>, vector<8x128xf32> -> vector<8x128xf32>
    %245 = arith.addf %243, %244 : vector<8x128xf32>
    %246 = math.tanh %245 : vector<8x128xf32>
    %247 = arith.mulf %246, %7 : vector<8x128xf32>
    %248 = arith.addf %247, %12 : vector<8x128xf32>
    %c64_i32_82 = arith.constant 64 : i32
    %249 = tpu.dynamic_rotate %248 by %c64_i32_82 dim 1 : vector<8x128xf32>, i32 -> vector<8x128xf32>
    %250 = vector.extract_strided_slice %248 {offsets = [0, 0], sizes = [8, 32], strides = [1, 1]} : vector<8x128xf32> to vector<8x32xf32>
    %251 = vector.extract_strided_slice %248 {offsets = [0, 32], sizes = [8, 32], strides = [1, 1]} : vector<8x128xf32> to vector<8x32xf32>
    %252 = vector.extract_strided_slice %249 {offsets = [0, 0], sizes = [8, 32], strides = [1, 1]} : vector<8x128xf32> to vector<8x32xf32>
    %253 = vector.extract_strided_slice %249 {offsets = [0, 32], sizes = [8, 32], strides = [1, 1]} : vector<8x128xf32> to vector<8x32xf32>
    %254 = arith.mulf %250, %242 : vector<8x32xf32>
    %255 = arith.mulf %251, %253 : vector<8x32xf32>
    %256 = arith.addf %254, %255 : vector<8x32xf32>
    %257 = math.tanh %256 : vector<8x32xf32>
    %258 = arith.mulf %252, %257 : vector<8x32xf32>
    %c5_i32_83 = arith.constant 5 : i32
    %259 = vector.broadcast %c5_i32_83 : i32 to vector<8x32xi32>
    %260 = arith.cmpi sgt, %15, %259 : vector<8x32xi32>
    %261 = arith.select %260, %258, %241 : vector<8x32xi1>, vector<8x32xf32>
    %262 = arith.select %260, %256, %242 : vector<8x32xi1>, vector<8x32xf32>
    %c48_84 = arith.constant 48 : index
    %c0_85 = arith.constant 0 : index
    %263 = vector.load %arg4[%c48_84, %c0_85] : memref<96x128xf32, #tpu.memory_space<vmem>>, vector<8x128xf32>
    %cst_86 = arith.constant dense<0.000000e+00> : vector<8x128xf32>
    %264 = tpu.matmul %261, %19, %cst_86 {dimension_numbers = #tpu.dot_dimension_numbers<[1], [0], [0], [1], [0, 0, 1, 1], [], []>} : vector<8x32xf32>, vector<32x128xf32>, vector<8x128xf32> -> vector<8x128xf32>
    %265 = arith.addf %263, %264 : vector<8x128xf32>
    %266 = math.tanh %265 : vector<8x128xf32>
    %267 = arith.mulf %266, %7 : vector<8x128xf32>
    %268 = arith.addf %267, %12 : vector<8x128xf32>
    %c64_i32_87 = arith.constant 64 : i32
    %269 = tpu.dynamic_rotate %268 by %c64_i32_87 dim 1 : vector<8x128xf32>, i32 -> vector<8x128xf32>
    %270 = vector.extract_strided_slice %268 {offsets = [0, 0], sizes = [8, 32], strides = [1, 1]} : vector<8x128xf32> to vector<8x32xf32>
    %271 = vector.extract_strided_slice %268 {offsets = [0, 32], sizes = [8, 32], strides = [1, 1]} : vector<8x128xf32> to vector<8x32xf32>
    %272 = vector.extract_strided_slice %269 {offsets = [0, 0], sizes = [8, 32], strides = [1, 1]} : vector<8x128xf32> to vector<8x32xf32>
    %273 = vector.extract_strided_slice %269 {offsets = [0, 32], sizes = [8, 32], strides = [1, 1]} : vector<8x128xf32> to vector<8x32xf32>
    %274 = arith.mulf %270, %262 : vector<8x32xf32>
    %275 = arith.mulf %271, %273 : vector<8x32xf32>
    %276 = arith.addf %274, %275 : vector<8x32xf32>
    %277 = math.tanh %276 : vector<8x32xf32>
    %278 = arith.mulf %272, %277 : vector<8x32xf32>
    %c6_i32_88 = arith.constant 6 : i32
    %279 = vector.broadcast %c6_i32_88 : i32 to vector<8x32xi32>
    %280 = arith.cmpi sgt, %15, %279 : vector<8x32xi32>
    %281 = arith.select %280, %278, %261 : vector<8x32xi1>, vector<8x32xf32>
    %282 = arith.select %280, %276, %262 : vector<8x32xi1>, vector<8x32xf32>
    %c56_89 = arith.constant 56 : index
    %c0_90 = arith.constant 0 : index
    %283 = vector.load %arg4[%c56_89, %c0_90] : memref<96x128xf32, #tpu.memory_space<vmem>>, vector<8x128xf32>
    %cst_91 = arith.constant dense<0.000000e+00> : vector<8x128xf32>
    %284 = tpu.matmul %281, %19, %cst_91 {dimension_numbers = #tpu.dot_dimension_numbers<[1], [0], [0], [1], [0, 0, 1, 1], [], []>} : vector<8x32xf32>, vector<32x128xf32>, vector<8x128xf32> -> vector<8x128xf32>
    %285 = arith.addf %283, %284 : vector<8x128xf32>
    %286 = math.tanh %285 : vector<8x128xf32>
    %287 = arith.mulf %286, %7 : vector<8x128xf32>
    %288 = arith.addf %287, %12 : vector<8x128xf32>
    %c64_i32_92 = arith.constant 64 : i32
    %289 = tpu.dynamic_rotate %288 by %c64_i32_92 dim 1 : vector<8x128xf32>, i32 -> vector<8x128xf32>
    %290 = vector.extract_strided_slice %288 {offsets = [0, 0], sizes = [8, 32], strides = [1, 1]} : vector<8x128xf32> to vector<8x32xf32>
    %291 = vector.extract_strided_slice %288 {offsets = [0, 32], sizes = [8, 32], strides = [1, 1]} : vector<8x128xf32> to vector<8x32xf32>
    %292 = vector.extract_strided_slice %289 {offsets = [0, 0], sizes = [8, 32], strides = [1, 1]} : vector<8x128xf32> to vector<8x32xf32>
    %293 = vector.extract_strided_slice %289 {offsets = [0, 32], sizes = [8, 32], strides = [1, 1]} : vector<8x128xf32> to vector<8x32xf32>
    %294 = arith.mulf %290, %282 : vector<8x32xf32>
    %295 = arith.mulf %291, %293 : vector<8x32xf32>
    %296 = arith.addf %294, %295 : vector<8x32xf32>
    %297 = math.tanh %296 : vector<8x32xf32>
    %298 = arith.mulf %292, %297 : vector<8x32xf32>
    %c7_i32_93 = arith.constant 7 : i32
    %299 = vector.broadcast %c7_i32_93 : i32 to vector<8x32xi32>
    %300 = arith.cmpi sgt, %15, %299 : vector<8x32xi32>
    %301 = arith.select %300, %298, %281 : vector<8x32xi1>, vector<8x32xf32>
    %302 = arith.select %300, %296, %282 : vector<8x32xi1>, vector<8x32xf32>
    %c64_94 = arith.constant 64 : index
    %c0_95 = arith.constant 0 : index
    %303 = vector.load %arg4[%c64_94, %c0_95] : memref<96x128xf32, #tpu.memory_space<vmem>>, vector<8x128xf32>
    %cst_96 = arith.constant dense<0.000000e+00> : vector<8x128xf32>
    %304 = tpu.matmul %301, %19, %cst_96 {dimension_numbers = #tpu.dot_dimension_numbers<[1], [0], [0], [1], [0, 0, 1, 1], [], []>} : vector<8x32xf32>, vector<32x128xf32>, vector<8x128xf32> -> vector<8x128xf32>
    %305 = arith.addf %303, %304 : vector<8x128xf32>
    %306 = math.tanh %305 : vector<8x128xf32>
    %307 = arith.mulf %306, %7 : vector<8x128xf32>
    %308 = arith.addf %307, %12 : vector<8x128xf32>
    %c64_i32_97 = arith.constant 64 : i32
    %309 = tpu.dynamic_rotate %308 by %c64_i32_97 dim 1 : vector<8x128xf32>, i32 -> vector<8x128xf32>
    %310 = vector.extract_strided_slice %308 {offsets = [0, 0], sizes = [8, 32], strides = [1, 1]} : vector<8x128xf32> to vector<8x32xf32>
    %311 = vector.extract_strided_slice %308 {offsets = [0, 32], sizes = [8, 32], strides = [1, 1]} : vector<8x128xf32> to vector<8x32xf32>
    %312 = vector.extract_strided_slice %309 {offsets = [0, 0], sizes = [8, 32], strides = [1, 1]} : vector<8x128xf32> to vector<8x32xf32>
    %313 = vector.extract_strided_slice %309 {offsets = [0, 32], sizes = [8, 32], strides = [1, 1]} : vector<8x128xf32> to vector<8x32xf32>
    %314 = arith.mulf %310, %302 : vector<8x32xf32>
    %315 = arith.mulf %311, %313 : vector<8x32xf32>
    %316 = arith.addf %314, %315 : vector<8x32xf32>
    %317 = math.tanh %316 : vector<8x32xf32>
    %318 = arith.mulf %312, %317 : vector<8x32xf32>
    %c8_i32_98 = arith.constant 8 : i32
    %319 = vector.broadcast %c8_i32_98 : i32 to vector<8x32xi32>
    %320 = arith.cmpi sgt, %15, %319 : vector<8x32xi32>
    %321 = arith.select %320, %318, %301 : vector<8x32xi1>, vector<8x32xf32>
    %322 = arith.select %320, %316, %302 : vector<8x32xi1>, vector<8x32xf32>
    %c72_99 = arith.constant 72 : index
    %c0_100 = arith.constant 0 : index
    %323 = vector.load %arg4[%c72_99, %c0_100] : memref<96x128xf32, #tpu.memory_space<vmem>>, vector<8x128xf32>
    %cst_101 = arith.constant dense<0.000000e+00> : vector<8x128xf32>
    %324 = tpu.matmul %321, %19, %cst_101 {dimension_numbers = #tpu.dot_dimension_numbers<[1], [0], [0], [1], [0, 0, 1, 1], [], []>} : vector<8x32xf32>, vector<32x128xf32>, vector<8x128xf32> -> vector<8x128xf32>
    %325 = arith.addf %323, %324 : vector<8x128xf32>
    %326 = math.tanh %325 : vector<8x128xf32>
    %327 = arith.mulf %326, %7 : vector<8x128xf32>
    %328 = arith.addf %327, %12 : vector<8x128xf32>
    %c64_i32_102 = arith.constant 64 : i32
    %329 = tpu.dynamic_rotate %328 by %c64_i32_102 dim 1 : vector<8x128xf32>, i32 -> vector<8x128xf32>
    %330 = vector.extract_strided_slice %328 {offsets = [0, 0], sizes = [8, 32], strides = [1, 1]} : vector<8x128xf32> to vector<8x32xf32>
    %331 = vector.extract_strided_slice %328 {offsets = [0, 32], sizes = [8, 32], strides = [1, 1]} : vector<8x128xf32> to vector<8x32xf32>
    %332 = vector.extract_strided_slice %329 {offsets = [0, 0], sizes = [8, 32], strides = [1, 1]} : vector<8x128xf32> to vector<8x32xf32>
    %333 = vector.extract_strided_slice %329 {offsets = [0, 32], sizes = [8, 32], strides = [1, 1]} : vector<8x128xf32> to vector<8x32xf32>
    %334 = arith.mulf %330, %322 : vector<8x32xf32>
    %335 = arith.mulf %331, %333 : vector<8x32xf32>
    %336 = arith.addf %334, %335 : vector<8x32xf32>
    %337 = math.tanh %336 : vector<8x32xf32>
    %338 = arith.mulf %332, %337 : vector<8x32xf32>
    %c9_i32_103 = arith.constant 9 : i32
    %339 = vector.broadcast %c9_i32_103 : i32 to vector<8x32xi32>
    %340 = arith.cmpi sgt, %15, %339 : vector<8x32xi32>
    %341 = arith.select %340, %338, %321 : vector<8x32xi1>, vector<8x32xf32>
    %342 = arith.select %340, %336, %322 : vector<8x32xi1>, vector<8x32xf32>
    %c80_104 = arith.constant 80 : index
    %c0_105 = arith.constant 0 : index
    %343 = vector.load %arg4[%c80_104, %c0_105] : memref<96x128xf32, #tpu.memory_space<vmem>>, vector<8x128xf32>
    %cst_106 = arith.constant dense<0.000000e+00> : vector<8x128xf32>
    %344 = tpu.matmul %341, %19, %cst_106 {dimension_numbers = #tpu.dot_dimension_numbers<[1], [0], [0], [1], [0, 0, 1, 1], [], []>} : vector<8x32xf32>, vector<32x128xf32>, vector<8x128xf32> -> vector<8x128xf32>
    %345 = arith.addf %343, %344 : vector<8x128xf32>
    %346 = math.tanh %345 : vector<8x128xf32>
    %347 = arith.mulf %346, %7 : vector<8x128xf32>
    %348 = arith.addf %347, %12 : vector<8x128xf32>
    %c64_i32_107 = arith.constant 64 : i32
    %349 = tpu.dynamic_rotate %348 by %c64_i32_107 dim 1 : vector<8x128xf32>, i32 -> vector<8x128xf32>
    %350 = vector.extract_strided_slice %348 {offsets = [0, 0], sizes = [8, 32], strides = [1, 1]} : vector<8x128xf32> to vector<8x32xf32>
    %351 = vector.extract_strided_slice %348 {offsets = [0, 32], sizes = [8, 32], strides = [1, 1]} : vector<8x128xf32> to vector<8x32xf32>
    %352 = vector.extract_strided_slice %349 {offsets = [0, 0], sizes = [8, 32], strides = [1, 1]} : vector<8x128xf32> to vector<8x32xf32>
    %353 = vector.extract_strided_slice %349 {offsets = [0, 32], sizes = [8, 32], strides = [1, 1]} : vector<8x128xf32> to vector<8x32xf32>
    %354 = arith.mulf %350, %342 : vector<8x32xf32>
    %355 = arith.mulf %351, %353 : vector<8x32xf32>
    %356 = arith.addf %354, %355 : vector<8x32xf32>
    %357 = math.tanh %356 : vector<8x32xf32>
    %358 = arith.mulf %352, %357 : vector<8x32xf32>
    %c10_i32_108 = arith.constant 10 : i32
    %359 = vector.broadcast %c10_i32_108 : i32 to vector<8x32xi32>
    %360 = arith.cmpi sgt, %15, %359 : vector<8x32xi32>
    %361 = arith.select %360, %358, %341 : vector<8x32xi1>, vector<8x32xf32>
    %362 = arith.select %360, %356, %342 : vector<8x32xi1>, vector<8x32xf32>
    %c88_109 = arith.constant 88 : index
    %c0_110 = arith.constant 0 : index
    %363 = vector.load %arg4[%c88_109, %c0_110] : memref<96x128xf32, #tpu.memory_space<vmem>>, vector<8x128xf32>
    %cst_111 = arith.constant dense<0.000000e+00> : vector<8x128xf32>
    %364 = tpu.matmul %361, %19, %cst_111 {dimension_numbers = #tpu.dot_dimension_numbers<[1], [0], [0], [1], [0, 0, 1, 1], [], []>} : vector<8x32xf32>, vector<32x128xf32>, vector<8x128xf32> -> vector<8x128xf32>
    %365 = arith.addf %363, %364 : vector<8x128xf32>
    %366 = math.tanh %365 : vector<8x128xf32>
    %367 = arith.mulf %366, %7 : vector<8x128xf32>
    %368 = arith.addf %367, %12 : vector<8x128xf32>
    %c64_i32_112 = arith.constant 64 : i32
    %369 = tpu.dynamic_rotate %368 by %c64_i32_112 dim 1 : vector<8x128xf32>, i32 -> vector<8x128xf32>
    %370 = vector.extract_strided_slice %368 {offsets = [0, 0], sizes = [8, 32], strides = [1, 1]} : vector<8x128xf32> to vector<8x32xf32>
    %371 = vector.extract_strided_slice %368 {offsets = [0, 32], sizes = [8, 32], strides = [1, 1]} : vector<8x128xf32> to vector<8x32xf32>
    %372 = vector.extract_strided_slice %369 {offsets = [0, 0], sizes = [8, 32], strides = [1, 1]} : vector<8x128xf32> to vector<8x32xf32>
    %373 = vector.extract_strided_slice %369 {offsets = [0, 32], sizes = [8, 32], strides = [1, 1]} : vector<8x128xf32> to vector<8x32xf32>
    %374 = arith.mulf %370, %362 : vector<8x32xf32>
    %375 = arith.mulf %371, %373 : vector<8x32xf32>
    %376 = arith.addf %374, %375 : vector<8x32xf32>
    %377 = math.tanh %376 : vector<8x32xf32>
    %378 = arith.mulf %372, %377 : vector<8x32xf32>
    %c11_i32_113 = arith.constant 11 : i32
    %379 = vector.broadcast %c11_i32_113 : i32 to vector<8x32xi32>
    %380 = arith.cmpi sgt, %15, %379 : vector<8x32xi32>
    %381 = arith.select %380, %378, %361 : vector<8x32xi1>, vector<8x32xf32>
    %382 = tpu.concatenate %381, %140 in 1 : vector<8x32xf32>, vector<8x32xf32> -> vector<8x64xf32>
    %c48_114 = arith.constant 48 : index
    %c0_115 = arith.constant 0 : index
    %383 = vector.load %arg2[%c48_114, %c0_115] : memref<168x256xf32, #tpu.memory_space<vmem>>, vector<64x32xf32>
    %c152 = arith.constant 152 : index
    %c0_116 = arith.constant 0 : index
    %384 = vector.load %arg2[%c152, %c0_116] : memref<168x256xf32, #tpu.memory_space<vmem>>, vector<1x32xf32>
    %c112_117 = arith.constant 112 : index
    %c0_118 = arith.constant 0 : index
    %385 = vector.load %arg2[%c112_117, %c0_118] : memref<168x256xf32, #tpu.memory_space<vmem>>, vector<32x8xf32>
    %c160_119 = arith.constant 160 : index
    %c0_120 = arith.constant 0 : index
    %386 = vector.load %arg2[%c160_119, %c0_120] : memref<168x256xf32, #tpu.memory_space<vmem>>, vector<1x8xf32>
    %cst_121 = arith.constant dense<0.000000e+00> : vector<8x32xf32>
    %387 = tpu.matmul %382, %383, %cst_121 {dimension_numbers = #tpu.dot_dimension_numbers<[1], [0], [0], [1], [0, 0, 1, 1], [], []>} : vector<8x64xf32>, vector<64x32xf32>, vector<8x32xf32> -> vector<8x32xf32>
    %388 = vector.broadcast %384 : vector<1x32xf32> to vector<8x32xf32>
    %389 = arith.addf %387, %388 : vector<8x32xf32>
    %cst_122 = arith.constant 0.000000e+00 : f32
    %390 = vector.broadcast %cst_122 : f32 to vector<8x32xf32>
    %391 = arith.maximumf %389, %390 : vector<8x32xf32>
    %cst_123 = arith.constant dense<0.000000e+00> : vector<8x8xf32>
    %392 = tpu.matmul %391, %385, %cst_123 {dimension_numbers = #tpu.dot_dimension_numbers<[1], [0], [0], [1], [0, 0, 1, 1], [], []>} : vector<8x32xf32>, vector<32x8xf32>, vector<8x8xf32> -> vector<8x8xf32>
    %393 = vector.broadcast %386 : vector<1x8xf32> to vector<8x8xf32>
    %394 = arith.addf %392, %393 : vector<8x8xf32>
    %c0_124 = arith.constant 0 : index
    %c0_125 = arith.constant 0 : index
    %395 = vector.load %arg3[%c0_124, %c0_125] : memref<8x8xf32, #tpu.memory_space<vmem>>, vector<8x8xf32>
    tpu.vector_store %arg3[%c0_124, %c0_125], %394 {strides = array<i32>} : memref<8x8xf32, #tpu.memory_space<vmem>>, vector<8x8xf32>,
    return
  }
}

</mosaic_0001>

<llo_original>
// kernel: seq2one_lstm_forward.1
$region0: #{seq2one_lstm_forward.1}
  #allocation0 [shape = 'u32[]', space=smem, size = 0x4, offset = 0x4, fixed_abs, tag = 'smem constant byte address 0x4 - core index']
  #allocation1 [shape = 'u32[144,128]{1,0:T(1,128)}', space=vmem, size = 0x12000, scoped, tag = 'internal scratch']
  #allocation2 [shape = 'f32[96,128]{1,0:T(8,128)}', space=vmem, size = 0xc000, scoped, tag = 'scratch operand']
  %s0 = inlined_call_operand.vmem [shape: f32[8,192], index: 0, kind: input, shape index: {}]
  %s1 = inlined_call_operand.vmem [shape: s32[8,1], index: 1, kind: input, shape index: {}]
  %s2 = inlined_call_operand.vmem [shape: f32[168,256], index: 2, kind: input, shape index: {}]
  %s3 = inlined_call_operand.hbm [shape: f32[8,8], index: 3, kind: output, shape index: {}]
  %s4 = sld [smem:[#allocation0]]
  $region22: #{seq2one_lstm_forward.1} parent=0
    _
  %s6 = ssub.s32 1, %s4
  %s7 = scalar_select 0, %s6, %s4
  $region1: #{seq2one_lstm_forward.1} parent=0
    #allocation3 [shape = 'u8[4096]{0}', space=vmem, size = 0x1000, scoped, tag = 'output window, operand 0, single buffered']
    #allocation4 [shape = 's32[1]{0}', space=sflag, size = 0x4, scoped, tag = 'scoped memory for seq2one_lstm_forward.1']
    %8 = vsyncpa [#allocation4], 0
    // Predicated region
    $region2: #{seq2one_lstm_forward.1} parent=1 // pred_check
      _
    $region3: #{seq2one_lstm_forward.1} parent=1 // pred_check_branch
      %10 = sbr.rel (0) target = $region5
    $region4: #{seq2one_lstm_forward.1} parent=1 // pred_region
      _
    $region5: #{seq2one_lstm_forward.1} parent=1 // pred_fallthru
      _
    // Predicated region
    $region6: #{seq2one_lstm_forward.1} parent=1 // pred_check
      _
    $region7: #{seq2one_lstm_forward.1} parent=1 // pred_check_branch
      %12 = sbr.rel (0) target = $region9
    $region8: #{seq2one_lstm_forward.1} parent=1 // pred_region
      _
    $region9: #{seq2one_lstm_forward.1} parent=1 // pred_fallthru
      _
    // Predicated region
    $region10: #{seq2one_lstm_forward.1} parent=1 // pred_check
      _
    $region11: #{seq2one_lstm_forward.1} parent=1 // pred_check_branch
      %14 = sbr.rel (0) target = $region13
    $region12: #{seq2one_lstm_forward.1} parent=1 // pred_region
      _
    $region13: #{seq2one_lstm_forward.1} parent=1 // pred_fallthru
      _
    %v15 = vlaneseq
    %v16 = vand.u32 %v15, 127
    %vm17 = vcmp.ge.s32.totalorder %v16, 96
    %v18 = vsel %vm17, 1.0, 0.5
    %v19 = vsel %vm17, 0.0, 0.5
    %v20 = vld [vmem:[%s1] sm:$0xff]
    %21 = vset.pattern.permute.xlu0 0
    %22 = vperm.xlu0 %21, %v20
    %v23 = vpop.permute.xlu0 %22
    %v24 = vld [vmem:[%s2] sm:$0xff]
    %v25 = vld [vmem:[%s2 + $0x8] sm:$0xff]
    %v26 = vld [vmem:[%s2 + $0x10] sm:$0xff]
    %v27 = vld [vmem:[%s2 + $0x18] sm:$0xff]
    %v28 = vld [vmem:[%s2 + $0x20] sm:$0xff]
    %v29 = vld [vmem:[%s2 + $0x30] sm:$0xff]
    %v30 = vld [vmem:[%s2 + $0x40] sm:$0xff]
    %v31 = vld [vmem:[%s2 + $0x50] sm:$0xff]
    %s32 = scalar_lea.vmem %s2, 288
    %v33 = vld [vmem:[%s32] ss:$8 sm:$0x3]
    %v35 = vlaneseq
    %v36 = vshrl.u32 %v35, 7
    %v37 = vsub.s32 0, %v36
    %v38 = vrot.slane %v33, %v37
    %v39 = vlaneseq
    %v40 = vshrl.u32 %v39, 7
    %v41 = vsub.s32 1, %v40
    %v42 = vrot.slane %v33, %v41
    %v45 = vld [vmem:[%s0] sm:$0xff]
    %vm46 = vcmask 130048
    %v48 = vsel %vm46, %v45, 0
    %50 = vmatprep.subr.mxu0 %v25
    %51 = vmatpush1.msra.mxu0 %v24
    %52 = vmatprep.subr.mxu0 %v27
    %53 = vmatpush1.msra.mxu0 %v26
    %54 = vmatprep.subr.mxu0 0.0
    %55 = vmatpush1.msra.mxu0 0.0
    %56 = vmatprep.subr.mxu0 0.0
    %57 = vmatpush1.msra.mxu0 0.0
    %58 = vmatprep.subr.mxu0 0.0
    %59 = vmatpush1.msra.mxu0 0.0
    %60 = vmatprep.subr.mxu0 0.0
    %61 = vmatpush1.msra.mxu0 0.0
    %62 = vmatprep.subr.mxu0 0.0
    %63 = vmatpush1.msra.mxu0 0.0
    %64 = vmatprep.subr.mxu0 0.0
    %65 = vmatpush1.msra.mxu0 0.0
    %66 = vmatprep.subr.mxu0 0.0
    %67 = vmatpush1.msra.mxu0 0.0
    %68 = vmatprep.subr.mxu0 0.0
    %69 = vmatpush1.msra.mxu0 0.0
    %70 = vmatprep.subr.mxu0 0.0
    %71 = vmatpush1.msra.mxu0 0.0
    %72 = vmatprep.subr.mxu0 0.0
    %73 = vmatpush1.msra.mxu0 0.0
    %74 = vmatprep.subr.mxu0 0.0
    %75 = vmatpush1.msra.mxu0 0.0
    %76 = vmatprep.subr.mxu0 0.0
    %77 = vmatpush1.msra.mxu0 0.0
    %78 = vmatprep.subr.mxu0 0.0
    %79 = vmatpush1.msra.mxu0 0.0
    %80 = vmatprep.subr.mxu0 0.0
    %81 = vmatpush1.msra.mxu0 0.0
    %82 = vmatprep.subr.mxu0 0.0
    %83 = vmatpush1.msra.mxu0 0.0
    %84 = vmatprep.subr.mxu0 0.0
    %85 = vmatpush1.msra.mxu0 0.0
    %86 = vmatprep.subr.mxu0 0.0
    %87 = vmatpush1.msra.mxu0 0.0
    %88 = vmatprep.subr.mxu0 0.0
    %89 = vmatpush1.msra.mxu0 0.0
    %90 = vmatprep.subr.mxu0 0.0
    %91 = vmatpush1.msra.mxu0 0.0
    %92 = vmatprep.subr.mxu0 0.0
    %93 = vmatpush1.msra.mxu0 0.0
    %94 = vmatprep.subr.mxu0 0.0
    %95 = vmatpush1.msra.mxu0 0.0
    %96 = vmatprep.subr.mxu0 0.0
    %97 = vmatpush1.msra.mxu0 0.0
    %98 = vmatprep.subr.mxu0 0.0
    %99 = vmatpush1.msra.mxu0 0.0
    %100 = vmatprep.subr.mxu0 0.0
    %101 = vmatpush1.msra.mxu0 0.0
    %102 = vmatprep.subr.mxu0 0.0
    %103 = vmatpush1.msra.mxu0 0.0
    %104 = vmatprep.subr.mxu0 0.0
    %105 = vmatpush1.msra.mxu0 0.0
    %106 = vmatprep.subr.mxu0 0.0
    %107 = vmatpush1.msra.mxu0 0.0
    %108 = vmatprep.subr.mxu0 0.0
    %109 = vmatpush1.msra.mxu0 0.0
    %110 = vmatprep.subr.mxu0 0.0
    %111 = vmatpush1.msra.mxu0 0.0
    %112 = vmatprep.subr.mxu0 0.0
    %113 = vmatpush1.msra.mxu0 0.0
    %114 = vmatprep.mubr.f32.mxu0 0.0
    %115 = vmatmul.mubr.f32.gmra.mrb[0].mxu0 %v48
    %v116 = vpop.f32.mrb[0].mxu0
    %v117 = vadd.f32 %v38, %v116
    %v118 = vpop.f32.mrb[0].mxu0
    %v119 = vadd.f32 %v42, %v118
    %120 = vdwg.mxu0
    %121 = vst [vmem:[#allocation2] sm:$0xff] %v117
    %vm122 = vcmp.eq.s32.totalorder %v23, 1
    %v123 = vsel %vm122, %v119, 0.0
    %v124 = vld [vmem:[%s0] sm:$0xff]
    %126 = vrot.lane.b32.xlu0 %v124, 112
    %v127 = vpop.permute.xlu0 %126
    %v128 = vsel %vm46, %v127, 0
    %130 = vmatprep.subr.mxu0 %v25
    %131 = vmatpush1.msra.mxu0 %v24
    %132 = vmatprep.subr.mxu0 %v27
    %133 = vmatpush1.msra.mxu0 %v26
    %134 = vmatprep.subr.mxu0 0.0
    %135 = vmatpush1.msra.mxu0 0.0
    %136 = vmatprep.subr.mxu0 0.0
    %137 = vmatpush1.msra.mxu0 0.0
    %138 = vmatprep.subr.mxu0 0.0
    %139 = vmatpush1.msra.mxu0 0.0
    %140 = vmatprep.subr.mxu0 0.0
    %141 = vmatpush1.msra.mxu0 0.0
    %142 = vmatprep.subr.mxu0 0.0
    %143 = vmatpush1.msra.mxu0 0.0
    %144 = vmatprep.subr.mxu0 0.0
    %145 = vmatpush1.msra.mxu0 0.0
    %146 = vmatprep.subr.mxu0 0.0
    %147 = vmatpush1.msra.mxu0 0.0
    %148 = vmatprep.subr.mxu0 0.0
    %149 = vmatpush1.msra.mxu0 0.0
    %150 = vmatprep.subr.mxu0 0.0
    %151 = vmatpush1.msra.mxu0 0.0
    %152 = vmatprep.subr.mxu0 0.0
    %153 = vmatpush1.msra.mxu0 0.0
    %154 = vmatprep.subr.mxu0 0.0
    %155 = vmatpush1.msra.mxu0 0.0
    %156 = vmatprep.subr.mxu0 0.0
    %157 = vmatpush1.msra.mxu0 0.0
    %158 = vmatprep.subr.mxu0 0.0
    %159 = vmatpush1.msra.mxu0 0.0
    %160 = vmatprep.subr.mxu0 0.0
    %161 = vmatpush1.msra.mxu0 0.0
    %162 = vmatprep.subr.mxu0 0.0
    %163 = vmatpush1.msra.mxu0 0.0
    %164 = vmatprep.subr.mxu0 0.0
    %165 = vmatpush1.msra.mxu0 0.0
    %166 = vmatprep.subr.mxu0 0.0
    %167 = vmatpush1.msra.mxu0 0.0
    %168 = vmatprep.subr.mxu0 0.0
    %169 = vmatpush1.msra.mxu0 0.0
    %170 = vmatprep.subr.mxu0 0.0
    %171 = vmatpush1.msra.mxu0 0.0
    %172 = vmatprep.subr.mxu0 0.0
    %173 = vmatpush1.msra.mxu0 0.0
    %174 = vmatprep.subr.mxu0 0.0
    %175 = vmatpush1.msra.mxu0 0.0
    %176 = vmatprep.subr.mxu0 0.0
    %177 = vmatpush1.msra.mxu0 0.0
    %178 = vmatprep.subr.mxu0 0.0
    %179 = vmatpush1.msra.mxu0 0.0
    %180 = vmatprep.subr.mxu0 0.0
    %181 = vmatpush1.msra.mxu0 0.0
    %182 = vmatprep.subr.mxu0 0.0
    %183 = vmatpush1.msra.mxu0 0.0
    %184 = vmatprep.subr.mxu0 0.0
    %185 = vmatpush1.msra.mxu0 0.0
    %186 = vmatprep.subr.mxu0 0.0
    %187 = vmatpush1.msra.mxu0 0.0
    %188 = vmatprep.subr.mxu0 0.0
    %189 = vmatpush1.msra.mxu0 0.0
    %190 = vmatprep.subr.mxu0 0.0
    %191 = vmatpush1.msra.mxu0 0.0
    %192 = vmatprep.subr.mxu0 0.0
    %193 = vmatpush1.msra.mxu0 0.0
    %194 = vmatprep.mubr.f32.mxu0 0.0
    %195 = vmatmul.mubr.f32.gmra.mrb[0].mxu0 %v128
    %v196 = vpop.f32.mrb[0].mxu0
    %v197 = vadd.f32 %v38, %v196
    %v198 = vpop.f32.mrb[0].mxu0
    %v199 = vadd.f32 %v42, %v198
    %200 = vdwg.mxu0
    %201 = vst [vmem:[#allocation2 + $0x8] sm:$0xff] %v197
    %vm202 = vcmp.eq.s32.totalorder %v23, 2
    %v203 = vsel %vm202, %v199, %v123
    %v204 = vld [vmem:[%s0] sm:$0xff]
    %206 = vrot.lane.b32.xlu0 %v204, 96
    %v207 = vpop.permute.xlu0 %206
    %v208 = vsel %vm46, %v207, 0
    %210 = vmatprep.subr.mxu0 %v25
    %211 = vmatpush1.msra.mxu0 %v24
    %212 = vmatprep.subr.mxu0 %v27
    %213 = vmatpush1.msra.mxu0 %v26
    %214 = vmatprep.subr.mxu0 0.0
    %215 = vmatpush1.msra.mxu0 0.0
    %216 = vmatprep.subr.mxu0 0.0
    %217 = vmatpush1.msra.mxu0 0.0
    %218 = vmatprep.subr.mxu0 0.0
    %219 = vmatpush1.msra.mxu0 0.0
    %220 = vmatprep.subr.mxu0 0.0
    %221 = vmatpush1.msra.mxu0 0.0
    %222 = vmatprep.subr.mxu0 0.0
    %223 = vmatpush1.msra.mxu0 0.0
    %224 = vmatprep.subr.mxu0 0.0
    %225 = vmatpush1.msra.mxu0 0.0
    %226 = vmatprep.subr.mxu0 0.0
    %227 = vmatpush1.msra.mxu0 0.0
    %228 = vmatprep.subr.mxu0 0.0
    %229 = vmatpush1.msra.mxu0 0.0
    %230 = vmatprep.subr.mxu0 0.0
    %231 = vmatpush1.msra.mxu0 0.0
    %232 = vmatprep.subr.mxu0 0.0
    %233 = vmatpush1.msra.mxu0 0.0
    %234 = vmatprep.subr.mxu0 0.0
    %235 = vmatpush1.msra.mxu0 0.0
    %236 = vmatprep.subr.mxu0 0.0
    %237 = vmatpush1.msra.mxu0 0.0
    %238 = vmatprep.subr.mxu0 0.0
    %239 = vmatpush1.msra.mxu0 0.0
    %240 = vmatprep.subr.mxu0 0.0
    %241 = vmatpush1.msra.mxu0 0.0
    %242 = vmatprep.subr.mxu0 0.0
    %243 = vmatpush1.msra.mxu0 0.0
    %244 = vmatprep.subr.mxu0 0.0
    %245 = vmatpush1.msra.mxu0 0.0
    %246 = vmatprep.subr.mxu0 0.0
    %247 = vmatpush1.msra.mxu0 0.0
    %248 = vmatprep.subr.mxu0 0.0
    %249 = vmatpush1.msra.mxu0 0.0
    %250 = vmatprep.subr.mxu0 0.0
    %251 = vmatpush1.msra.mxu0 0.0
    %252 = vmatprep.subr.mxu0 0.0
    %253 = vmatpush1.msra.mxu0 0.0
    %254 = vmatprep.subr.mxu0 0.0
    %255 = vmatpush1.msra.mxu0 0.0
    %256 = vmatprep.subr.mxu0 0.0
    %257 = vmatpush1.msra.mxu0 0.0
    %258 = vmatprep.subr.mxu0 0.0
    %259 = vmatpush1.msra.mxu0 0.0
    %260 = vmatprep.subr.mxu0 0.0
    %261 = vmatpush1.msra.mxu0 0.0
    %262 = vmatprep.subr.mxu0 0.0
    %263 = vmatpush1.msra.mxu0 0.0
    %264 = vmatprep.subr.mxu0 0.0
    %265 = vmatpush1.msra.mxu0 0.0
    %266 = vmatprep.subr.mxu0 0.0
    %267 = vmatpush1.msra.mxu0 0.0
    %268 = vmatprep.subr.mxu0 0.0
    %269 = vmatpush1.msra.mxu0 0.0
    %270 = vmatprep.subr.mxu0 0.0
    %271 = vmatpush1.msra.mxu0 0.0
    %272 = vmatprep.subr.mxu0 0.0
    %273 = vmatpush1.msra.mxu0 0.0
    %274 = vmatprep.mubr.f32.mxu0 0.0
    %275 = vmatmul.mubr.f32.gmra.mrb[0].mxu0 %v208
    %v276 = vpop.f32.mrb[0].mxu0
    %v277 = vadd.f32 %v38, %v276
    %v278 = vpop.f32.mrb[0].mxu0
    %v279 = vadd.f32 %v42, %v278
    %280 = vdwg.mxu0
    %281 = vst [vmem:[#allocation2 + $0x10] sm:$0xff] %v277
    %vm282 = vcmp.eq.s32.totalorder %v23, 3
    %v283 = vsel %vm282, %v279, %v203
    %v284 = vld [vmem:[%s0] sm:$0xff]
    %286 = vrot.lane.b32.xlu0 %v284, 80
    %v287 = vpop.permute.xlu0 %286
    %v288 = vsel %vm46, %v287, 0
    %290 = vmatprep.subr.mxu0 %v25
    %291 = vmatpush1.msra.mxu0 %v24
    %292 = vmatprep.subr.mxu0 %v27
    %293 = vmatpush1.msra.mxu0 %v26
    %294 = vmatprep.subr.mxu0 0.0
    %295 = vmatpush1.msra.mxu0 0.0
    %296 = vmatprep.subr.mxu0 0.0
    %297 = vmatpush1.msra.mxu0 0.0
    %298 = vmatprep.subr.mxu0 0.0
    %299 = vmatpush1.msra.mxu0 0.0
    %300 = vmatprep.subr.mxu0 0.0
    %301 = vmatpush1.msra.mxu0 0.0
    %302 = vmatprep.subr.mxu0 0.0
    %303 = vmatpush1.msra.mxu0 0.0
    %304 = vmatprep.subr.mxu0 0.0
    %305 = vmatpush1.msra.mxu0 0.0
    %306 = vmatprep.subr.mxu0 0.0
    %307 = vmatpush1.msra.mxu0 0.0
    %308 = vmatprep.subr.mxu0 0.0
    %309 = vmatpush1.msra.mxu0 0.0
    %310 = vmatprep.subr.mxu0 0.0
    %311 = vmatpush1.msra.mxu0 0.0
    %312 = vmatprep.subr.mxu0 0.0
    %313 = vmatpush1.msra.mxu0 0.0
    %314 = vmatprep.subr.mxu0 0.0
    %315 = vmatpush1.msra.mxu0 0.0
    %316 = vmatprep.subr.mxu0 0.0
    %317 = vmatpush1.msra.mxu0 0.0
    %318 = vmatprep.subr.mxu0 0.0
    %319 = vmatpush1.msra.mxu0 0.0
    %320 = vmatprep.subr.mxu0 0.0
    %321 = vmatpush1.msra.mxu0 0.0
    %322 = vmatprep.subr.mxu0 0.0
    %323 = vmatpush1.msra.mxu0 0.0
    %324 = vmatprep.subr.mxu0 0.0
    %325 = vmatpush1.msra.mxu0 0.0
    %326 = vmatprep.subr.mxu0 0.0
    %327 = vmatpush1.msra.mxu0 0.0
    %328 = vmatprep.subr.mxu0 0.0
    %329 = vmatpush1.msra.mxu0 0.0
    %330 = vmatprep.subr.mxu0 0.0
    %331 = vmatpush1.msra.mxu0 0.0
    %332 = vmatprep.subr.mxu0 0.0
    %333 = vmatpush1.msra.mxu0 0.0
    %334 = vmatprep.subr.mxu0 0.0
    %335 = vmatpush1.msra.mxu0 0.0
    %336 = vmatprep.subr.mxu0 0.0
    %337 = vmatpush1.msra.mxu0 0.0
    %338 = vmatprep.subr.mxu0 0.0
    %339 = vmatpush1.msra.mxu0 0.0
    %340 = vmatprep.subr.mxu0 0.0
    %341 = vmatpush1.msra.mxu0 0.0
    %342 = vmatprep.subr.mxu0 0.0
    %343 = vmatpush1.msra.mxu0 0.0
    %344 = vmatprep.subr.mxu0 0.0
    %345 = vmatpush1.msra.mxu0 0.0
    %346 = vmatprep.subr.mxu0 0.0
    %347 = vmatpush1.msra.mxu0 0.0
    %348 = vmatprep.subr.mxu0 0.0
    %349 = vmatpush1.msra.mxu0 0.0
    %350 = vmatprep.subr.mxu0 0.0
    %351 = vmatpush1.msra.mxu0 0.0
    %352 = vmatprep.subr.mxu0 0.0
    %353 = vmatpush1.msra.mxu0 0.0
    %354 = vmatprep.mubr.f32.mxu0 0.0
    %355 = vmatmul.mubr.f32.gmra.mrb[0].mxu0 %v288
    %v356 = vpop.f32.mrb[0].mxu0
    %v357 = vadd.f32 %v38, %v356
    %v358 = vpop.f32.mrb[0].mxu0
    %v359 = vadd.f32 %v42, %v358
    %360 = vdwg.mxu0
    %361 = vst [vmem:[#allocation2 + $0x18] sm:$0xff] %v357
    %vm362 = vcmp.eq.s32.totalorder %v23, 4
    %v363 = vsel %vm362, %v359, %v283
    %v364 = vld [vmem:[%s0] sm:$0xff]
    %366 = vrot.lane.b32.xlu0 %v364, 64
    %v367 = vpop.permute.xlu0 %366
    %v368 = vsel %vm46, %v367, 0
    %370 = vmatprep.subr.mxu0 %v25
    %371 = vmatpush1.msra.mxu0 %v24
    %372 = vmatprep.subr.mxu0 %v27
    %373 = vmatpush1.msra.mxu0 %v26
    %374 = vmatprep.subr.mxu0 0.0
    %375 = vmatpush1.msra.mxu0 0.0
    %376 = vmatprep.subr.mxu0 0.0
    %377 = vmatpush1.msra.mxu0 0.0
    %378 = vmatprep.subr.mxu0 0.0
    %379 = vmatpush1.msra.mxu0 0.0
    %380 = vmatprep.subr.mxu0 0.0
    %381 = vmatpush1.msra.mxu0 0.0
    %382 = vmatprep.subr.mxu0 0.0
    %383 = vmatpush1.msra.mxu0 0.0
    %384 = vmatprep.subr.mxu0 0.0
    %385 = vmatpush1.msra.mxu0 0.0
    %386 = vmatprep.subr.mxu0 0.0
    %387 = vmatpush1.msra.mxu0 0.0
    %388 = vmatprep.subr.mxu0 0.0
    %389 = vmatpush1.msra.mxu0 0.0
    %390 = vmatprep.subr.mxu0 0.0
    %391 = vmatpush1.msra.mxu0 0.0
    %392 = vmatprep.subr.mxu0 0.0
    %393 = vmatpush1.msra.mxu0 0.0
    %394 = vmatprep.subr.mxu0 0.0
    %395 = vmatpush1.msra.mxu0 0.0
    %396 = vmatprep.subr.mxu0 0.0
    %397 = vmatpush1.msra.mxu0 0.0
    %398 = vmatprep.subr.mxu0 0.0
    %399 = vmatpush1.msra.mxu0 0.0
    %400 = vmatprep.subr.mxu0 0.0
    %401 = vmatpush1.msra.mxu0 0.0
    %402 = vmatprep.subr.mxu0 0.0
    %403 = vmatpush1.msra.mxu0 0.0
    %404 = vmatprep.subr.mxu0 0.0
    %405 = vmatpush1.msra.mxu0 0.0
    %406 = vmatprep.subr.mxu0 0.0
    %407 = vmatpush1.msra.mxu0 0.0
    %408 = vmatprep.subr.mxu0 0.0
    %409 = vmatpush1.msra.mxu0 0.0
    %410 = vmatprep.subr.mxu0 0.0
    %411 = vmatpush1.msra.mxu0 0.0
    %412 = vmatprep.subr.mxu0 0.0
    %413 = vmatpush1.msra.mxu0 0.0
    %414 = vmatprep.subr.mxu0 0.0
    %415 = vmatpush1.msra.mxu0 0.0
    %416 = vmatprep.subr.mxu0 0.0
    %417 = vmatpush1.msra.mxu0 0.0
    %418 = vmatprep.subr.mxu0 0.0
    %419 = vmatpush1.msra.mxu0 0.0
    %420 = vmatprep.subr.mxu0 0.0
    %421 = vmatpush1.msra.mxu0 0.0
    %422 = vmatprep.subr.mxu0 0.0
    %423 = vmatpush1.msra.mxu0 0.0
    %424 = vmatprep.subr.mxu0 0.0
    %425 = vmatpush1.msra.mxu0 0.0
    %426 = vmatprep.subr.mxu0 0.0
    %427 = vmatpush1.msra.mxu0 0.0
    %428 = vmatprep.subr.mxu0 0.0
    %429 = vmatpush1.msra.mxu0 0.0
    %430 = vmatprep.subr.mxu0 0.0
    %431 = vmatpush1.msra.mxu0 0.0
    %432 = vmatprep.subr.mxu0 0.0
    %433 = vmatpush1.msra.mxu0 0.0
    %434 = vmatprep.mubr.f32.mxu0 0.0
    %435 = vmatmul.mubr.f32.gmra.mrb[0].mxu0 %v368
    %v436 = vpop.f32.mrb[0].mxu0
    %v437 = vadd.f32 %v38, %v436
    %v438 = vpop.f32.mrb[0].mxu0
    %v439 = vadd.f32 %v42, %v438
    %440 = vdwg.mxu0
    %441 = vst [vmem:[#allocation2 + $0x20] sm:$0xff] %v437
    %vm442 = vcmp.eq.s32.totalorder %v23, 5
    %v443 = vsel %vm442, %v439, %v363
    %v444 = vld [vmem:[%s0] sm:$0xff]
    %446 = vrot.lane.b32.xlu0 %v444, 48
    %v447 = vpop.permute.xlu0 %446
    %v448 = vsel %vm46, %v447, 0
    %450 = vmatprep.subr.mxu0 %v25
    %451 = vmatpush1.msra.mxu0 %v24
    %452 = vmatprep.subr.mxu0 %v27
    %453 = vmatpush1.msra.mxu0 %v26
    %454 = vmatprep.subr.mxu0 0.0
    %455 = vmatpush1.msra.mxu0 0.0
    %456 = vmatprep.subr.mxu0 0.0
    %457 = vmatpush1.msra.mxu0 0.0
    %458 = vmatprep.subr.mxu0 0.0
    %459 = vmatpush1.msra.mxu0 0.0
    %460 = vmatprep.subr.mxu0 0.0
    %461 = vmatpush1.msra.mxu0 0.0
    %462 = vmatprep.subr.mxu0 0.0
    %463 = vmatpush1.msra.mxu0 0.0
    %464 = vmatprep.subr.mxu0 0.0
    %465 = vmatpush1.msra.mxu0 0.0
    %466 = vmatprep.subr.mxu0 0.0
    %467 = vmatpush1.msra.mxu0 0.0
    %468 = vmatprep.subr.mxu0 0.0
    %469 = vmatpush1.msra.mxu0 0.0
    %470 = vmatprep.subr.mxu0 0.0
    %471 = vmatpush1.msra.mxu0 0.0
    %472 = vmatprep.subr.mxu0 0.0
    %473 = vmatpush1.msra.mxu0 0.0
    %474 = vmatprep.subr.mxu0 0.0
    %475 = vmatpush1.msra.mxu0 0.0
    %476 = vmatprep.subr.mxu0 0.0
    %477 = vmatpush1.msra.mxu0 0.0
    %478 = vmatprep.subr.mxu0 0.0
    %479 = vmatpush1.msra.mxu0 0.0
    %480 = vmatprep.subr.mxu0 0.0
    %481 = vmatpush1.msra.mxu0 0.0
    %482 = vmatprep.subr.mxu0 0.0
    %483 = vmatpush1.msra.mxu0 0.0
    %484 = vmatprep.subr.mxu0 0.0
    %485 = vmatpush1.msra.mxu0 0.0
    %486 = vmatprep.subr.mxu0 0.0
    %487 = vmatpush1.msra.mxu0 0.0
    %488 = vmatprep.subr.mxu0 0.0
    %489 = vmatpush1.msra.mxu0 0.0
    %490 = vmatprep.subr.mxu0 0.0
    %491 = vmatpush1.msra.mxu0 0.0
    %492 = vmatprep.subr.mxu0 0.0
    %493 = vmatpush1.msra.mxu0 0.0
    %494 = vmatprep.subr.mxu0 0.0
    %495 = vmatpush1.msra.mxu0 0.0
    %496 = vmatprep.subr.mxu0 0.0
    %497 = vmatpush1.msra.mxu0 0.0
    %498 = vmatprep.subr.mxu0 0.0
    %499 = vmatpush1.msra.mxu0 0.0
    %500 = vmatprep.subr.mxu0 0.0
    %501 = vmatpush1.msra.mxu0 0.0
    %502 = vmatprep.subr.mxu0 0.0
    %503 = vmatpush1.msra.mxu0 0.0
    %504 = vmatprep.subr.mxu0 0.0
    %505 = vmatpush1.msra.mxu0 0.0
    %506 = vmatprep.subr.mxu0 0.0
    %507 = vmatpush1.msra.mxu0 0.0
    %508 = vmatprep.subr.mxu0 0.0
    %509 = vmatpush1.msra.mxu0 0.0
    %510 = vmatprep.subr.mxu0 0.0
    %511 = vmatpush1.msra.mxu0 0.0
    %512 = vmatprep.subr.mxu0 0.0
    %513 = vmatpush1.msra.mxu0 0.0
    %514 = vmatprep.mubr.f32.mxu0 0.0
    %515 = vmatmul.mubr.f32.gmra.mrb[0].mxu0 %v448
    %v516 = vpop.f32.mrb[0].mxu0
    %v517 = vadd.f32 %v38, %v516
    %v518 = vpop.f32.mrb[0].mxu0
    %v519 = vadd.f32 %v42, %v518
    %520 = vdwg.mxu0
    %521 = vst [vmem:[#allocation2 + $0x28] sm:$0xff] %v517
    %vm522 = vcmp.eq.s32.totalorder %v23, 6
    %v523 = vsel %vm522, %v519, %v443
    %v524 = vld [vmem:[%s0] sm:$0xff]
    %526 = vrot.lane.b32.xlu0 %v524, 32
    %v527 = vpop.permute.xlu0 %526
    %v528 = vsel %vm46, %v527, 0
    %530 = vmatprep.subr.mxu0 %v25
    %531 = vmatpush1.msra.mxu0 %v24
    %532 = vmatprep.subr.mxu0 %v27
    %533 = vmatpush1.msra.mxu0 %v26
    %534 = vmatprep.subr.mxu0 0.0
    %535 = vmatpush1.msra.mxu0 0.0
    %536 = vmatprep.subr.mxu0 0.0
    %537 = vmatpush1.msra.mxu0 0.0
    %538 = vmatprep.subr.mxu0 0.0
    %539 = vmatpush1.msra.mxu0 0.0
    %540 = vmatprep.subr.mxu0 0.0
    %541 = vmatpush1.msra.mxu0 0.0
    %542 = vmatprep.subr.mxu0 0.0
    %543 = vmatpush1.msra.mxu0 0.0
    %544 = vmatprep.subr.mxu0 0.0
    %545 = vmatpush1.msra.mxu0 0.0
    %546 = vmatprep.subr.mxu0 0.0
    %547 = vmatpush1.msra.mxu0 0.0
    %548 = vmatprep.subr.mxu0 0.0
    %549 = vmatpush1.msra.mxu0 0.0
    %550 = vmatprep.subr.mxu0 0.0
    %551 = vmatpush1.msra.mxu0 0.0
    %552 = vmatprep.subr.mxu0 0.0
    %553 = vmatpush1.msra.mxu0 0.0
    %554 = vmatprep.subr.mxu0 0.0
    %555 = vmatpush1.msra.mxu0 0.0
    %556 = vmatprep.subr.mxu0 0.0
    %557 = vmatpush1.msra.mxu0 0.0
    %558 = vmatprep.subr.mxu0 0.0
    %559 = vmatpush1.msra.mxu0 0.0
    %560 = vmatprep.subr.mxu0 0.0
    %561 = vmatpush1.msra.mxu0 0.0
    %562 = vmatprep.subr.mxu0 0.0
    %563 = vmatpush1.msra.mxu0 0.0
    %564 = vmatprep.subr.mxu0 0.0
    %565 = vmatpush1.msra.mxu0 0.0
    %566 = vmatprep.subr.mxu0 0.0
    %567 = vmatpush1.msra.mxu0 0.0
    %568 = vmatprep.subr.mxu0 0.0
    %569 = vmatpush1.msra.mxu0 0.0
    %570 = vmatprep.subr.mxu0 0.0
    %571 = vmatpush1.msra.mxu0 0.0
    %572 = vmatprep.subr.mxu0 0.0
    %573 = vmatpush1.msra.mxu0 0.0
    %574 = vmatprep.subr.mxu0 0.0
    %575 = vmatpush1.msra.mxu0 0.0
    %576 = vmatprep.subr.mxu0 0.0
    %577 = vmatpush1.msra.mxu0 0.0
    %578 = vmatprep.subr.mxu0 0.0
    %579 = vmatpush1.msra.mxu0 0.0
    %580 = vmatprep.subr.mxu0 0.0
    %581 = vmatpush1.msra.mxu0 0.0
    %582 = vmatprep.subr.mxu0 0.0
    %583 = vmatpush1.msra.mxu0 0.0
    %584 = vmatprep.subr.mxu0 0.0
    %585 = vmatpush1.msra.mxu0 0.0
    %586 = vmatprep.subr.mxu0 0.0
    %587 = vmatpush1.msra.mxu0 0.0
    %588 = vmatprep.subr.mxu0 0.0
    %589 = vmatpush1.msra.mxu0 0.0
    %590 = vmatprep.subr.mxu0 0.0
    %591 = vmatpush1.msra.mxu0 0.0
    %592 = vmatprep.subr.mxu0 0.0
    %593 = vmatpush1.msra.mxu0 0.0
    %594 = vmatprep.mubr.f32.mxu0 0.0
    %595 = vmatmul.mubr.f32.gmra.mrb[0].mxu0 %v528
    %v596 = vpop.f32.mrb[0].mxu0
    %v597 = vadd.f32 %v38, %v596
    %v598 = vpop.f32.mrb[0].mxu0
    %v599 = vadd.f32 %v42, %v598
    %600 = vdwg.mxu0
    %601 = vst [vmem:[#allocation2 + $0x30] sm:$0xff] %v597
    %vm602 = vcmp.eq.s32.totalorder %v23, 7
    %v603 = vsel %vm602, %v599, %v523
    %v604 = vld [vmem:[%s0] sm:$0xff]
    %606 = vrot.lane.b32.xlu0 %v604, 16
    %v607 = vpop.permute.xlu0 %606
    %v608 = vsel %vm46, %v607, 0
    %610 = vmatprep.subr.mxu0 %v25
    %611 = vmatpush1.msra.mxu0 %v24
    %612 = vmatprep.subr.mxu0 %v27
    %613 = vmatpush1.msra.mxu0 %v26
    %614 = vmatprep.subr.mxu0 0.0
    %615 = vmatpush1.msra.mxu0 0.0
    %616 = vmatprep.subr.mxu0 0.0
    %617 = vmatpush1.msra.mxu0 0.0
    %618 = vmatprep.subr.mxu0 0.0
    %619 = vmatpush1.msra.mxu0 0.0
    %620 = vmatprep.subr.mxu0 0.0
    %621 = vmatpush1.msra.mxu0 0.0
    %622 = vmatprep.subr.mxu0 0.0
    %623 = vmatpush1.msra.mxu0 0.0
    %624 = vmatprep.subr.mxu0 0.0
    %625 = vmatpush1.msra.mxu0 0.0
    %626 = vmatprep.subr.mxu0 0.0
    %627 = vmatpush1.msra.mxu0 0.0
    %628 = vmatprep.subr.mxu0 0.0
    %629 = vmatpush1.msra.mxu0 0.0
    %630 = vmatprep.subr.mxu0 0.0
    %631 = vmatpush1.msra.mxu0 0.0
    %632 = vmatprep.subr.mxu0 0.0
    %633 = vmatpush1.msra.mxu0 0.0
    %634 = vmatprep.subr.mxu0 0.0
    %635 = vmatpush1.msra.mxu0 0.0
    %636 = vmatprep.subr.mxu0 0.0
    %637 = vmatpush1.msra.mxu0 0.0
    %638 = vmatprep.subr.mxu0 0.0
    %639 = vmatpush1.msra.mxu0 0.0
    %640 = vmatprep.subr.mxu0 0.0
    %641 = vmatpush1.msra.mxu0 0.0
    %642 = vmatprep.subr.mxu0 0.0
    %643 = vmatpush1.msra.mxu0 0.0
    %644 = vmatprep.subr.mxu0 0.0
    %645 = vmatpush1.msra.mxu0 0.0
    %646 = vmatprep.subr.mxu0 0.0
    %647 = vmatpush1.msra.mxu0 0.0
    %648 = vmatprep.subr.mxu0 0.0
    %649 = vmatpush1.msra.mxu0 0.0
    %650 = vmatprep.subr.mxu0 0.0
    %651 = vmatpush1.msra.mxu0 0.0
    %652 = vmatprep.subr.mxu0 0.0
    %653 = vmatpush1.msra.mxu0 0.0
    %654 = vmatprep.subr.mxu0 0.0
    %655 = vmatpush1.msra.mxu0 0.0
    %656 = vmatprep.subr.mxu0 0.0
    %657 = vmatpush1.msra.mxu0 0.0
    %658 = vmatprep.subr.mxu0 0.0
    %659 = vmatpush1.msra.mxu0 0.0
    %660 = vmatprep.subr.mxu0 0.0
    %661 = vmatpush1.msra.mxu0 0.0
    %662 = vmatprep.subr.mxu0 0.0
    %663 = vmatpush1.msra.mxu0 0.0
    %664 = vmatprep.subr.mxu0 0.0
    %665 = vmatpush1.msra.mxu0 0.0
    %666 = vmatprep.subr.mxu0 0.0
    %667 = vmatpush1.msra.mxu0 0.0
    %668 = vmatprep.subr.mxu0 0.0
    %669 = vmatpush1.msra.mxu0 0.0
    %670 = vmatprep.subr.mxu0 0.0
    %671 = vmatpush1.msra.mxu0 0.0
    %672 = vmatprep.subr.mxu0 0.0
    %673 = vmatpush1.msra.mxu0 0.0
    %674 = vmatprep.mubr.f32.mxu0 0.0
    %675 = vmatmul.mubr.f32.gmra.mrb[0].mxu0 %v608
    %v676 = vpop.f32.mrb[0].mxu0
    %v677 = vadd.f32 %v38, %v676
    %v678 = vpop.f32.mrb[0].mxu0
    %v679 = vadd.f32 %v42, %v678
    %680 = vdwg.mxu0
    %681 = vst [vmem:[#allocation2 + $0x38] sm:$0xff] %v677
    %vm682 = vcmp.eq.s32.totalorder %v23, 8
    %v683 = vsel %vm682, %v679, %v603
    %v684 = vld [vmem:[%s0 + $0x8] sm:$0xff]
    %v686 = vsel %vm46, %v684, 0
    %688 = vmatprep.subr.mxu0 %v25
    %689 = vmatpush1.msra.mxu0 %v24
    %690 = vmatprep.subr.mxu0 %v27
    %691 = vmatpush1.msra.mxu0 %v26
    %692 = vmatprep.subr.mxu0 0.0
    %693 = vmatpush1.msra.mxu0 0.0
    %694 = vmatprep.subr.mxu0 0.0
    %695 = vmatpush1.msra.mxu0 0.0
    %696 = vmatprep.subr.mxu0 0.0
    %697 = vmatpush1.msra.mxu0 0.0
    %698 = vmatprep.subr.mxu0 0.0
    %699 = vmatpush1.msra.mxu0 0.0
    %700 = vmatprep.subr.mxu0 0.0
    %701 = vmatpush1.msra.mxu0 0.0
    %702 = vmatprep.subr.mxu0 0.0
    %703 = vmatpush1.msra.mxu0 0.0
    %704 = vmatprep.subr.mxu0 0.0
    %705 = vmatpush1.msra.mxu0 0.0
    %706 = vmatprep.subr.mxu0 0.0
    %707 = vmatpush1.msra.mxu0 0.0
    %708 = vmatprep.subr.mxu0 0.0
    %709 = vmatpush1.msra.mxu0 0.0
    %710 = vmatprep.subr.mxu0 0.0
    %711 = vmatpush1.msra.mxu0 0.0
    %712 = vmatprep.subr.mxu0 0.0
    %713 = vmatpush1.msra.mxu0 0.0
    %714 = vmatprep.subr.mxu0 0.0
    %715 = vmatpush1.msra.mxu0 0.0
    %716 = vmatprep.subr.mxu0 0.0
    %717 = vmatpush1.msra.mxu0 0.0
    %718 = vmatprep.subr.mxu0 0.0
    %719 = vmatpush1.msra.mxu0 0.0
    %720 = vmatprep.subr.mxu0 0.0
    %721 = vmatpush1.msra.mxu0 0.0
    %722 = vmatprep.subr.mxu0 0.0
    %723 = vmatpush1.msra.mxu0 0.0
    %724 = vmatprep.subr.mxu0 0.0
    %725 = vmatpush1.msra.mxu0 0.0
    %726 = vmatprep.subr.mxu0 0.0
    %727 = vmatpush1.msra.mxu0 0.0
    %728 = vmatprep.subr.mxu0 0.0
    %729 = vmatpush1.msra.mxu0 0.0
    %730 = vmatprep.subr.mxu0 0.0
    %731 = vmatpush1.msra.mxu0 0.0
    %732 = vmatprep.subr.mxu0 0.0
    %733 = vmatpush1.msra.mxu0 0.0
    %734 = vmatprep.subr.mxu0 0.0
    %735 = vmatpush1.msra.mxu0 0.0
    %736 = vmatprep.subr.mxu0 0.0
    %737 = vmatpush1.msra.mxu0 0.0
    %738 = vmatprep.subr.mxu0 0.0
    %739 = vmatpush1.msra.mxu0 0.0
    %740 = vmatprep.subr.mxu0 0.0
    %741 = vmatpush1.msra.mxu0 0.0
    %742 = vmatprep.subr.mxu0 0.0
    %743 = vmatpush1.msra.mxu0 0.0
    %744 = vmatprep.subr.mxu0 0.0
    %745 = vmatpush1.msra.mxu0 0.0
    %746 = vmatprep.subr.mxu0 0.0
    %747 = vmatpush1.msra.mxu0 0.0
    %748 = vmatprep.subr.mxu0 0.0
    %749 = vmatpush1.msra.mxu0 0.0
    %750 = vmatprep.subr.mxu0 0.0
    %751 = vmatpush1.msra.mxu0 0.0
    %752 = vmatprep.mubr.f32.mxu0 0.0
    %753 = vmatmul.mubr.f32.gmra.mrb[0].mxu0 %v686
    %v754 = vpop.f32.mrb[0].mxu0
    %v755 = vadd.f32 %v38, %v754
    %v756 = vpop.f32.mrb[0].mxu0
    %v757 = vadd.f32 %v42, %v756
    %758 = vdwg.mxu0
    %759 = vst [vmem:[#allocation2 + $0x40] sm:$0xff] %v755
    %vm760 = vcmp.eq.s32.totalorder %v23, 9
    %v761 = vsel %vm760, %v757, %v683
    %v762 = vld [vmem:[%s0 + $0x8] sm:$0xff]
    %764 = vrot.lane.b32.xlu0 %v762, 112
    %v765 = vpop.permute.xlu0 %764
    %v766 = vsel %vm46, %v765, 0
    %768 = vmatprep.subr.mxu0 %v25
    %769 = vmatpush1.msra.mxu0 %v24
    %770 = vmatprep.subr.mxu0 %v27
    %771 = vmatpush1.msra.mxu0 %v26
    %772 = vmatprep.subr.mxu0 0.0
    %773 = vmatpush1.msra.mxu0 0.0
    %774 = vmatprep.subr.mxu0 0.0
    %775 = vmatpush1.msra.mxu0 0.0
    %776 = vmatprep.subr.mxu0 0.0
    %777 = vmatpush1.msra.mxu0 0.0
    %778 = vmatprep.subr.mxu0 0.0
    %779 = vmatpush1.msra.mxu0 0.0
    %780 = vmatprep.subr.mxu0 0.0
    %781 = vmatpush1.msra.mxu0 0.0
    %782 = vmatprep.subr.mxu0 0.0
    %783 = vmatpush1.msra.mxu0 0.0
    %784 = vmatprep.subr.mxu0 0.0
    %785 = vmatpush1.msra.mxu0 0.0
    %786 = vmatprep.subr.mxu0 0.0
    %787 = vmatpush1.msra.mxu0 0.0
    %788 = vmatprep.subr.mxu0 0.0
    %789 = vmatpush1.msra.mxu0 0.0
    %790 = vmatprep.subr.mxu0 0.0
    %791 = vmatpush1.msra.mxu0 0.0
    %792 = vmatprep.subr.mxu0 0.0
    %793 = vmatpush1.msra.mxu0 0.0
    %794 = vmatprep.subr.mxu0 0.0
    %795 = vmatpush1.msra.mxu0 0.0
    %796 = vmatprep.subr.mxu0 0.0
    %797 = vmatpush1.msra.mxu0 0.0
    %798 = vmatprep.subr.mxu0 0.0
    %799 = vmatpush1.msra.mxu0 0.0
    %800 = vmatprep.subr.mxu0 0.0
    %801 = vmatpush1.msra.mxu0 0.0
    %802 = vmatprep.subr.mxu0 0.0
    %803 = vmatpush1.msra.mxu0 0.0
    %804 = vmatprep.subr.mxu0 0.0
    %805 = vmatpush1.msra.mxu0 0.0
    %806 = vmatprep.subr.mxu0 0.0
    %807 = vmatpush1.msra.mxu0 0.0
    %808 = vmatprep.subr.mxu0 0.0
    %809 = vmatpush1.msra.mxu0 0.0
    %810 = vmatprep.subr.mxu0 0.0
    %811 = vmatpush1.msra.mxu0 0.0
    %812 = vmatprep.subr.mxu0 0.0
    %813 = vmatpush1.msra.mxu0 0.0
    %814 = vmatprep.subr.mxu0 0.0
    %815 = vmatpush1.msra.mxu0 0.0
    %816 = vmatprep.subr.mxu0 0.0
    %817 = vmatpush1.msra.mxu0 0.0
    %818 = vmatprep.subr.mxu0 0.0
    %819 = vmatpush1.msra.mxu0 0.0
    %820 = vmatprep.subr.mxu0 0.0
    %821 = vmatpush1.msra.mxu0 0.0
    %822 = vmatprep.subr.mxu0 0.0
    %823 = vmatpush1.msra.mxu0 0.0
    %824 = vmatprep.subr.mxu0 0.0
    %825 = vmatpush1.msra.mxu0 0.0
    %826 = vmatprep.subr.mxu0 0.0
    %827 = vmatpush1.msra.mxu0 0.0
    %828 = vmatprep.subr.mxu0 0.0
    %829 = vmatpush1.msra.mxu0 0.0
    %830 = vmatprep.subr.mxu0 0.0
    %831 = vmatpush1.msra.mxu0 0.0
    %832 = vmatprep.mubr.f32.mxu0 0.0
    %833 = vmatmul.mubr.f32.gmra.mrb[0].mxu0 %v766
    %v834 = vpop.f32.mrb[0].mxu0
    %v835 = vadd.f32 %v38, %v834
    %v836 = vpop.f32.mrb[0].mxu0
    %v837 = vadd.f32 %v42, %v836
    %838 = vdwg.mxu0
    %839 = vst [vmem:[#allocation2 + $0x48] sm:$0xff] %v835
    %vm840 = vcmp.eq.s32.totalorder %v23, 10
    %v841 = vsel %vm840, %v837, %v761
    %v842 = vld [vmem:[%s0 + $0x8] sm:$0xff]
    %844 = vrot.lane.b32.xlu0 %v842, 96
    %v845 = vpop.permute.xlu0 %844
    %v846 = vsel %vm46, %v845, 0
    %848 = vmatprep.subr.mxu0 %v25
    %849 = vmatpush1.msra.mxu0 %v24
    %850 = vmatprep.subr.mxu0 %v27
    %851 = vmatpush1.msra.mxu0 %v26
    %852 = vmatprep.subr.mxu0 0.0
    %853 = vmatpush1.msra.mxu0 0.0
    %854 = vmatprep.subr.mxu0 0.0
    %855 = vmatpush1.msra.mxu0 0.0
    %856 = vmatprep.subr.mxu0 0.0
    %857 = vmatpush1.msra.mxu0 0.0
    %858 = vmatprep.subr.mxu0 0.0
    %859 = vmatpush1.msra.mxu0 0.0
    %860 = vmatprep.subr.mxu0 0.0
    %861 = vmatpush1.msra.mxu0 0.0
    %862 = vmatprep.subr.mxu0 0.0
    %863 = vmatpush1.msra.mxu0 0.0
    %864 = vmatprep.subr.mxu0 0.0
    %865 = vmatpush1.msra.mxu0 0.0
    %866 = vmatprep.subr.mxu0 0.0
    %867 = vmatpush1.msra.mxu0 0.0
    %868 = vmatprep.subr.mxu0 0.0
    %869 = vmatpush1.msra.mxu0 0.0
    %870 = vmatprep.subr.mxu0 0.0
    %871 = vmatpush1.msra.mxu0 0.0
    %872 = vmatprep.subr.mxu0 0.0
    %873 = vmatpush1.msra.mxu0 0.0
    %874 = vmatprep.subr.mxu0 0.0
    %875 = vmatpush1.msra.mxu0 0.0
    %876 = vmatprep.subr.mxu0 0.0
    %877 = vmatpush1.msra.mxu0 0.0
    %878 = vmatprep.subr.mxu0 0.0
    %879 = vmatpush1.msra.mxu0 0.0
    %880 = vmatprep.subr.mxu0 0.0
    %881 = vmatpush1.msra.mxu0 0.0
    %882 = vmatprep.subr.mxu0 0.0
    %883 = vmatpush1.msra.mxu0 0.0
    %884 = vmatprep.subr.mxu0 0.0
    %885 = vmatpush1.msra.mxu0 0.0
    %886 = vmatprep.subr.mxu0 0.0
    %887 = vmatpush1.msra.mxu0 0.0
    %888 = vmatprep.subr.mxu0 0.0
    %889 = vmatpush1.msra.mxu0 0.0
    %890 = vmatprep.subr.mxu0 0.0
    %891 = vmatpush1.msra.mxu0 0.0
    %892 = vmatprep.subr.mxu0 0.0
    %893 = vmatpush1.msra.mxu0 0.0
    %894 = vmatprep.subr.mxu0 0.0
    %895 = vmatpush1.msra.mxu0 0.0
    %896 = vmatprep.subr.mxu0 0.0
    %897 = vmatpush1.msra.mxu0 0.0
    %898 = vmatprep.subr.mxu0 0.0
    %899 = vmatpush1.msra.mxu0 0.0
    %900 = vmatprep.subr.mxu0 0.0
    %901 = vmatpush1.msra.mxu0 0.0
    %902 = vmatprep.subr.mxu0 0.0
    %903 = vmatpush1.msra.mxu0 0.0
    %904 = vmatprep.subr.mxu0 0.0
    %905 = vmatpush1.msra.mxu0 0.0
    %906 = vmatprep.subr.mxu0 0.0
    %907 = vmatpush1.msra.mxu0 0.0
    %908 = vmatprep.subr.mxu0 0.0
    %909 = vmatpush1.msra.mxu0 0.0
    %910 = vmatprep.subr.mxu0 0.0
    %911 = vmatpush1.msra.mxu0 0.0
    %912 = vmatprep.mubr.f32.mxu0 0.0
    %913 = vmatmul.mubr.f32.gmra.mrb[0].mxu0 %v846
    %v914 = vpop.f32.mrb[0].mxu0
    %v915 = vadd.f32 %v38, %v914
    %v916 = vpop.f32.mrb[0].mxu0
    %v917 = vadd.f32 %v42, %v916
    %918 = vdwg.mxu0
    %919 = vst [vmem:[#allocation2 + $0x50] sm:$0xff] %v915
    %vm920 = vcmp.eq.s32.totalorder %v23, 11
    %v921 = vsel %vm920, %v917, %v841
    %v922 = vld [vmem:[%s0 + $0x8] sm:$0xff]
    %924 = vrot.lane.b32.xlu0 %v922, 80
    %v925 = vpop.permute.xlu0 %924
    %v926 = vsel %vm46, %v925, 0
    %928 = vmatprep.subr.mxu0 %v25
    %929 = vmatpush1.msra.mxu0 %v24
    %930 = vmatprep.subr.mxu0 %v27
    %931 = vmatpush1.msra.mxu0 %v26
    %932 = vmatprep.subr.mxu0 0.0
    %933 = vmatpush1.msra.mxu0 0.0
    %934 = vmatprep.subr.mxu0 0.0
    %935 = vmatpush1.msra.mxu0 0.0
    %936 = vmatprep.subr.mxu0 0.0
    %937 = vmatpush1.msra.mxu0 0.0
    %938 = vmatprep.subr.mxu0 0.0
    %939 = vmatpush1.msra.mxu0 0.0
    %940 = vmatprep.subr.mxu0 0.0
    %941 = vmatpush1.msra.mxu0 0.0
    %942 = vmatprep.subr.mxu0 0.0
    %943 = vmatpush1.msra.mxu0 0.0
    %944 = vmatprep.subr.mxu0 0.0
    %945 = vmatpush1.msra.mxu0 0.0
    %946 = vmatprep.subr.mxu0 0.0
    %947 = vmatpush1.msra.mxu0 0.0
    %948 = vmatprep.subr.mxu0 0.0
    %949 = vmatpush1.msra.mxu0 0.0
    %950 = vmatprep.subr.mxu0 0.0
    %951 = vmatpush1.msra.mxu0 0.0
    %952 = vmatprep.subr.mxu0 0.0
    %953 = vmatpush1.msra.mxu0 0.0
    %954 = vmatprep.subr.mxu0 0.0
    %955 = vmatpush1.msra.mxu0 0.0
    %956 = vmatprep.subr.mxu0 0.0
    %957 = vmatpush1.msra.mxu0 0.0
    %958 = vmatprep.subr.mxu0 0.0
    %959 = vmatpush1.msra.mxu0 0.0
    %960 = vmatprep.subr.mxu0 0.0
    %961 = vmatpush1.msra.mxu0 0.0
    %962 = vmatprep.subr.mxu0 0.0
    %963 = vmatpush1.msra.mxu0 0.0
    %964 = vmatprep.subr.mxu0 0.0
    %965 = vmatpush1.msra.mxu0 0.0
    %966 = vmatprep.subr.mxu0 0.0
    %967 = vmatpush1.msra.mxu0 0.0
    %968 = vmatprep.subr.mxu0 0.0
    %969 = vmatpush1.msra.mxu0 0.0
    %970 = vmatprep.subr.mxu0 0.0
    %971 = vmatpush1.msra.mxu0 0.0
    %972 = vmatprep.subr.mxu0 0.0
    %973 = vmatpush1.msra.mxu0 0.0
    %974 = vmatprep.subr.mxu0 0.0
    %975 = vmatpush1.msra.mxu0 0.0
    %976 = vmatprep.subr.mxu0 0.0
    %977 = vmatpush1.msra.mxu0 0.0
    %978 = vmatprep.subr.mxu0 0.0
    %979 = vmatpush1.msra.mxu0 0.0
    %980 = vmatprep.subr.mxu0 0.0
    %981 = vmatpush1.msra.mxu0 0.0
    %982 = vmatprep.subr.mxu0 0.0
    %983 = vmatpush1.msra.mxu0 0.0
    %984 = vmatprep.subr.mxu0 0.0
    %985 = vmatpush1.msra.mxu0 0.0
    %986 = vmatprep.subr.mxu0 0.0
    %987 = vmatpush1.msra.mxu0 0.0
    %988 = vmatprep.subr.mxu0 0.0
    %989 = vmatpush1.msra.mxu0 0.0
    %990 = vmatprep.subr.mxu0 0.0
    %991 = vmatpush1.msra.mxu0 0.0
    %992 = vmatprep.mubr.f32.mxu0 0.0
    %993 = vmatmul.mubr.f32.gmra.mrb[0].mxu0 %v926
    %v994 = vpop.f32.mrb[0].mxu0
    %v995 = vadd.f32 %v38, %v994
    %v996 = vpop.f32.mrb[0].mxu0
    %v997 = vadd.f32 %v42, %v996
    %998 = vdwg.mxu0
    %999 = vst [vmem:[#allocation2 + $0x58] sm:$0xff] %v995
    %vm1000 = vcmp.eq.s32.totalorder %v23, 12
    %v1001 = vsel %vm1000, %v997, %v921
    %v1002 = vtanh.pop %v1001
    %v1003 = vmul.f32 %v1002, %v18
    %v1004 = vadd.f32 %v1003, %v19
    %1006 = vrot.lane.b32.xlu0 %v1004, 64
    %v1007 = vpop.permute.xlu0 %1006
    %v1009 = vmul.f32 %v1004, %v1007
    %v1010 = vtanh.pop %v1009
    %1012 = vrot.lane.b32.xlu0 %v1010, 32
    %v1013 = vpop.permute.xlu0 %1012
    %v1015 = vmul.f32 %v1004, %v1013
    %v1016 = vld [vmem:[#allocation2] sm:$0xff]
    %vm1017 = vcmask 261120
    %v1019 = vsel %vm1017, 0.0, 0
    %1021 = vmatprep.subr.mxu0 0.0
    %1022 = vmatpush1.msra.mxu0 %v28
    %1023 = vmatprep.subr.mxu0 0.0
    %1024 = vmatpush1.msra.mxu0 %v29
    %1025 = vmatprep.subr.mxu0 0.0
    %1026 = vmatpush1.msra.mxu0 %v30
    %1027 = vmatprep.subr.mxu0 0.0
    %1028 = vmatpush1.msra.mxu0 %v31
    %1029 = vmatprep.subr.mxu0 0.0
    %1030 = vmatpush1.msra.mxu0 0.0
    %1031 = vmatprep.subr.mxu0 0.0
    %1032 = vmatpush1.msra.mxu0 0.0
    %1033 = vmatprep.subr.mxu0 0.0
    %1034 = vmatpush1.msra.mxu0 0.0
    %1035 = vmatprep.subr.mxu0 0.0
    %1036 = vmatpush1.msra.mxu0 0.0
    %1037 = vmatprep.subr.mxu0 0.0
    %1038 = vmatpush1.msra.mxu0 0.0
    %1039 = vmatprep.subr.mxu0 0.0
    %1040 = vmatpush1.msra.mxu0 0.0
    %1041 = vmatprep.subr.mxu0 0.0
    %1042 = vmatpush1.msra.mxu0 0.0
    %1043 = vmatprep.subr.mxu0 0.0
    %1044 = vmatpush1.msra.mxu0 0.0
    %1045 = vmatprep.subr.mxu0 0.0
    %1046 = vmatpush1.msra.mxu0 0.0
    %1047 = vmatprep.subr.mxu0 0.0
    %1048 = vmatpush1.msra.mxu0 0.0
    %1049 = vmatprep.subr.mxu0 0.0
    %1050 = vmatpush1.msra.mxu0 0.0
    %1051 = vmatprep.subr.mxu0 0.0
    %1052 = vmatpush1.msra.mxu0 0.0
    %1053 = vmatprep.subr.mxu0 0.0
    %1054 = vmatpush1.msra.mxu0 0.0
    %1055 = vmatprep.subr.mxu0 0.0
    %1056 = vmatpush1.msra.mxu0 0.0
    %1057 = vmatprep.subr.mxu0 0.0
    %1058 = vmatpush1.msra.mxu0 0.0
    %1059 = vmatprep.subr.mxu0 0.0
    %1060 = vmatpush1.msra.mxu0 0.0
    %1061 = vmatprep.subr.mxu0 0.0
    %1062 = vmatpush1.msra.mxu0 0.0
    %1063 = vmatprep.subr.mxu0 0.0
    %1064 = vmatpush1.msra.mxu0 0.0
    %1065 = vmatprep.subr.mxu0 0.0
    %1066 = vmatpush1.msra.mxu0 0.0
    %1067 = vmatprep.subr.mxu0 0.0
    %1068 = vmatpush1.msra.mxu0 0.0
    %1069 = vmatprep.subr.mxu0 0.0
    %1070 = vmatpush1.msra.mxu0 0.0
    %1071 = vmatprep.subr.mxu0 0.0
    %1072 = vmatpush1.msra.mxu0 0.0
    %1073 = vmatprep.subr.mxu0 0.0
    %1074 = vmatpush1.msra.mxu0 0.0
    %1075 = vmatprep.subr.mxu0 0.0
    %1076 = vmatpush1.msra.mxu0 0.0
    %1077 = vmatprep.subr.mxu0 0.0
    %1078 = vmatpush1.msra.mxu0 0.0
    %1079 = vmatprep.subr.mxu0 0.0
    %1080 = vmatpush1.msra.mxu0 0.0
    %1081 = vmatprep.subr.mxu0 0.0
    %1082 = vmatpush1.msra.mxu0 0.0
    %1083 = vmatprep.subr.mxu0 0.0
    %1084 = vmatpush1.msra.mxu0 0.0
    %1085 = vmatprep.mubr.f32.mxu0 0.0
    %1086 = vmatmul.mubr.f32.gmra.mrb[0].mxu0 %v1019
    %v1087 = vpop.f32.mrb[0].mxu0
    %v1088 = vadd.f32 0.0, %v1087
    %v1089 = vpop.f32.mrb[0].mxu0
    %1090 = vdwg.mxu0
    %v1091 = vadd.f32 %v1016, %v1088
    %v1092 = vtanh.pop %v1091
    %v1093 = vmul.f32 %v1092, %v18
    %v1094 = vadd.f32 %v1093, %v19
    %1095 = vrot.lane.b32.xlu0 %v1094, 64
    %v1096 = vpop.permute.xlu0 %1095
    %v1097 = vmul.f32 %v1094, 0.0
    %v1098 = vmul.f32 %v1094, %v1096
    %1100 = vrot.lane.b32.xlu0 %v1098, 96
    %v1101 = vpop.permute.xlu0 %1100
    %v1103 = vadd.f32 %v1097, %v1101
    %v1104 = vtanh.pop %v1103
    %v1105 = vmul.f32 %v1096, %v1104
    %vm1106 = vcmp.gt.s32.totalorder %v23, 0
    %v1107 = vsel %vm1106, %v1105, 0.0
    %v1108 = vsel %vm1106, %v1103, 0.0
    %v1109 = vld [vmem:[#allocation2 + $0x8] sm:$0xff]
    %v1111 = vsel %vm1017, %v1107, 0
    %1113 = vmatprep.subr.mxu0 0.0
    %1114 = vmatpush1.msra.mxu0 %v28
    %1115 = vmatprep.subr.mxu0 0.0
    %1116 = vmatpush1.msra.mxu0 %v29
    %1117 = vmatprep.subr.mxu0 0.0
    %1118 = vmatpush1.msra.mxu0 %v30
    %1119 = vmatprep.subr.mxu0 0.0
    %1120 = vmatpush1.msra.mxu0 %v31
    %1121 = vmatprep.subr.mxu0 0.0
    %1122 = vmatpush1.msra.mxu0 0.0
    %1123 = vmatprep.subr.mxu0 0.0
    %1124 = vmatpush1.msra.mxu0 0.0
    %1125 = vmatprep.subr.mxu0 0.0
    %1126 = vmatpush1.msra.mxu0 0.0
    %1127 = vmatprep.subr.mxu0 0.0
    %1128 = vmatpush1.msra.mxu0 0.0
    %1129 = vmatprep.subr.mxu0 0.0
    %1130 = vmatpush1.msra.mxu0 0.0
    %1131 = vmatprep.subr.mxu0 0.0
    %1132 = vmatpush1.msra.mxu0 0.0
    %1133 = vmatprep.subr.mxu0 0.0
    %1134 = vmatpush1.msra.mxu0 0.0
    %1135 = vmatprep.subr.mxu0 0.0
    %1136 = vmatpush1.msra.mxu0 0.0
    %1137 = vmatprep.subr.mxu0 0.0
    %1138 = vmatpush1.msra.mxu0 0.0
    %1139 = vmatprep.subr.mxu0 0.0
    %1140 = vmatpush1.msra.mxu0 0.0
    %1141 = vmatprep.subr.mxu0 0.0
    %1142 = vmatpush1.msra.mxu0 0.0
    %1143 = vmatprep.subr.mxu0 0.0
    %1144 = vmatpush1.msra.mxu0 0.0
    %1145 = vmatprep.subr.mxu0 0.0
    %1146 = vmatpush1.msra.mxu0 0.0
    %1147 = vmatprep.subr.mxu0 0.0
    %1148 = vmatpush1.msra.mxu0 0.0
    %1149 = vmatprep.subr.mxu0 0.0
    %1150 = vmatpush1.msra.mxu0 0.0
    %1151 = vmatprep.subr.mxu0 0.0
    %1152 = vmatpush1.msra.mxu0 0.0
    %1153 = vmatprep.subr.mxu0 0.0
    %1154 = vmatpush1.msra.mxu0 0.0
    %1155 = vmatprep.subr.mxu0 0.0
    %1156 = vmatpush1.msra.mxu0 0.0
    %1157 = vmatprep.subr.mxu0 0.0
    %1158 = vmatpush1.msra.mxu0 0.0
    %1159 = vmatprep.subr.mxu0 0.0
    %1160 = vmatpush1.msra.mxu0 0.0
    %1161 = vmatprep.subr.mxu0 0.0
    %1162 = vmatpush1.msra.mxu0 0.0
    %1163 = vmatprep.subr.mxu0 0.0
    %1164 = vmatpush1.msra.mxu0 0.0
    %1165 = vmatprep.subr.mxu0 0.0
    %1166 = vmatpush1.msra.mxu0 0.0
    %1167 = vmatprep.subr.mxu0 0.0
    %1168 = vmatpush1.msra.mxu0 0.0
    %1169 = vmatprep.subr.mxu0 0.0
    %1170 = vmatpush1.msra.mxu0 0.0
    %1171 = vmatprep.subr.mxu0 0.0
    %1172 = vmatpush1.msra.mxu0 0.0
    %1173 = vmatprep.subr.mxu0 0.0
    %1174 = vmatpush1.msra.mxu0 0.0
    %1175 = vmatprep.subr.mxu0 0.0
    %1176 = vmatpush1.msra.mxu0 0.0
    %1177 = vmatprep.mubr.f32.mxu0 0.0
    %1178 = vmatmul.mubr.f32.gmra.mrb[0].mxu0 %v1111
    %v1179 = vpop.f32.mrb[0].mxu0
    %v1180 = vadd.f32 0.0, %v1179
    %v1181 = vpop.f32.mrb[0].mxu0
    %1182 = vdwg.mxu0
    %v1183 = vadd.f32 %v1109, %v1180
    %v1184 = vtanh.pop %v1183
    %v1185 = vmul.f32 %v1184, %v18
    %v1186 = vadd.f32 %v1185, %v19
    %1187 = vrot.lane.b32.xlu0 %v1186, 64
    %v1188 = vpop.permute.xlu0 %1187
    %v1189 = vmul.f32 %v1186, %v1108
    %v1190 = vmul.f32 %v1186, %v1188
    %1192 = vrot.lane.b32.xlu0 %v1190, 96
    %v1193 = vpop.permute.xlu0 %1192
    %v1195 = vadd.f32 %v1189, %v1193
    %v1196 = vtanh.pop %v1195
    %v1197 = vmul.f32 %v1188, %v1196
    %vm1198 = vcmp.gt.s32.totalorder %v23, 1
    %v1199 = vsel %vm1198, %v1197, %v1107
    %v1200 = vsel %vm1198, %v1195, %v1108
    %v1201 = vld [vmem:[#allocation2 + $0x10] sm:$0xff]
    %v1203 = vsel %vm1017, %v1199, 0
    %1205 = vmatprep.subr.mxu0 0.0
    %1206 = vmatpush1.msra.mxu0 %v28
    %1207 = vmatprep.subr.mxu0 0.0
    %1208 = vmatpush1.msra.mxu0 %v29
    %1209 = vmatprep.subr.mxu0 0.0
    %1210 = vmatpush1.msra.mxu0 %v30
    %1211 = vmatprep.subr.mxu0 0.0
    %1212 = vmatpush1.msra.mxu0 %v31
    %1213 = vmatprep.subr.mxu0 0.0
    %1214 = vmatpush1.msra.mxu0 0.0
    %1215 = vmatprep.subr.mxu0 0.0
    %1216 = vmatpush1.msra.mxu0 0.0
    %1217 = vmatprep.subr.mxu0 0.0
    %1218 = vmatpush1.msra.mxu0 0.0
    %1219 = vmatprep.subr.mxu0 0.0
    %1220 = vmatpush1.msra.mxu0 0.0
    %1221 = vmatprep.subr.mxu0 0.0
    %1222 = vmatpush1.msra.mxu0 0.0
    %1223 = vmatprep.subr.mxu0 0.0
    %1224 = vmatpush1.msra.mxu0 0.0
    %1225 = vmatprep.subr.mxu0 0.0
    %1226 = vmatpush1.msra.mxu0 0.0
    %1227 = vmatprep.subr.mxu0 0.0
    %1228 = vmatpush1.msra.mxu0 0.0
    %1229 = vmatprep.subr.mxu0 0.0
    %1230 = vmatpush1.msra.mxu0 0.0
    %1231 = vmatprep.subr.mxu0 0.0
    %1232 = vmatpush1.msra.mxu0 0.0
    %1233 = vmatprep.subr.mxu0 0.0
    %1234 = vmatpush1.msra.mxu0 0.0
    %1235 = vmatprep.subr.mxu0 0.0
    %1236 = vmatpush1.msra.mxu0 0.0
    %1237 = vmatprep.subr.mxu0 0.0
    %1238 = vmatpush1.msra.mxu0 0.0
    %1239 = vmatprep.subr.mxu0 0.0
    %1240 = vmatpush1.msra.mxu0 0.0
    %1241 = vmatprep.subr.mxu0 0.0
    %1242 = vmatpush1.msra.mxu0 0.0
    %1243 = vmatprep.subr.mxu0 0.0
    %1244 = vmatpush1.msra.mxu0 0.0
    %1245 = vmatprep.subr.mxu0 0.0
    %1246 = vmatpush1.msra.mxu0 0.0
    %1247 = vmatprep.subr.mxu0 0.0
    %1248 = vmatpush1.msra.mxu0 0.0
    %1249 = vmatprep.subr.mxu0 0.0
    %1250 = vmatpush1.msra.mxu0 0.0
    %1251 = vmatprep.subr.mxu0 0.0
    %1252 = vmatpush1.msra.mxu0 0.0
    %1253 = vmatprep.subr.mxu0 0.0
    %1254 = vmatpush1.msra.mxu0 0.0
    %1255 = vmatprep.subr.mxu0 0.0
    %1256 = vmatpush1.msra.mxu0 0.0
    %1257 = vmatprep.subr.mxu0 0.0
    %1258 = vmatpush1.msra.mxu0 0.0
    %1259 = vmatprep.subr.mxu0 0.0
    %1260 = vmatpush1.msra.mxu0 0.0
    %1261 = vmatprep.subr.mxu0 0.0
    %1262 = vmatpush1.msra.mxu0 0.0
    %1263 = vmatprep.subr.mxu0 0.0
    %1264 = vmatpush1.msra.mxu0 0.0
    %1265 = vmatprep.subr.mxu0 0.0
    %1266 = vmatpush1.msra.mxu0 0.0
    %1267 = vmatprep.subr.mxu0 0.0
    %1268 = vmatpush1.msra.mxu0 0.0
    %1269 = vmatprep.mubr.f32.mxu0 0.0
    %1270 = vmatmul.mubr.f32.gmra.mrb[0].mxu0 %v1203
    %v1271 = vpop.f32.mrb[0].mxu0
    %v1272 = vadd.f32 0.0, %v1271
    %v1273 = vpop.f32.mrb[0].mxu0
    %1274 = vdwg.mxu0
    %v1275 = vadd.f32 %v1201, %v1272
    %v1276 = vtanh.pop %v1275
    %v1277 = vmul.f32 %v1276, %v18
    %v1278 = vadd.f32 %v1277, %v19
    %1279 = vrot.lane.b32.xlu0 %v1278, 64
    %v1280 = vpop.permute.xlu0 %1279
    %v1281 = vmul.f32 %v1278, %v1200
    %v1282 = vmul.f32 %v1278, %v1280
    %1284 = vrot.lane.b32.xlu0 %v1282, 96
    %v1285 = vpop.permute.xlu0 %1284
    %v1287 = vadd.f32 %v1281, %v1285
    %v1288 = vtanh.pop %v1287
    %v1289 = vmul.f32 %v1280, %v1288
    %vm1290 = vcmp.gt.s32.totalorder %v23, 2
    %v1291 = vsel %vm1290, %v1289, %v1199
    %v1292 = vsel %vm1290, %v1287, %v1200
    %v1293 = vld [vmem:[#allocation2 + $0x18] sm:$0xff]
    %v1295 = vsel %vm1017, %v1291, 0
    %1297 = vmatprep.subr.mxu0 0.0
    %1298 = vmatpush1.msra.mxu0 %v28
    %1299 = vmatprep.subr.mxu0 0.0
    %1300 = vmatpush1.msra.mxu0 %v29
    %1301 = vmatprep.subr.mxu0 0.0
    %1302 = vmatpush1.msra.mxu0 %v30
    %1303 = vmatprep.subr.mxu0 0.0
    %1304 = vmatpush1.msra.mxu0 %v31
    %1305 = vmatprep.subr.mxu0 0.0
    %1306 = vmatpush1.msra.mxu0 0.0
    %1307 = vmatprep.subr.mxu0 0.0
    %1308 = vmatpush1.msra.mxu0 0.0
    %1309 = vmatprep.subr.mxu0 0.0
    %1310 = vmatpush1.msra.mxu0 0.0
    %1311 = vmatprep.subr.mxu0 0.0
    %1312 = vmatpush1.msra.mxu0 0.0
    %1313 = vmatprep.subr.mxu0 0.0
    %1314 = vmatpush1.msra.mxu0 0.0
    %1315 = vmatprep.subr.mxu0 0.0
    %1316 = vmatpush1.msra.mxu0 0.0
    %1317 = vmatprep.subr.mxu0 0.0
    %1318 = vmatpush1.msra.mxu0 0.0
    %1319 = vmatprep.subr.mxu0 0.0
    %1320 = vmatpush1.msra.mxu0 0.0
    %1321 = vmatprep.subr.mxu0 0.0
    %1322 = vmatpush1.msra.mxu0 0.0
    %1323 = vmatprep.subr.mxu0 0.0
    %1324 = vmatpush1.msra.mxu0 0.0
    %1325 = vmatprep.subr.mxu0 0.0
    %1326 = vmatpush1.msra.mxu0 0.0
    %1327 = vmatprep.subr.mxu0 0.0
    %1328 = vmatpush1.msra.mxu0 0.0
    %1329 = vmatprep.subr.mxu0 0.0
    %1330 = vmatpush1.msra.mxu0 0.0
    %1331 = vmatprep.subr.mxu0 0.0
    %1332 = vmatpush1.msra.mxu0 0.0
    %1333 = vmatprep.subr.mxu0 0.0
    %1334 = vmatpush1.msra.mxu0 0.0
    %1335 = vmatprep.subr.mxu0 0.0
    %1336 = vmatpush1.msra.mxu0 0.0
    %1337 = vmatprep.subr.mxu0 0.0
    %1338 = vmatpush1.msra.mxu0 0.0
    %1339 = vmatprep.subr.mxu0 0.0
    %1340 = vmatpush1.msra.mxu0 0.0
    %1341 = vmatprep.subr.mxu0 0.0
    %1342 = vmatpush1.msra.mxu0 0.0
    %1343 = vmatprep.subr.mxu0 0.0
    %1344 = vmatpush1.msra.mxu0 0.0
    %1345 = vmatprep.subr.mxu0 0.0
    %1346 = vmatpush1.msra.mxu0 0.0
    %1347 = vmatprep.subr.mxu0 0.0
    %1348 = vmatpush1.msra.mxu0 0.0
    %1349 = vmatprep.subr.mxu0 0.0
    %1350 = vmatpush1.msra.mxu0 0.0
    %1351 = vmatprep.subr.mxu0 0.0
    %1352 = vmatpush1.msra.mxu0 0.0
    %1353 = vmatprep.subr.mxu0 0.0
    %1354 = vmatpush1.msra.mxu0 0.0
    %1355 = vmatprep.subr.mxu0 0.0
    %1356 = vmatpush1.msra.mxu0 0.0
    %1357 = vmatprep.subr.mxu0 0.0
    %1358 = vmatpush1.msra.mxu0 0.0
    %1359 = vmatprep.subr.mxu0 0.0
    %1360 = vmatpush1.msra.mxu0 0.0
    %1361 = vmatprep.mubr.f32.mxu0 0.0
    %1362 = vmatmul.mubr.f32.gmra.mrb[0].mxu0 %v1295
    %v1363 = vpop.f32.mrb[0].mxu0
    %v1364 = vadd.f32 0.0, %v1363
    %v1365 = vpop.f32.mrb[0].mxu0
    %1366 = vdwg.mxu0
    %v1367 = vadd.f32 %v1293, %v1364
    %v1368 = vtanh.pop %v1367
    %v1369 = vmul.f32 %v1368, %v18
    %v1370 = vadd.f32 %v1369, %v19
    %1371 = vrot.lane.b32.xlu0 %v1370, 64
    %v1372 = vpop.permute.xlu0 %1371
    %v1373 = vmul.f32 %v1370, %v1292
    %v1374 = vmul.f32 %v1370, %v1372
    %1376 = vrot.lane.b32.xlu0 %v1374, 96
    %v1377 = vpop.permute.xlu0 %1376
    %v1379 = vadd.f32 %v1373, %v1377
    %v1380 = vtanh.pop %v1379
    %v1381 = vmul.f32 %v1372, %v1380
    %vm1382 = vcmp.gt.s32.totalorder %v23, 3
    %v1383 = vsel %vm1382, %v1381, %v1291
    %v1384 = vsel %vm1382, %v1379, %v1292
    %v1385 = vld [vmem:[#allocation2 + $0x20] sm:$0xff]
    %v1387 = vsel %vm1017, %v1383, 0
    %1389 = vmatprep.subr.mxu0 0.0
    %1390 = vmatpush1.msra.mxu0 %v28
    %1391 = vmatprep.subr.mxu0 0.0
    %1392 = vmatpush1.msra.mxu0 %v29
    %1393 = vmatprep.subr.mxu0 0.0
    %1394 = vmatpush1.msra.mxu0 %v30
    %1395 = vmatprep.subr.mxu0 0.0
    %1396 = vmatpush1.msra.mxu0 %v31
    %1397 = vmatprep.subr.mxu0 0.0
    %1398 = vmatpush1.msra.mxu0 0.0
    %1399 = vmatprep.subr.mxu0 0.0
    %1400 = vmatpush1.msra.mxu0 0.0
    %1401 = vmatprep.subr.mxu0 0.0
    %1402 = vmatpush1.msra.mxu0 0.0
    %1403 = vmatprep.subr.mxu0 0.0
    %1404 = vmatpush1.msra.mxu0 0.0
    %1405 = vmatprep.subr.mxu0 0.0
    %1406 = vmatpush1.msra.mxu0 0.0
    %1407 = vmatprep.subr.mxu0 0.0
    %1408 = vmatpush1.msra.mxu0 0.0
    %1409 = vmatprep.subr.mxu0 0.0
    %1410 = vmatpush1.msra.mxu0 0.0
    %1411 = vmatprep.subr.mxu0 0.0
    %1412 = vmatpush1.msra.mxu0 0.0
    %1413 = vmatprep.subr.mxu0 0.0
    %1414 = vmatpush1.msra.mxu0 0.0
    %1415 = vmatprep.subr.mxu0 0.0
    %1416 = vmatpush1.msra.mxu0 0.0
    %1417 = vmatprep.subr.mxu0 0.0
    %1418 = vmatpush1.msra.mxu0 0.0
    %1419 = vmatprep.subr.mxu0 0.0
    %1420 = vmatpush1.msra.mxu0 0.0
    %1421 = vmatprep.subr.mxu0 0.0
    %1422 = vmatpush1.msra.mxu0 0.0
    %1423 = vmatprep.subr.mxu0 0.0
    %1424 = vmatpush1.msra.mxu0 0.0
    %1425 = vmatprep.subr.mxu0 0.0
    %1426 = vmatpush1.msra.mxu0 0.0
    %1427 = vmatprep.subr.mxu0 0.0
    %1428 = vmatpush1.msra.mxu0 0.0
    %1429 = vmatprep.subr.mxu0 0.0
    %1430 = vmatpush1.msra.mxu0 0.0
    %1431 = vmatprep.subr.mxu0 0.0
    %1432 = vmatpush1.msra.mxu0 0.0
    %1433 = vmatprep.subr.mxu0 0.0
    %1434 = vmatpush1.msra.mxu0 0.0
    %1435 = vmatprep.subr.mxu0 0.0
    %1436 = vmatpush1.msra.mxu0 0.0
    %1437 = vmatprep.subr.mxu0 0.0
    %1438 = vmatpush1.msra.mxu0 0.0
    %1439 = vmatprep.subr.mxu0 0.0
    %1440 = vmatpush1.msra.mxu0 0.0
    %1441 = vmatprep.subr.mxu0 0.0
    %1442 = vmatpush1.msra.mxu0 0.0
    %1443 = vmatprep.subr.mxu0 0.0
    %1444 = vmatpush1.msra.mxu0 0.0
    %1445 = vmatprep.subr.mxu0 0.0
    %1446 = vmatpush1.msra.mxu0 0.0
    %1447 = vmatprep.subr.mxu0 0.0
    %1448 = vmatpush1.msra.mxu0 0.0
    %1449 = vmatprep.subr.mxu0 0.0
    %1450 = vmatpush1.msra.mxu0 0.0
    %1451 = vmatprep.subr.mxu0 0.0
    %1452 = vmatpush1.msra.mxu0 0.0
    %1453 = vmatprep.mubr.f32.mxu0 0.0
    %1454 = vmatmul.mubr.f32.gmra.mrb[0].mxu0 %v1387
    %v1455 = vpop.f32.mrb[0].mxu0
    %v1456 = vadd.f32 0.0, %v1455
    %v1457 = vpop.f32.mrb[0].mxu0
    %1458 = vdwg.mxu0
    %v1459 = vadd.f32 %v1385, %v1456
    %v1460 = vtanh.pop %v1459
    %v1461 = vmul.f32 %v1460, %v18
    %v1462 = vadd.f32 %v1461, %v19
    %1463 = vrot.lane.b32.xlu0 %v1462, 64
    %v1464 = vpop.permute.xlu0 %1463
    %v1465 = vmul.f32 %v1462, %v1384
    %v1466 = vmul.f32 %v1462, %v1464
    %1468 = vrot.lane.b32.xlu0 %v1466, 96
    %v1469 = vpop.permute.xlu0 %1468
    %v1471 = vadd.f32 %v1465, %v1469
    %v1472 = vtanh.pop %v1471
    %v1473 = vmul.f32 %v1464, %v1472
    %vm1474 = vcmp.gt.s32.totalorder %v23, 4
    %v1475 = vsel %vm1474, %v1473, %v1383
    %v1476 = vsel %vm1474, %v1471, %v1384
    %v1477 = vld [vmem:[#allocation2 + $0x28] sm:$0xff]
    %v1479 = vsel %vm1017, %v1475, 0
    %1481 = vmatprep.subr.mxu0 0.0
    %1482 = vmatpush1.msra.mxu0 %v28
    %1483 = vmatprep.subr.mxu0 0.0
    %1484 = vmatpush1.msra.mxu0 %v29
    %1485 = vmatprep.subr.mxu0 0.0
    %1486 = vmatpush1.msra.mxu0 %v30
    %1487 = vmatprep.subr.mxu0 0.0
    %1488 = vmatpush1.msra.mxu0 %v31
    %1489 = vmatprep.subr.mxu0 0.0
    %1490 = vmatpush1.msra.mxu0 0.0
    %1491 = vmatprep.subr.mxu0 0.0
    %1492 = vmatpush1.msra.mxu0 0.0
    %1493 = vmatprep.subr.mxu0 0.0
    %1494 = vmatpush1.msra.mxu0 0.0
    %1495 = vmatprep.subr.mxu0 0.0
    %1496 = vmatpush1.msra.mxu0 0.0
    %1497 = vmatprep.subr.mxu0 0.0
    %1498 = vmatpush1.msra.mxu0 0.0
    %1499 = vmatprep.subr.mxu0 0.0
    %1500 = vmatpush1.msra.mxu0 0.0
    %1501 = vmatprep.subr.mxu0 0.0
    %1502 = vmatpush1.msra.mxu0 0.0
    %1503 = vmatprep.subr.mxu0 0.0
    %1504 = vmatpush1.msra.mxu0 0.0
    %1505 = vmatprep.subr.mxu0 0.0
    %1506 = vmatpush1.msra.mxu0 0.0
    %1507 = vmatprep.subr.mxu0 0.0
    %1508 = vmatpush1.msra.mxu0 0.0
    %1509 = vmatprep.subr.mxu0 0.0
    %1510 = vmatpush1.msra.mxu0 0.0
    %1511 = vmatprep.subr.mxu0 0.0
    %1512 = vmatpush1.msra.mxu0 0.0
    %1513 = vmatprep.subr.mxu0 0.0
    %1514 = vmatpush1.msra.mxu0 0.0
    %1515 = vmatprep.subr.mxu0 0.0
    %1516 = vmatpush1.msra.mxu0 0.0
    %1517 = vmatprep.subr.mxu0 0.0
    %1518 = vmatpush1.msra.mxu0 0.0
    %1519 = vmatprep.subr.mxu0 0.0
    %1520 = vmatpush1.msra.mxu0 0.0
    %1521 = vmatprep.subr.mxu0 0.0
    %1522 = vmatpush1.msra.mxu0 0.0
    %1523 = vmatprep.subr.mxu0 0.0
    %1524 = vmatpush1.msra.mxu0 0.0
    %1525 = vmatprep.subr.mxu0 0.0
    %1526 = vmatpush1.msra.mxu0 0.0
    %1527 = vmatprep.subr.mxu0 0.0
    %1528 = vmatpush1.msra.mxu0 0.0
    %1529 = vmatprep.subr.mxu0 0.0
    %1530 = vmatpush1.msra.mxu0 0.0
    %1531 = vmatprep.subr.mxu0 0.0
    %1532 = vmatpush1.msra.mxu0 0.0
    %1533 = vmatprep.subr.mxu0 0.0
    %1534 = vmatpush1.msra.mxu0 0.0
    %1535 = vmatprep.subr.mxu0 0.0
    %1536 = vmatpush1.msra.mxu0 0.0
    %1537 = vmatprep.subr.mxu0 0.0
    %1538 = vmatpush1.msra.mxu0 0.0
    %1539 = vmatprep.subr.mxu0 0.0
    %1540 = vmatpush1.msra.mxu0 0.0
    %1541 = vmatprep.subr.mxu0 0.0
    %1542 = vmatpush1.msra.mxu0 0.0
    %1543 = vmatprep.subr.mxu0 0.0
    %1544 = vmatpush1.msra.mxu0 0.0
    %1545 = vmatprep.mubr.f32.mxu0 0.0
    %1546 = vmatmul.mubr.f32.gmra.mrb[0].mxu0 %v1479
    %v1547 = vpop.f32.mrb[0].mxu0
    %v1548 = vadd.f32 0.0, %v1547
    %v1549 = vpop.f32.mrb[0].mxu0
    %1550 = vdwg.mxu0
    %v1551 = vadd.f32 %v1477, %v1548
    %v1552 = vtanh.pop %v1551
    %v1553 = vmul.f32 %v1552, %v18
    %v1554 = vadd.f32 %v1553, %v19
    %1555 = vrot.lane.b32.xlu0 %v1554, 64
    %v1556 = vpop.permute.xlu0 %1555
    %v1557 = vmul.f32 %v1554, %v1476
    %v1558 = vmul.f32 %v1554, %v1556
    %1560 = vrot.lane.b32.xlu0 %v1558, 96
    %v1561 = vpop.permute.xlu0 %1560
    %v1563 = vadd.f32 %v1557, %v1561
    %v1564 = vtanh.pop %v1563
    %v1565 = vmul.f32 %v1556, %v1564
    %vm1566 = vcmp.gt.s32.totalorder %v23, 5
    %v1567 = vsel %vm1566, %v1565, %v1475
    %v1568 = vsel %vm1566, %v1563, %v1476
    %v1569 = vld [vmem:[#allocation2 + $0x30] sm:$0xff]
    %v1571 = vsel %vm1017, %v1567, 0
    %1573 = vmatprep.subr.mxu0 0.0
    %1574 = vmatpush1.msra.mxu0 %v28
    %1575 = vmatprep.subr.mxu0 0.0
    %1576 = vmatpush1.msra.mxu0 %v29
    %1577 = vmatprep.subr.mxu0 0.0
    %1578 = vmatpush1.msra.mxu0 %v30
    %1579 = vmatprep.subr.mxu0 0.0
    %1580 = vmatpush1.msra.mxu0 %v31
    %1581 = vmatprep.subr.mxu0 0.0
    %1582 = vmatpush1.msra.mxu0 0.0
    %1583 = vmatprep.subr.mxu0 0.0
    %1584 = vmatpush1.msra.mxu0 0.0
    %1585 = vmatprep.subr.mxu0 0.0
    %1586 = vmatpush1.msra.mxu0 0.0
    %1587 = vmatprep.subr.mxu0 0.0
    %1588 = vmatpush1.msra.mxu0 0.0
    %1589 = vmatprep.subr.mxu0 0.0
    %1590 = vmatpush1.msra.mxu0 0.0
    %1591 = vmatprep.subr.mxu0 0.0
    %1592 = vmatpush1.msra.mxu0 0.0
    %1593 = vmatprep.subr.mxu0 0.0
    %1594 = vmatpush1.msra.mxu0 0.0
    %1595 = vmatprep.subr.mxu0 0.0
    %1596 = vmatpush1.msra.mxu0 0.0
    %1597 = vmatprep.subr.mxu0 0.0
    %1598 = vmatpush1.msra.mxu0 0.0
    %1599 = vmatprep.subr.mxu0 0.0
    %1600 = vmatpush1.msra.mxu0 0.0
    %1601 = vmatprep.subr.mxu0 0.0
    %1602 = vmatpush1.msra.mxu0 0.0
    %1603 = vmatprep.subr.mxu0 0.0
    %1604 = vmatpush1.msra.mxu0 0.0
    %1605 = vmatprep.subr.mxu0 0.0
    %1606 = vmatpush1.msra.mxu0 0.0
    %1607 = vmatprep.subr.mxu0 0.0
    %1608 = vmatpush1.msra.mxu0 0.0
    %1609 = vmatprep.subr.mxu0 0.0
    %1610 = vmatpush1.msra.mxu0 0.0
    %1611 = vmatprep.subr.mxu0 0.0
    %1612 = vmatpush1.msra.mxu0 0.0
    %1613 = vmatprep.subr.mxu0 0.0
    %1614 = vmatpush1.msra.mxu0 0.0
    %1615 = vmatprep.subr.mxu0 0.0
    %1616 = vmatpush1.msra.mxu0 0.0
    %1617 = vmatprep.subr.mxu0 0.0
    %1618 = vmatpush1.msra.mxu0 0.0
    %1619 = vmatprep.subr.mxu0 0.0
    %1620 = vmatpush1.msra.mxu0 0.0
    %1621 = vmatprep.subr.mxu0 0.0
    %1622 = vmatpush1.msra.mxu0 0.0
    %1623 = vmatprep.subr.mxu0 0.0
    %1624 = vmatpush1.msra.mxu0 0.0
    %1625 = vmatprep.subr.mxu0 0.0
    %1626 = vmatpush1.msra.mxu0 0.0
    %1627 = vmatprep.subr.mxu0 0.0
    %1628 = vmatpush1.msra.mxu0 0.0
    %1629 = vmatprep.subr.mxu0 0.0
    %1630 = vmatpush1.msra.mxu0 0.0
    %1631 = vmatprep.subr.mxu0 0.0
    %1632 = vmatpush1.msra.mxu0 0.0
    %1633 = vmatprep.subr.mxu0 0.0
    %1634 = vmatpush1.msra.mxu0 0.0
    %1635 = vmatprep.subr.mxu0 0.0
    %1636 = vmatpush1.msra.mxu0 0.0
    %1637 = vmatprep.mubr.f32.mxu0 0.0
    %1638 = vmatmul.mubr.f32.gmra.mrb[0].mxu0 %v1571
    %v1639 = vpop.f32.mrb[0].mxu0
    %v1640 = vadd.f32 0.0, %v1639
    %v1641 = vpop.f32.mrb[0].mxu0
    %1642 = vdwg.mxu0
    %v1643 = vadd.f32 %v1569, %v1640
    %v1644 = vtanh.pop %v1643
    %v1645 = vmul.f32 %v1644, %v18
    %v1646 = vadd.f32 %v1645, %v19
    %1647 = vrot.lane.b32.xlu0 %v1646, 64
    %v1648 = vpop.permute.xlu0 %1647
    %v1649 = vmul.f32 %v1646, %v1568
    %v1650 = vmul.f32 %v1646, %v1648
    %1652 = vrot.lane.b32.xlu0 %v1650, 96
    %v1653 = vpop.permute.xlu0 %1652
    %v1655 = vadd.f32 %v1649, %v1653
    %v1656 = vtanh.pop %v1655
    %v1657 = vmul.f32 %v1648, %v1656
    %vm1658 = vcmp.gt.s32.totalorder %v23, 6
    %v1659 = vsel %vm1658, %v1657, %v1567
    %v1660 = vsel %vm1658, %v1655, %v1568
    %v1661 = vld [vmem:[#allocation2 + $0x38] sm:$0xff]
    %v1663 = vsel %vm1017, %v1659, 0
    %1665 = vmatprep.subr.mxu0 0.0
    %1666 = vmatpush1.msra.mxu0 %v28
    %1667 = vmatprep.subr.mxu0 0.0
    %1668 = vmatpush1.msra.mxu0 %v29
    %1669 = vmatprep.subr.mxu0 0.0
    %1670 = vmatpush1.msra.mxu0 %v30
    %1671 = vmatprep.subr.mxu0 0.0
    %1672 = vmatpush1.msra.mxu0 %v31
    %1673 = vmatprep.subr.mxu0 0.0
    %1674 = vmatpush1.msra.mxu0 0.0
    %1675 = vmatprep.subr.mxu0 0.0
    %1676 = vmatpush1.msra.mxu0 0.0
    %1677 = vmatprep.subr.mxu0 0.0
    %1678 = vmatpush1.msra.mxu0 0.0
    %1679 = vmatprep.subr.mxu0 0.0
    %1680 = vmatpush1.msra.mxu0 0.0
    %1681 = vmatprep.subr.mxu0 0.0
    %1682 = vmatpush1.msra.mxu0 0.0
    %1683 = vmatprep.subr.mxu0 0.0
    %1684 = vmatpush1.msra.mxu0 0.0
    %1685 = vmatprep.subr.mxu0 0.0
    %1686 = vmatpush1.msra.mxu0 0.0
    %1687 = vmatprep.subr.mxu0 0.0
    %1688 = vmatpush1.msra.mxu0 0.0
    %1689 = vmatprep.subr.mxu0 0.0
    %1690 = vmatpush1.msra.mxu0 0.0
    %1691 = vmatprep.subr.mxu0 0.0
    %1692 = vmatpush1.msra.mxu0 0.0
    %1693 = vmatprep.subr.mxu0 0.0
    %1694 = vmatpush1.msra.mxu0 0.0
    %1695 = vmatprep.subr.mxu0 0.0
    %1696 = vmatpush1.msra.mxu0 0.0
    %1697 = vmatprep.subr.mxu0 0.0
    %1698 = vmatpush1.msra.mxu0 0.0
    %1699 = vmatprep.subr.mxu0 0.0
    %1700 = vmatpush1.msra.mxu0 0.0
    %1701 = vmatprep.subr.mxu0 0.0
    %1702 = vmatpush1.msra.mxu0 0.0
    %1703 = vmatprep.subr.mxu0 0.0
    %1704 = vmatpush1.msra.mxu0 0.0
    %1705 = vmatprep.subr.mxu0 0.0
    %1706 = vmatpush1.msra.mxu0 0.0
    %1707 = vmatprep.subr.mxu0 0.0
    %1708 = vmatpush1.msra.mxu0 0.0
    %1709 = vmatprep.subr.mxu0 0.0
    %1710 = vmatpush1.msra.mxu0 0.0
    %1711 = vmatprep.subr.mxu0 0.0
    %1712 = vmatpush1.msra.mxu0 0.0
    %1713 = vmatprep.subr.mxu0 0.0
    %1714 = vmatpush1.msra.mxu0 0.0
    %1715 = vmatprep.subr.mxu0 0.0
    %1716 = vmatpush1.msra.mxu0 0.0
    %1717 = vmatprep.subr.mxu0 0.0
    %1718 = vmatpush1.msra.mxu0 0.0
    %1719 = vmatprep.subr.mxu0 0.0
    %1720 = vmatpush1.msra.mxu0 0.0
    %1721 = vmatprep.subr.mxu0 0.0
    %1722 = vmatpush1.msra.mxu0 0.0
    %1723 = vmatprep.subr.mxu0 0.0
    %1724 = vmatpush1.msra.mxu0 0.0
    %1725 = vmatprep.subr.mxu0 0.0
    %1726 = vmatpush1.msra.mxu0 0.0
    %1727 = vmatprep.subr.mxu0 0.0
    %1728 = vmatpush1.msra.mxu0 0.0
    %1729 = vmatprep.mubr.f32.mxu0 0.0
    %1730 = vmatmul.mubr.f32.gmra.mrb[0].mxu0 %v1663
    %v1731 = vpop.f32.mrb[0].mxu0
    %v1732 = vadd.f32 0.0, %v1731
    %v1733 = vpop.f32.mrb[0].mxu0
    %1734 = vdwg.mxu0
    %v1735 = vadd.f32 %v1661, %v1732
    %v1736 = vtanh.pop %v1735
    %v1737 = vmul.f32 %v1736, %v18
    %v1738 = vadd.f32 %v1737, %v19
    %1739 = vrot.lane.b32.xlu0 %v1738, 64
    %v1740 = vpop.permute.xlu0 %1739
    %v1741 = vmul.f32 %v1738, %v1660
    %v1742 = vmul.f32 %v1738, %v1740
    %1744 = vrot.lane.b32.xlu0 %v1742, 96
    %v1745 = vpop.permute.xlu0 %1744
    %v1747 = vadd.f32 %v1741, %v1745
    %v1748 = vtanh.pop %v1747
    %v1749 = vmul.f32 %v1740, %v1748
    %vm1750 = vcmp.gt.s32.totalorder %v23, 7
    %v1751 = vsel %vm1750, %v1749, %v1659
    %v1752 = vsel %vm1750, %v1747, %v1660
    %v1753 = vld [vmem:[#allocation2 + $0x40] sm:$0xff]
    %v1755 = vsel %vm1017, %v1751, 0
    %1757 = vmatprep.subr.mxu0 0.0
    %1758 = vmatpush1.msra.mxu0 %v28
    %1759 = vmatprep.subr.mxu0 0.0
    %1760 = vmatpush1.msra.mxu0 %v29
    %1761 = vmatprep.subr.mxu0 0.0
    %1762 = vmatpush1.msra.mxu0 %v30
    %1763 = vmatprep.subr.mxu0 0.0
    %1764 = vmatpush1.msra.mxu0 %v31
    %1765 = vmatprep.subr.mxu0 0.0
    %1766 = vmatpush1.msra.mxu0 0.0
    %1767 = vmatprep.subr.mxu0 0.0
    %1768 = vmatpush1.msra.mxu0 0.0
    %1769 = vmatprep.subr.mxu0 0.0
    %1770 = vmatpush1.msra.mxu0 0.0
    %1771 = vmatprep.subr.mxu0 0.0
    %1772 = vmatpush1.msra.mxu0 0.0
    %1773 = vmatprep.subr.mxu0 0.0
    %1774 = vmatpush1.msra.mxu0 0.0
    %1775 = vmatprep.subr.mxu0 0.0
    %1776 = vmatpush1.msra.mxu0 0.0
    %1777 = vmatprep.subr.mxu0 0.0
    %1778 = vmatpush1.msra.mxu0 0.0
    %1779 = vmatprep.subr.mxu0 0.0
    %1780 = vmatpush1.msra.mxu0 0.0
    %1781 = vmatprep.subr.mxu0 0.0
    %1782 = vmatpush1.msra.mxu0 0.0
    %1783 = vmatprep.subr.mxu0 0.0
    %1784 = vmatpush1.msra.mxu0 0.0
    %1785 = vmatprep.subr.mxu0 0.0
    %1786 = vmatpush1.msra.mxu0 0.0
    %1787 = vmatprep.subr.mxu0 0.0
    %1788 = vmatpush1.msra.mxu0 0.0
    %1789 = vmatprep.subr.mxu0 0.0
    %1790 = vmatpush1.msra.mxu0 0.0
    %1791 = vmatprep.subr.mxu0 0.0
    %1792 = vmatpush1.msra.mxu0 0.0
    %1793 = vmatprep.subr.mxu0 0.0
    %1794 = vmatpush1.msra.mxu0 0.0
    %1795 = vmatprep.subr.mxu0 0.0
    %1796 = vmatpush1.msra.mxu0 0.0
    %1797 = vmatprep.subr.mxu0 0.0
    %1798 = vmatpush1.msra.mxu0 0.0
    %1799 = vmatprep.subr.mxu0 0.0
    %1800 = vmatpush1.msra.mxu0 0.0
    %1801 = vmatprep.subr.mxu0 0.0
    %1802 = vmatpush1.msra.mxu0 0.0
    %1803 = vmatprep.subr.mxu0 0.0
    %1804 = vmatpush1.msra.mxu0 0.0
    %1805 = vmatprep.subr.mxu0 0.0
    %1806 = vmatpush1.msra.mxu0 0.0
    %1807 = vmatprep.subr.mxu0 0.0
    %1808 = vmatpush1.msra.mxu0 0.0
    %1809 = vmatprep.subr.mxu0 0.0
    %1810 = vmatpush1.msra.mxu0 0.0
    %1811 = vmatprep.subr.mxu0 0.0
    %1812 = vmatpush1.msra.mxu0 0.0
    %1813 = vmatprep.subr.mxu0 0.0
    %1814 = vmatpush1.msra.mxu0 0.0
    %1815 = vmatprep.subr.mxu0 0.0
    %1816 = vmatpush1.msra.mxu0 0.0
    %1817 = vmatprep.subr.mxu0 0.0
    %1818 = vmatpush1.msra.mxu0 0.0
    %1819 = vmatprep.subr.mxu0 0.0
    %1820 = vmatpush1.msra.mxu0 0.0
    %1821 = vmatprep.mubr.f32.mxu0 0.0
    %1822 = vmatmul.mubr.f32.gmra.mrb[0].mxu0 %v1755
    %v1823 = vpop.f32.mrb[0].mxu0
    %v1824 = vadd.f32 0.0, %v1823
    %v1825 = vpop.f32.mrb[0].mxu0
    %1826 = vdwg.mxu0
    %v1827 = vadd.f32 %v1753, %v1824
    %v1828 = vtanh.pop %v1827
    %v1829 = vmul.f32 %v1828, %v18
    %v1830 = vadd.f32 %v1829, %v19
    %1831 = vrot.lane.b32.xlu0 %v1830, 64
    %v1832 = vpop.permute.xlu0 %1831
    %v1833 = vmul.f32 %v1830, %v1752
    %v1834 = vmul.f32 %v1830, %v1832
    %1836 = vrot.lane.b32.xlu0 %v1834, 96
    %v1837 = vpop.permute.xlu0 %1836
    %v1839 = vadd.f32 %v1833, %v1837
    %v1840 = vtanh.pop %v1839
    %v1841 = vmul.f32 %v1832, %v1840
    %vm1842 = vcmp.gt.s32.totalorder %v23, 8
    %v1843 = vsel %vm1842, %v1841, %v1751
    %v1844 = vsel %vm1842, %v1839, %v1752
    %v1845 = vld [vmem:[#allocation2 + $0x48] sm:$0xff]
    %v1847 = vsel %vm1017, %v1843, 0
    %1849 = vmatprep.subr.mxu0 0.0
    %1850 = vmatpush1.msra.mxu0 %v28
    %1851 = vmatprep.subr.mxu0 0.0
    %1852 = vmatpush1.msra.mxu0 %v29
    %1853 = vmatprep.subr.mxu0 0.0
    %1854 = vmatpush1.msra.mxu0 %v30
    %1855 = vmatprep.subr.mxu0 0.0
    %1856 = vmatpush1.msra.mxu0 %v31
    %1857 = vmatprep.subr.mxu0 0.0
    %1858 = vmatpush1.msra.mxu0 0.0
    %1859 = vmatprep.subr.mxu0 0.0
    %1860 = vmatpush1.msra.mxu0 0.0
    %1861 = vmatprep.subr.mxu0 0.0
    %1862 = vmatpush1.msra.mxu0 0.0
    %1863 = vmatprep.subr.mxu0 0.0
    %1864 = vmatpush1.msra.mxu0 0.0
    %1865 = vmatprep.subr.mxu0 0.0
    %1866 = vmatpush1.msra.mxu0 0.0
    %1867 = vmatprep.subr.mxu0 0.0
    %1868 = vmatpush1.msra.mxu0 0.0
    %1869 = vmatprep.subr.mxu0 0.0
    %1870 = vmatpush1.msra.mxu0 0.0
    %1871 = vmatprep.subr.mxu0 0.0
    %1872 = vmatpush1.msra.mxu0 0.0
    %1873 = vmatprep.subr.mxu0 0.0
    %1874 = vmatpush1.msra.mxu0 0.0
    %1875 = vmatprep.subr.mxu0 0.0
    %1876 = vmatpush1.msra.mxu0 0.0
    %1877 = vmatprep.subr.mxu0 0.0
    %1878 = vmatpush1.msra.mxu0 0.0
    %1879 = vmatprep.subr.mxu0 0.0
    %1880 = vmatpush1.msra.mxu0 0.0
    %1881 = vmatprep.subr.mxu0 0.0
    %1882 = vmatpush1.msra.mxu0 0.0
    %1883 = vmatprep.subr.mxu0 0.0
    %1884 = vmatpush1.msra.mxu0 0.0
    %1885 = vmatprep.subr.mxu0 0.0
    %1886 = vmatpush1.msra.mxu0 0.0
    %1887 = vmatprep.subr.mxu0 0.0
    %1888 = vmatpush1.msra.mxu0 0.0
    %1889 = vmatprep.subr.mxu0 0.0
    %1890 = vmatpush1.msra.mxu0 0.0
    %1891 = vmatprep.subr.mxu0 0.0
    %1892 = vmatpush1.msra.mxu0 0.0
    %1893 = vmatprep.subr.mxu0 0.0
    %1894 = vmatpush1.msra.mxu0 0.0
    %1895 = vmatprep.subr.mxu0 0.0
    %1896 = vmatpush1.msra.mxu0 0.0
    %1897 = vmatprep.subr.mxu0 0.0
    %1898 = vmatpush1.msra.mxu0 0.0
    %1899 = vmatprep.subr.mxu0 0.0
    %1900 = vmatpush1.msra.mxu0 0.0
    %1901 = vmatprep.subr.mxu0 0.0
    %1902 = vmatpush1.msra.mxu0 0.0
    %1903 = vmatprep.subr.mxu0 0.0
    %1904 = vmatpush1.msra.mxu0 0.0
    %1905 = vmatprep.subr.mxu0 0.0
    %1906 = vmatpush1.msra.mxu0 0.0
    %1907 = vmatprep.subr.mxu0 0.0
    %1908 = vmatpush1.msra.mxu0 0.0
    %1909 = vmatprep.subr.mxu0 0.0
    %1910 = vmatpush1.msra.mxu0 0.0
    %1911 = vmatprep.subr.mxu0 0.0
    %1912 = vmatpush1.msra.mxu0 0.0
    %1913 = vmatprep.mubr.f32.mxu0 0.0
    %1914 = vmatmul.mubr.f32.gmra.mrb[0].mxu0 %v1847
    %v1915 = vpop.f32.mrb[0].mxu0
    %v1916 = vadd.f32 0.0, %v1915
    %v1917 = vpop.f32.mrb[0].mxu0
    %1918 = vdwg.mxu0
    %v1919 = vadd.f32 %v1845, %v1916
    %v1920 = vtanh.pop %v1919
    %v1921 = vmul.f32 %v1920, %v18
    %v1922 = vadd.f32 %v1921, %v19
    %1923 = vrot.lane.b32.xlu0 %v1922, 64
    %v1924 = vpop.permute.xlu0 %1923
    %v1925 = vmul.f32 %v1922, %v1844
    %v1926 = vmul.f32 %v1922, %v1924
    %1928 = vrot.lane.b32.xlu0 %v1926, 96
    %v1929 = vpop.permute.xlu0 %1928
    %v1931 = vadd.f32 %v1925, %v1929
    %v1932 = vtanh.pop %v1931
    %v1933 = vmul.f32 %v1924, %v1932
    %vm1934 = vcmp.gt.s32.totalorder %v23, 9
    %v1935 = vsel %vm1934, %v1933, %v1843
    %v1936 = vsel %vm1934, %v1931, %v1844
    %v1937 = vld [vmem:[#allocation2 + $0x50] sm:$0xff]
    %v1939 = vsel %vm1017, %v1935, 0
    %1941 = vmatprep.subr.mxu0 0.0
    %1942 = vmatpush1.msra.mxu0 %v28
    %1943 = vmatprep.subr.mxu0 0.0
    %1944 = vmatpush1.msra.mxu0 %v29
    %1945 = vmatprep.subr.mxu0 0.0
    %1946 = vmatpush1.msra.mxu0 %v30
    %1947 = vmatprep.subr.mxu0 0.0
    %1948 = vmatpush1.msra.mxu0 %v31
    %1949 = vmatprep.subr.mxu0 0.0
    %1950 = vmatpush1.msra.mxu0 0.0
    %1951 = vmatprep.subr.mxu0 0.0
    %1952 = vmatpush1.msra.mxu0 0.0
    %1953 = vmatprep.subr.mxu0 0.0
    %1954 = vmatpush1.msra.mxu0 0.0
    %1955 = vmatprep.subr.mxu0 0.0
    %1956 = vmatpush1.msra.mxu0 0.0
    %1957 = vmatprep.subr.mxu0 0.0
    %1958 = vmatpush1.msra.mxu0 0.0
    %1959 = vmatprep.subr.mxu0 0.0
    %1960 = vmatpush1.msra.mxu0 0.0
    %1961 = vmatprep.subr.mxu0 0.0
    %1962 = vmatpush1.msra.mxu0 0.0
    %1963 = vmatprep.subr.mxu0 0.0
    %1964 = vmatpush1.msra.mxu0 0.0
    %1965 = vmatprep.subr.mxu0 0.0
    %1966 = vmatpush1.msra.mxu0 0.0
    %1967 = vmatprep.subr.mxu0 0.0
    %1968 = vmatpush1.msra.mxu0 0.0
    %1969 = vmatprep.subr.mxu0 0.0
    %1970 = vmatpush1.msra.mxu0 0.0
    %1971 = vmatprep.subr.mxu0 0.0
    %1972 = vmatpush1.msra.mxu0 0.0
    %1973 = vmatprep.subr.mxu0 0.0
    %1974 = vmatpush1.msra.mxu0 0.0
    %1975 = vmatprep.subr.mxu0 0.0
    %1976 = vmatpush1.msra.mxu0 0.0
    %1977 = vmatprep.subr.mxu0 0.0
    %1978 = vmatpush1.msra.mxu0 0.0
    %1979 = vmatprep.subr.mxu0 0.0
    %1980 = vmatpush1.msra.mxu0 0.0
    %1981 = vmatprep.subr.mxu0 0.0
    %1982 = vmatpush1.msra.mxu0 0.0
    %1983 = vmatprep.subr.mxu0 0.0
    %1984 = vmatpush1.msra.mxu0 0.0
    %1985 = vmatprep.subr.mxu0 0.0
    %1986 = vmatpush1.msra.mxu0 0.0
    %1987 = vmatprep.subr.mxu0 0.0
    %1988 = vmatpush1.msra.mxu0 0.0
    %1989 = vmatprep.subr.mxu0 0.0
    %1990 = vmatpush1.msra.mxu0 0.0
    %1991 = vmatprep.subr.mxu0 0.0
    %1992 = vmatpush1.msra.mxu0 0.0
    %1993 = vmatprep.subr.mxu0 0.0
    %1994 = vmatpush1.msra.mxu0 0.0
    %1995 = vmatprep.subr.mxu0 0.0
    %1996 = vmatpush1.msra.mxu0 0.0
    %1997 = vmatprep.subr.mxu0 0.0
    %1998 = vmatpush1.msra.mxu0 0.0
    %1999 = vmatprep.subr.mxu0 0.0
    %2000 = vmatpush1.msra.mxu0 0.0
    %2001 = vmatprep.subr.mxu0 0.0
    %2002 = vmatpush1.msra.mxu0 0.0
    %2003 = vmatprep.subr.mxu0 0.0
    %2004 = vmatpush1.msra.mxu0 0.0
    %2005 = vmatprep.mubr.f32.mxu0 0.0
    %2006 = vmatmul.mubr.f32.gmra.mrb[0].mxu0 %v1939
    %v2007 = vpop.f32.mrb[0].mxu0
    %v2008 = vadd.f32 0.0, %v2007
    %v2009 = vpop.f32.mrb[0].mxu0
    %2010 = vdwg.mxu0
    %v2011 = vadd.f32 %v1937, %v2008
    %v2012 = vtanh.pop %v2011
    %v2013 = vmul.f32 %v2012, %v18
    %v2014 = vadd.f32 %v2013, %v19
    %2015 = vrot.lane.b32.xlu0 %v2014, 64
    %v2016 = vpop.permute.xlu0 %2015
    %v2017 = vmul.f32 %v2014, %v1936
    %v2018 = vmul.f32 %v2014, %v2016
    %2020 = vrot.lane.b32.xlu0 %v2018, 96
    %v2021 = vpop.permute.xlu0 %2020
    %v2023 = vadd.f32 %v2017, %v2021
    %v2024 = vtanh.pop %v2023
    %v2025 = vmul.f32 %v2016, %v2024
    %vm2026 = vcmp.gt.s32.totalorder %v23, 10
    %v2027 = vsel %vm2026, %v2025, %v1935
    %v2028 = vsel %vm2026, %v2023, %v1936
    %v2029 = vld [vmem:[#allocation2 + $0x58] sm:$0xff]
    %v2031 = vsel %vm1017, %v2027, 0
    %2033 = vmatprep.subr.mxu0 0.0
    %2034 = vmatpush1.msra.mxu0 %v28
    %2035 = vmatprep.subr.mxu0 0.0
    %2036 = vmatpush1.msra.mxu0 %v29
    %2037 = vmatprep.subr.mxu0 0.0
    %2038 = vmatpush1.msra.mxu0 %v30
    %2039 = vmatprep.subr.mxu0 0.0
    %2040 = vmatpush1.msra.mxu0 %v31
    %2041 = vmatprep.subr.mxu0 0.0
    %2042 = vmatpush1.msra.mxu0 0.0
    %2043 = vmatprep.subr.mxu0 0.0
    %2044 = vmatpush1.msra.mxu0 0.0
    %2045 = vmatprep.subr.mxu0 0.0
    %2046 = vmatpush1.msra.mxu0 0.0
    %2047 = vmatprep.subr.mxu0 0.0
    %2048 = vmatpush1.msra.mxu0 0.0
    %2049 = vmatprep.subr.mxu0 0.0
    %2050 = vmatpush1.msra.mxu0 0.0
    %2051 = vmatprep.subr.mxu0 0.0
    %2052 = vmatpush1.msra.mxu0 0.0
    %2053 = vmatprep.subr.mxu0 0.0
    %2054 = vmatpush1.msra.mxu0 0.0
    %2055 = vmatprep.subr.mxu0 0.0
    %2056 = vmatpush1.msra.mxu0 0.0
    %2057 = vmatprep.subr.mxu0 0.0
    %2058 = vmatpush1.msra.mxu0 0.0
    %2059 = vmatprep.subr.mxu0 0.0
    %2060 = vmatpush1.msra.mxu0 0.0
    %2061 = vmatprep.subr.mxu0 0.0
    %2062 = vmatpush1.msra.mxu0 0.0
    %2063 = vmatprep.subr.mxu0 0.0
    %2064 = vmatpush1.msra.mxu0 0.0
    %2065 = vmatprep.subr.mxu0 0.0
    %2066 = vmatpush1.msra.mxu0 0.0
    %2067 = vmatprep.subr.mxu0 0.0
    %2068 = vmatpush1.msra.mxu0 0.0
    %2069 = vmatprep.subr.mxu0 0.0
    %2070 = vmatpush1.msra.mxu0 0.0
    %2071 = vmatprep.subr.mxu0 0.0
    %2072 = vmatpush1.msra.mxu0 0.0
    %2073 = vmatprep.subr.mxu0 0.0
    %2074 = vmatpush1.msra.mxu0 0.0
    %2075 = vmatprep.subr.mxu0 0.0
    %2076 = vmatpush1.msra.mxu0 0.0
    %2077 = vmatprep.subr.mxu0 0.0
    %2078 = vmatpush1.msra.mxu0 0.0
    %2079 = vmatprep.subr.mxu0 0.0
    %2080 = vmatpush1.msra.mxu0 0.0
    %2081 = vmatprep.subr.mxu0 0.0
    %2082 = vmatpush1.msra.mxu0 0.0
    %2083 = vmatprep.subr.mxu0 0.0
    %2084 = vmatpush1.msra.mxu0 0.0
    %2085 = vmatprep.subr.mxu0 0.0
    %2086 = vmatpush1.msra.mxu0 0.0
    %2087 = vmatprep.subr.mxu0 0.0
    %2088 = vmatpush1.msra.mxu0 0.0
    %2089 = vmatprep.subr.mxu0 0.0
    %2090 = vmatpush1.msra.mxu0 0.0
    %2091 = vmatprep.subr.mxu0 0.0
    %2092 = vmatpush1.msra.mxu0 0.0
    %2093 = vmatprep.subr.mxu0 0.0
    %2094 = vmatpush1.msra.mxu0 0.0
    %2095 = vmatprep.subr.mxu0 0.0
    %2096 = vmatpush1.msra.mxu0 0.0
    %2097 = vmatprep.mubr.f32.mxu0 0.0
    %2098 = vmatmul.mubr.f32.gmra.mrb[0].mxu0 %v2031
    %v2099 = vpop.f32.mrb[0].mxu0
    %v2100 = vadd.f32 0.0, %v2099
    %v2101 = vpop.f32.mrb[0].mxu0
    %2102 = vdwg.mxu0
    %v2103 = vadd.f32 %v2029, %v2100
    %v2104 = vtanh.pop %v2103
    %v2105 = vmul.f32 %v2104, %v18
    %v2106 = vadd.f32 %v2105, %v19
    %2107 = vrot.lane.b32.xlu0 %v2106, 64
    %v2108 = vpop.permute.xlu0 %2107
    %v2109 = vmul.f32 %v2106, %v2028
    %v2110 = vmul.f32 %v2106, %v2108
    %2112 = vrot.lane.b32.xlu0 %v2110, 96
    %v2113 = vpop.permute.xlu0 %2112
    %v2115 = vadd.f32 %v2109, %v2113
    %v2116 = vtanh.pop %v2115
    %v2117 = vmul.f32 %v2108, %v2116
    %vm2118 = vcmp.gt.s32.totalorder %v23, 11
    %v2119 = vsel %vm2118, %v2117, %v2027
    %2121 = vrot.lane.b32.xlu0 %v1015, 96
    %v2122 = vpop.permute.xlu0 %2121
    %v2124 = vsel %vm1017, %v2119, %v2122
    %v2125 = vld [vmem:[%s2 + $0x60] sm:$0xff]
    %v2126 = vld [vmem:[%s2 + $0x70] sm:$0xff]
    %v2127 = vld [vmem:[%s2 + $0x80] sm:$0xff]
    %v2128 = vld [vmem:[%s2 + $0x90] sm:$0xff]
    %v2129 = vld [vmem:[%s2 + $0xa0] sm:$0xff]
    %v2130 = vld [vmem:[%s2 + $0xb0] sm:$0xff]
    %v2131 = vld [vmem:[%s2 + $0xc0] sm:$0xff]
    %v2132 = vld [vmem:[%s2 + $0xd0] sm:$0xff]
    %v2133 = vld [vmem:[%s2 + $0x130] ss:$0 sm:$0xff]
    %v2134 = vld [vmem:[%s2 + $0xe0] sm:$0xff]
    %v2135 = vld [vmem:[%s2 + $0xf0] sm:$0xff]
    %v2136 = vld [vmem:[%s2 + $0x100] sm:$0xff]
    %v2137 = vld [vmem:[%s2 + $0x110] sm:$0xff]
    %v2138 = vld [vmem:[%s2 + $0x140] ss:$0 sm:$0xff]
    %vm2139 = vcmask 523264
    %v2141 = vsel %vm2139, %v2124, 0
    %2143 = vmatprep.subr.mxu0 0.0
    %2144 = vmatpush1.msra.mxu0 %v2125
    %2145 = vmatprep.subr.mxu0 0.0
    %2146 = vmatpush1.msra.mxu0 %v2126
    %2147 = vmatprep.subr.mxu0 0.0
    %2148 = vmatpush1.msra.mxu0 %v2127
    %2149 = vmatprep.subr.mxu0 0.0
    %2150 = vmatpush1.msra.mxu0 %v2128
    %2151 = vmatprep.subr.mxu0 0.0
    %2152 = vmatpush1.msra.mxu0 %v2129
    %2153 = vmatprep.subr.mxu0 0.0
    %2154 = vmatpush1.msra.mxu0 %v2130
    %2155 = vmatprep.subr.mxu0 0.0
    %2156 = vmatpush1.msra.mxu0 %v2131
    %2157 = vmatprep.subr.mxu0 0.0
    %2158 = vmatpush1.msra.mxu0 %v2132
    %2159 = vmatprep.subr.mxu0 0.0
    %2160 = vmatpush1.msra.mxu0 0.0
    %2161 = vmatprep.subr.mxu0 0.0
    %2162 = vmatpush1.msra.mxu0 0.0
    %2163 = vmatprep.subr.mxu0 0.0
    %2164 = vmatpush1.msra.mxu0 0.0
    %2165 = vmatprep.subr.mxu0 0.0
    %2166 = vmatpush1.msra.mxu0 0.0
    %2167 = vmatprep.subr.mxu0 0.0
    %2168 = vmatpush1.msra.mxu0 0.0
    %2169 = vmatprep.subr.mxu0 0.0
    %2170 = vmatpush1.msra.mxu0 0.0
    %2171 = vmatprep.subr.mxu0 0.0
    %2172 = vmatpush1.msra.mxu0 0.0
    %2173 = vmatprep.subr.mxu0 0.0
    %2174 = vmatpush1.msra.mxu0 0.0
    %2175 = vmatprep.subr.mxu0 0.0
    %2176 = vmatpush1.msra.mxu0 0.0
    %2177 = vmatprep.subr.mxu0 0.0
    %2178 = vmatpush1.msra.mxu0 0.0
    %2179 = vmatprep.subr.mxu0 0.0
    %2180 = vmatpush1.msra.mxu0 0.0
    %2181 = vmatprep.subr.mxu0 0.0
    %2182 = vmatpush1.msra.mxu0 0.0
    %2183 = vmatprep.subr.mxu0 0.0
    %2184 = vmatpush1.msra.mxu0 0.0
    %2185 = vmatprep.subr.mxu0 0.0
    %2186 = vmatpush1.msra.mxu0 0.0
    %2187 = vmatprep.subr.mxu0 0.0
    %2188 = vmatpush1.msra.mxu0 0.0
    %2189 = vmatprep.subr.mxu0 0.0
    %2190 = vmatpush1.msra.mxu0 0.0
    %2191 = vmatprep.subr.mxu0 0.0
    %2192 = vmatpush1.msra.mxu0 0.0
    %2193 = vmatprep.subr.mxu0 0.0
    %2194 = vmatpush1.msra.mxu0 0.0
    %2195 = vmatprep.subr.mxu0 0.0
    %2196 = vmatpush1.msra.mxu0 0.0
    %2197 = vmatprep.subr.mxu0 0.0
    %2198 = vmatpush1.msra.mxu0 0.0
    %2199 = vmatprep.subr.mxu0 0.0
    %2200 = vmatpush1.msra.mxu0 0.0
    %2201 = vmatprep.subr.mxu0 0.0
    %2202 = vmatpush1.msra.mxu0 0.0
    %2203 = vmatprep.subr.mxu0 0.0
    %2204 = vmatpush1.msra.mxu0 0.0
    %2205 = vmatprep.subr.mxu0 0.0
    %2206 = vmatpush1.msra.mxu0 0.0
    %2207 = vmatprep.mubr.f32.mxu0 0.0
    %2208 = vmatmul.mubr.f32.gmra.mrb[0].mxu0 %v2141
    %v2209 = vpop.f32.mrb[0].mxu0
    %v2210 = vadd.f32 %v2133, %v2209
    %v2211 = vpop.f32.mrb[0].mxu0
    %2212 = vdwg.mxu0
    %v2213 = vmax.f32 %v2210, 0.0
    %v2215 = vsel %vm1017, %v2213, 0
    %2217 = vmatprep.subr.mxu0 0.0
    %2218 = vmatpush1.msra.mxu0 %v2134
    %2219 = vmatprep.subr.mxu0 0.0
    %2220 = vmatpush1.msra.mxu0 %v2135
    %2221 = vmatprep.subr.mxu0 0.0
    %2222 = vmatpush1.msra.mxu0 %v2136
    %2223 = vmatprep.subr.mxu0 0.0
    %2224 = vmatpush1.msra.mxu0 %v2137
    %2225 = vmatprep.subr.mxu0 0.0
    %2226 = vmatpush1.msra.mxu0 0.0
    %2227 = vmatprep.subr.mxu0 0.0
    %2228 = vmatpush1.msra.mxu0 0.0
    %2229 = vmatprep.subr.mxu0 0.0
    %2230 = vmatpush1.msra.mxu0 0.0
    %2231 = vmatprep.subr.mxu0 0.0
    %2232 = vmatpush1.msra.mxu0 0.0
    %2233 = vmatprep.subr.mxu0 0.0
    %2234 = vmatpush1.msra.mxu0 0.0
    %2235 = vmatprep.subr.mxu0 0.0
    %2236 = vmatpush1.msra.mxu0 0.0
    %2237 = vmatprep.subr.mxu0 0.0
    %2238 = vmatpush1.msra.mxu0 0.0
    %2239 = vmatprep.subr.mxu0 0.0
    %2240 = vmatpush1.msra.mxu0 0.0
    %2241 = vmatprep.subr.mxu0 0.0
    %2242 = vmatpush1.msra.mxu0 0.0
    %2243 = vmatprep.subr.mxu0 0.0
    %2244 = vmatpush1.msra.mxu0 0.0
    %2245 = vmatprep.subr.mxu0 0.0
    %2246 = vmatpush1.msra.mxu0 0.0
    %2247 = vmatprep.subr.mxu0 0.0
    %2248 = vmatpush1.msra.mxu0 0.0
    %2249 = vmatprep.subr.mxu0 0.0
    %2250 = vmatpush1.msra.mxu0 0.0
    %2251 = vmatprep.subr.mxu0 0.0
    %2252 = vmatpush1.msra.mxu0 0.0
    %2253 = vmatprep.subr.mxu0 0.0
    %2254 = vmatpush1.msra.mxu0 0.0
    %2255 = vmatprep.subr.mxu0 0.0
    %2256 = vmatpush1.msra.mxu0 0.0
    %2257 = vmatprep.subr.mxu0 0.0
    %2258 = vmatpush1.msra.mxu0 0.0
    %2259 = vmatprep.subr.mxu0 0.0
    %2260 = vmatpush1.msra.mxu0 0.0
    %2261 = vmatprep.subr.mxu0 0.0
    %2262 = vmatpush1.msra.mxu0 0.0
    %2263 = vmatprep.subr.mxu0 0.0
    %2264 = vmatpush1.msra.mxu0 0.0
    %2265 = vmatprep.subr.mxu0 0.0
    %2266 = vmatpush1.msra.mxu0 0.0
    %2267 = vmatprep.subr.mxu0 0.0
    %2268 = vmatpush1.msra.mxu0 0.0
    %2269 = vmatprep.subr.mxu0 0.0
    %2270 = vmatpush1.msra.mxu0 0.0
    %2271 = vmatprep.subr.mxu0 0.0
    %2272 = vmatpush1.msra.mxu0 0.0
    %2273 = vmatprep.subr.mxu0 0.0
    %2274 = vmatpush1.msra.mxu0 0.0
    %2275 = vmatprep.subr.mxu0 0.0
    %2276 = vmatpush1.msra.mxu0 0.0
    %2277 = vmatprep.subr.mxu0 0.0
    %2278 = vmatpush1.msra.mxu0 0.0
    %2279 = vmatprep.subr.mxu0 0.0
    %2280 = vmatpush1.msra.mxu0 0.0
    %2281 = vmatprep.mubr.f32.mxu0 0.0
    %2282 = vmatmul.mubr.f32.gmra.mrb[0].mxu0 %v2215
    %v2283 = vpop.f32.mrb[0].mxu0
    %v2284 = vadd.f32 %v2138, %v2283
    %v2285 = vpop.f32.mrb[0].mxu0
    %2286 = vdwg.mxu0
    %vm2287 = vcmask 64512
    %2288 = vst.msk [vmem:[#allocation3] sm:$0xff] %vm2287, %v2284
    // Predicated region
    $region14: #{seq2one_lstm_forward.1} parent=1 // pred_check
      _
    $region15: #{seq2one_lstm_forward.1} parent=1 // pred_check_branch
      %2290 = sbr.rel (0) target = $region17
    $region16: #{seq2one_lstm_forward.1} parent=1 // pred_region
      %s2292 = ssub.s32 128, 128
      %2293 = vsyncadd [#allocation4], %s2292
      %s2295 = sshll.u32 [#allocation3], 4
      %s2296 = int_to_ptr.vmem [resolvable:$true] %s2295
      %2298 = dma.vmem_to_hbm [thread:$0]  %s2296, 128, %s3, [#allocation4]
    $region17: #{seq2one_lstm_forward.1} parent=1 // pred_fallthru
      _
    // Predicated region
    $region18: #{seq2one_lstm_forward.1} parent=1 // pred_check
      _
    $region19: #{seq2one_lstm_forward.1} parent=1 // pred_check_branch
      %2300 = sbr.rel (0) target = $region21
    $region20: #{seq2one_lstm_forward.1} parent=1 // pred_region
      %2301 = dma.done [#allocation4], 128
    $region21: #{seq2one_lstm_forward.1} parent=1 // pred_fallthru
      _
    %2302 = vsyncpa [#allocation4], 1

</llo_original>
